<compile_context>
chip_gen: v6e
topology: v6e:2x2x1
jax: 0.10.0
libtpu: 0.0.40
codegen_flags: <defaults>
</compile_context>

<pallas_src>
import functools

import jax
import jax.numpy as jnp
import numpy as np
from jax.experimental import pallas as pl
from jax.experimental.pallas import tpu as pltpu  # noqa: F401  (TPU backend import)

# ---- model config (small, consistent with the module's __init__) ----
NUM_TOKENS = 16
DIM        = 32
DEPTH      = 2
HEADS      = 4
DIM_HEAD   = 16
MULT       = 4          # FeedForward mult
BATCH      = 2
SEQ        = 8
LN_EPS     = 1e-5       # PyTorch nn.LayerNorm default

INNER   = HEADS * DIM_HEAD   # 64
FF      = DIM * MULT         # 128
QKV_PAD = 256                # 3*INNER = 192, zero-padded to a multiple of 128


# ---------------- in-kernel helpers ----------------
def _erf(x):
    # Abramowitz & Stegun 7.1.26 rational approximation (max abs err ~1.5e-7),
    # built only from ops with guaranteed Mosaic lowerings (exp, mul, add, div).
    a1, a2, a3, a4, a5 = 0.254829592, -0.284496736, 1.421413741, -1.453152027, 1.061405429
    p = 0.3275911
    s = jnp.where(x >= 0.0, 1.0, -1.0)
    ax = jnp.abs(x)
    t = 1.0 / (1.0 + p * ax)
    poly = ((((a5 * t + a4) * t + a3) * t + a2) * t + a1) * t
    return s * (1.0 - poly * jnp.exp(-ax * ax))


def _gelu_exact(x):
    # matches torch.nn.functional.gelu (exact, erf-based) up to ~1e-7
    return 0.5 * x * (1.0 + _erf(x * 0.7071067811865475))


def _layernorm(x, w, b):
    mean = jnp.mean(x, axis=-1, keepdims=True)
    var = jnp.mean((x - mean) * (x - mean), axis=-1, keepdims=True)
    return (x - mean) * jax.lax.rsqrt(var + LN_EPS) * w + b


# ---------------- fused kernel (embedding + all transformer blocks) ----------------
def fused_transformer_kernel(tok_ref, table_ref, wqkv_ref, wout_ref, w1_ref,
                             w2_ref, small_ref, o_ref, *,
                             heads, dim_head, batch, seq, depth):
    bn = batch * seq
    inner = heads * dim_head

    # ---- embedding lookup via one-hot matmul (MXU) ----
    ids = tok_ref[...]                                              # (BN, 1) int32
    n_tok = table_ref.shape[0]
    onehot = (ids == jax.lax.broadcasted_iota(jnp.int32, (bn, n_tok), 1)).astype(jnp.float32)
    x = jnp.dot(onehot, table_ref[...], preferred_element_type=jnp.float32)   # (BN, D)

    for l in range(depth):
        wqkv = wqkv_ref[l]            # (D, 256)  [q|k|v|zero-pad], scale folded into q
        wout = wout_ref[l]            # (INNER, D)
        w1   = w1_ref[l]              # (D, 2*FF) [w1a | w1g]
        w2   = w2_ref[l]              # (FF, D)
        small = small_ref[l]          # (8, 128)  packed LN/bias rows
        ln1w = small[0:1, 0:DIM]; ln1b = small[1:2, 0:DIM]; bout = small[2:3, 0:DIM]
        ln2w = small[3:4, 0:DIM]; ln2b = small[4:5, 0:DIM]; b2   = small[5:6, 0:DIM]
        b1a  = small[6:7, :];     b1g  = small[7:8, :]

        # ---- Residual(PreNorm(Attention)) ----
        xn = _layernorm(x, ln1w, ln1b)                              # (BN, D)
        qkv = jnp.dot(xn, wqkv, preferred_element_type=jnp.float32) # (BN, 256), one MXU dot

        head_outs = []
        for h in range(heads):
            q = qkv[:, h * dim_head:(h + 1) * dim_head]             # (BN, dh), scale pre-folded
            k = qkv[:, inner + h * dim_head:inner + (h + 1) * dim_head]
            v = qkv[:, 2 * inner + h * dim_head:2 * inner + (h + 1) * dim_head]
            q3 = q.reshape(batch, seq, dim_head)
            k3 = k.reshape(batch, seq, dim_head)
            v3 = v.reshape(batch, seq, dim_head)
            sim = jnp.einsum('bnd,bmd->bnm', q3, k3,
                             preferred_element_type=jnp.float32)    # (B, N, N)
            sim = sim - jnp.max(sim, axis=-1, keepdims=True)
            p = jnp.exp(sim)
            p = p / jnp.sum(p, axis=-1, keepdims=True)              # exact softmax divide
            oh = jnp.einsum('bnm,bmd->bnd', p, v3,
                            preferred_element_type=jnp.float32)     # (B, N, dh)
            head_outs.append(oh.reshape(bn, dim_head))
        heads_cat = jnp.concatenate(head_outs, axis=-1)             # (BN, INNER)
        x = x + jnp.dot(heads_cat, wout,
                        preferred_element_type=jnp.float32) + bout  # fused out-proj

        # ---- Residual(PreNorm(FeedForward with GEGLU)) ----
        xn2 = _layernorm(x, ln2w, ln2b)
        h1 = jnp.dot(xn2, w1, preferred_element_type=jnp.float32)   # (BN, 2*FF), one dot
        ha = h1[:, 0:FF] + b1a                                      # 128-lane aligned split
        hg = h1[:, FF:2 * FF] + b1g
        geglu = ha * _gelu_exact(hg)
        x = jnp.dot(geglu, w2, preferred_element_type=jnp.float32) + b2 + x

    o_ref[...] = x


# ---------------- init-time parameter packing ----------------
def pack_params(layers):
    """Pack per-layer params into 5 slabs (done once, off the timed path)."""
    scale = DIM_HEAD ** (-0.5)
    wqkv_all, wout_all, w1_all, w2_all, small_all = [], [], [], [], []
    for (ln1w, ln1b, wq, wk, wv, wout, bout, ln2w, ln2b,
         w1a, b1a, w1g, b1g, w2, b2) in layers:
        def flat(w):  # (H, D, dh) -> (D, H*dh), column index = h*dh + d
            return jnp.transpose(w, (1, 0, 2)).reshape(DIM, INNER)
        wq2 = flat(wq) * scale          # fold attention scale into q weights
        wk2 = flat(wk)
        wv2 = flat(wv)
        pad = jnp.zeros((DIM, QKV_PAD - 3 * INNER), jnp.float32)
        wqkv_all.append(jnp.concatenate([wq2, wk2, wv2, pad], axis=1))   # (D, 256)
        wout_all.append(wout.reshape(INNER, DIM))                        # (64, 32)
        w1_all.append(jnp.concatenate([w1a, w1g], axis=1))               # (D, 2*FF)
        w2_all.append(w2)                                                # (FF, D)

        def pad128(row):  # (1, n) -> (1, 128)
            return jnp.pad(row, ((0, 0), (0, FF - row.shape[1])))
        small_all.append(jnp.concatenate([
            pad128(ln1w), pad128(ln1b), pad128(bout),
            pad128(ln2w), pad128(ln2b), pad128(b2),
            b1a, b1g], axis=0))                                          # (8, 128)
    return (jnp.stack(wqkv_all), jnp.stack(wout_all), jnp.stack(w1_all),
            jnp.stack(w2_all), jnp.stack(small_all))


# ---------------- wrapper (single pallas_call) ----------------
def transformer_forward(tokens, table, packed):
    B, N = tokens.shape
    T, D = table.shape
    BN = B * N
    wqkv_all, wout_all, w1_all, w2_all, small_all = packed
    depth = wqkv_all.shape[0]

    tok2 = tokens.reshape(BN, 1).astype(jnp.int32)
    inputs = [tok2, table, wqkv_all, wout_all, w1_all, w2_all, small_all]

    # advisory cost estimate for the XLA scheduler
    flops_layer = (2 * BN * D * QKV_PAD                          # fused qkv projection
                   + 2 * 2 * B * HEADS * N * N * DIM_HEAD        # scores + weighted sum
                   + 2 * BN * INNER * D                          # fused output projection
                   + 2 * BN * D * (2 * FF)                       # fused FF expand
                   + 2 * BN * FF * D)                            # FF contract
    flops = 2 * BN * T * D + depth * flops_layer
    transcendentals = depth * (B * HEADS * N * N + BN * FF + 8 * BN)
    bytes_accessed = sum(int(np.prod(a.shape)) * a.dtype.itemsize for a in inputs) + BN * D * 4

    kern = functools.partial(fused_transformer_kernel,
                             heads=HEADS, dim_head=DIM_HEAD,
                             batch=B, seq=N, depth=depth)
    out = pl.pallas_call(
        kern,
        out_shape=jax.ShapeDtypeStruct((BN, D), jnp.float32),
        cost_estimate=pl.CostEstimate(flops=int(flops),
                                      transcendentals=int(transcendentals),
                                      bytes_accessed=int(bytes_accessed)),
    )(*inputs)
    return out.reshape(B, N, D)


# ---------------- deterministic parameter init ----------------
def init_params(key, num_tokens, dim, depth, heads, dim_head, mult):
    ff = dim * mult
    keys = jax.random.split(key, 1 + depth * 10)
    table = jax.random.normal(keys[0], (num_tokens, dim), jnp.float32)
    layers = []
    idx = 1
    for _ in range(depth):
        k = keys[idx:idx + 10]; idx += 10
        ln1w = jnp.ones((1, dim), jnp.float32)
        ln1b = jnp.zeros((1, dim), jnp.float32)
        wq = jax.random.normal(k[0], (heads, dim, dim_head), jnp.float32) / np.sqrt(dim)
        wk = jax.random.normal(k[1], (heads, dim, dim_head), jnp.float32) / np.sqrt(dim)
        wv = jax.random.normal(k[2], (heads, dim, dim_head), jnp.float32) / np.sqrt(dim)
        wout = jax.random.normal(k[3], (heads, dim_head, dim), jnp.float32) / np.sqrt(heads * dim_head)
        bout = jax.random.normal(k[4], (1, dim), jnp.float32) * 0.01
        ln2w = jnp.ones((1, dim), jnp.float32)
        ln2b = jnp.zeros((1, dim), jnp.float32)
        w1a = jax.random.normal(k[5], (dim, ff), jnp.float32) / np.sqrt(dim)
        w1g = jax.random.normal(k[6], (dim, ff), jnp.float32) / np.sqrt(dim)
        b1a = jax.random.normal(k[7], (1, ff), jnp.float32) * 0.01
        b1g = jax.random.normal(k[8], (1, ff), jnp.float32) * 0.01
        w2 = jax.random.normal(k[9], (ff, dim), jnp.float32) / np.sqrt(ff)
        b2 = jnp.zeros((1, dim), jnp.float32)
        layers.append((ln1w, ln1b, wq, wk, wv, wout, bout, ln2w, ln2b,
                       w1a, b1a, w1g, b1g, w2, b2))
    return table, layers


# ---------------- pure-JAX reference (for correctness check) ----------------
def reference_forward(tokens, table, layers, heads, dim_head):
    hi = jax.lax.Precision.HIGHEST
    x = table[tokens]                                               # (B, N, D)
    for (ln1w, ln1b, wq, wk, wv, wout, bout, ln2w, ln2b,
         w1a, b1a, w1g, b1g, w2, b2) in layers:
        def ln(t, w, b):
            m = jnp.mean(t, -1, keepdims=True)
            v = jnp.mean((t - m) ** 2, -1, keepdims=True)
            return (t - m) / jnp.sqrt(v + LN_EPS) * w[0] + b[0]

        xn = ln(x, ln1w, ln1b)
        q = jnp.einsum('bnd,hdk->bhnk', xn, wq, precision=hi)
        k = jnp.einsum('bnd,hdk->bhnk', xn, wk, precision=hi)
        v = jnp.einsum('bnd,hdk->bhnk', xn, wv, precision=hi)
        sim = jnp.einsum('bhid,bhjd->bhij', q, k, precision=hi) * (dim_head ** -0.5)
        attn = jax.nn.softmax(sim, axis=-1)
        out = jnp.einsum('bhij,bhjd->bhid', attn, v, precision=hi)
        x = jnp.einsum('bhnd,hdk->bnk', out, wout, precision=hi) + bout[0] + x

        xn2 = ln(x, ln2w, ln2b)
        a = jnp.einsum('bnd,df->bnf', xn2, w1a, precision=hi) + b1a[0]
        g = jnp.einsum('bnd,df->bnf', xn2, w1g, precision=hi) + b1g[0]
        geglu = a * (0.5 * g * (1.0 + jax.scipy.special.erf(g / np.sqrt(2.0))))
        x = jnp.einsum('bnf,fd->bnd', geglu, w2, precision=hi) + b2[0] + x
    return x


if __name__ == "__main__":
    key = jax.random.PRNGKey(0)
    kp, kt = jax.random.split(key)
    table, layers = init_params(kp, NUM_TOKENS, DIM, DEPTH, HEADS, DIM_HEAD, MULT)
    packed = pack_params(layers)                     # one-time, off the timed path
    tokens = jax.random.randint(kt, (BATCH, SEQ), 0, NUM_TOKENS, dtype=jnp.int32)

    out = jax.block_until_ready(transformer_forward(tokens, table, packed))
    ref = jax.block_until_ready(reference_forward(tokens, table, layers, HEADS, DIM_HEAD))
    np.testing.assert_allclose(np.asarray(out), np.asarray(ref), rtol=2e-3, atol=2e-3)

    print("KERNEL_OK")
</pallas_src>

<mosaic_0001>
module attributes {stable_mosaic.version = 11 : i64} {
  func.func @fused_transformer_kernel(%arg0: memref<16x1xi32, #tpu.memory_space<vmem>>, %arg1: memref<16x32xf32, #tpu.memory_space<vmem>>, %arg2: memref<2x32x256xf32, #tpu.memory_space<vmem>>, %arg3: memref<2x64x32xf32, #tpu.memory_space<vmem>>, %arg4: memref<2x32x256xf32, #tpu.memory_space<vmem>>, %arg5: memref<2x128x32xf32, #tpu.memory_space<vmem>>, %arg6: memref<2x8x128xf32, #tpu.memory_space<vmem>>, %arg7: memref<16x32xf32, #tpu.memory_space<vmem>>) attributes {dimension_semantics = [], scalar_prefetch = 0 : i64, scratch_operands = 0 : i64, tpu.core_type = #tpu.core_type<tc>} {
    %c0 = arith.constant 0 : index
    %c0_0 = arith.constant 0 : index
    %0 = vector.load %arg0[%c0, %c0_0] : memref<16x1xi32, #tpu.memory_space<vmem>>, vector<16x1xi32>
    %1 = tpu.iota {dimensions = array<i32: 1>} : vector<16x16xi32>
    %2 = vector.broadcast %0 : vector<16x1xi32> to vector<16x16xi32>
    %3 = arith.cmpi eq, %2, %1 : vector<16x16xi32>
    %4 = arith.extui %3 : vector<16x16xi1> to vector<16x16xi32>
    %5 = arith.sitofp %4 : vector<16x16xi32> to vector<16x16xf32>
    %c0_1 = arith.constant 0 : index
    %c0_2 = arith.constant 0 : index
    %6 = vector.load %arg1[%c0_1, %c0_2] : memref<16x32xf32, #tpu.memory_space<vmem>>, vector<16x32xf32>
    %cst = arith.constant dense<0.000000e+00> : vector<16x32xf32>
    %7 = tpu.matmul %5, %6, %cst {dimension_numbers = #tpu.dot_dimension_numbers<[1], [0], [0], [1], [0, 0, 1, 1], [], []>} : vector<16x16xf32>, vector<16x32xf32>, vector<16x32xf32> -> vector<16x32xf32>
    %c0_3 = arith.constant 0 : index
    %c0_4 = arith.constant 0 : index
    %c0_5 = arith.constant 0 : index
    %8 = vector.load %arg2[%c0_3, %c0_4, %c0_5] : memref<2x32x256xf32, #tpu.memory_space<vmem>>, vector<1x32x256xf32>
    %9 = vector.shape_cast %8 : vector<1x32x256xf32> to vector<32x256xf32>
    %c0_6 = arith.constant 0 : index
    %c0_7 = arith.constant 0 : index
    %c0_8 = arith.constant 0 : index
    %10 = vector.load %arg3[%c0_6, %c0_7, %c0_8] : memref<2x64x32xf32, #tpu.memory_space<vmem>>, vector<1x64x32xf32>
    %11 = vector.shape_cast %10 : vector<1x64x32xf32> to vector<64x32xf32>
    %c0_9 = arith.constant 0 : index
    %c0_10 = arith.constant 0 : index
    %c0_11 = arith.constant 0 : index
    %12 = vector.load %arg4[%c0_9, %c0_10, %c0_11] : memref<2x32x256xf32, #tpu.memory_space<vmem>>, vector<1x32x256xf32>
    %13 = vector.shape_cast %12 : vector<1x32x256xf32> to vector<32x256xf32>
    %c0_12 = arith.constant 0 : index
    %c0_13 = arith.constant 0 : index
    %c0_14 = arith.constant 0 : index
    %14 = vector.load %arg5[%c0_12, %c0_13, %c0_14] : memref<2x128x32xf32, #tpu.memory_space<vmem>>, vector<1x128x32xf32>
    %15 = vector.shape_cast %14 : vector<1x128x32xf32> to vector<128x32xf32>
    %c0_15 = arith.constant 0 : index
    %c0_16 = arith.constant 0 : index
    %c0_17 = arith.constant 0 : index
    %16 = vector.load %arg6[%c0_15, %c0_16, %c0_17] : memref<2x8x128xf32, #tpu.memory_space<vmem>>, vector<1x8x128xf32>
    %17 = vector.shape_cast %16 : vector<1x8x128xf32> to vector<8x128xf32>
    %18 = vector.extract_strided_slice %17 {offsets = [0, 0], sizes = [1, 32], strides = [1, 1]} : vector<8x128xf32> to vector<1x32xf32>
    %19 = vector.extract_strided_slice %17 {offsets = [1, 0], sizes = [1, 32], strides = [1, 1]} : vector<8x128xf32> to vector<1x32xf32>
    %20 = vector.extract_strided_slice %17 {offsets = [2, 0], sizes = [1, 32], strides = [1, 1]} : vector<8x128xf32> to vector<1x32xf32>
    %21 = vector.extract_strided_slice %17 {offsets = [3, 0], sizes = [1, 32], strides = [1, 1]} : vector<8x128xf32> to vector<1x32xf32>
    %22 = vector.extract_strided_slice %17 {offsets = [4, 0], sizes = [1, 32], strides = [1, 1]} : vector<8x128xf32> to vector<1x32xf32>
    %23 = vector.extract_strided_slice %17 {offsets = [5, 0], sizes = [1, 32], strides = [1, 1]} : vector<8x128xf32> to vector<1x32xf32>
    %24 = vector.extract_strided_slice %17 {offsets = [6, 0], sizes = [1, 128], strides = [1, 1]} : vector<8x128xf32> to vector<1x128xf32>
    %25 = vector.extract_strided_slice %17 {offsets = [7, 0], sizes = [1, 128], strides = [1, 1]} : vector<8x128xf32> to vector<1x128xf32>
    %cst_18 = arith.constant dense<0.000000e+00> : vector<16xf32>
    %26 = vector.multi_reduction <add>, %7, %cst_18 [1] : vector<16x32xf32> to vector<16xf32>
    %27 = vector.shape_cast %26 : vector<16xf32> to vector<16x1xf32>
    %cst_19 = arith.constant 3.200000e+01 : f32
    %28 = vector.broadcast %cst_19 : f32 to vector<16x1xf32>
    %29 = arith.divf %27, %28 : vector<16x1xf32>
    %30 = vector.broadcast %29 : vector<16x1xf32> to vector<16x32xf32>
    %31 = arith.subf %7, %30 : vector<16x32xf32>
    %32 = vector.broadcast %29 : vector<16x1xf32> to vector<16x32xf32>
    %33 = arith.subf %7, %32 : vector<16x32xf32>
    %34 = arith.mulf %31, %33 : vector<16x32xf32>
    %cst_20 = arith.constant dense<0.000000e+00> : vector<16xf32>
    %35 = vector.multi_reduction <add>, %34, %cst_20 [1] : vector<16x32xf32> to vector<16xf32>
    %36 = vector.shape_cast %35 : vector<16xf32> to vector<16x1xf32>
    %cst_21 = arith.constant 3.200000e+01 : f32
    %37 = vector.broadcast %cst_21 : f32 to vector<16x1xf32>
    %38 = arith.divf %36, %37 : vector<16x1xf32>
    %39 = vector.broadcast %29 : vector<16x1xf32> to vector<16x32xf32>
    %40 = arith.subf %7, %39 : vector<16x32xf32>
    %cst_22 = arith.constant 9.99999974E-6 : f32
    %41 = vector.broadcast %cst_22 : f32 to vector<16x1xf32>
    %42 = arith.addf %38, %41 : vector<16x1xf32>
    %43 = math.rsqrt %42 : vector<16x1xf32>
    %44 = vector.broadcast %43 : vector<16x1xf32> to vector<16x32xf32>
    %45 = arith.mulf %40, %44 : vector<16x32xf32>
    %46 = vector.broadcast %18 : vector<1x32xf32> to vector<16x32xf32>
    %47 = arith.mulf %45, %46 : vector<16x32xf32>
    %48 = vector.broadcast %19 : vector<1x32xf32> to vector<16x32xf32>
    %49 = arith.addf %47, %48 : vector<16x32xf32>
    %cst_23 = arith.constant dense<0.000000e+00> : vector<16x256xf32>
    %50 = tpu.matmul %49, %9, %cst_23 {dimension_numbers = #tpu.dot_dimension_numbers<[1], [0], [0], [1], [0, 0, 1, 1], [], []>} : vector<16x32xf32>, vector<32x256xf32>, vector<16x256xf32> -> vector<16x256xf32>
    %51 = vector.extract_strided_slice %50 {offsets = [0, 0], sizes = [16, 16], strides = [1, 1]} : vector<16x256xf32> to vector<16x16xf32>
    %52 = vector.extract_strided_slice %50 {offsets = [0, 64], sizes = [16, 16], strides = [1, 1]} : vector<16x256xf32> to vector<16x16xf32>
    %53 = vector.extract_strided_slice %50 {offsets = [0, 128], sizes = [16, 16], strides = [1, 1]} : vector<16x256xf32> to vector<16x16xf32>
    %54 = vector.shape_cast %51 : vector<16x16xf32> to vector<2x8x16xf32>
    %55 = vector.shape_cast %52 : vector<16x16xf32> to vector<2x8x16xf32>
    %56 = vector.shape_cast %53 : vector<16x16xf32> to vector<2x8x16xf32>
    "tpu.trace_start"() <{level = 10 : i32, message = "bnd,bmd->bnm"}> : () -> ()
    %cst_24 = arith.constant dense<0.000000e+00> : vector<2x8x8xf32>
    %57 = tpu.matmul %54, %55, %cst_24 {dimension_numbers = #tpu.dot_dimension_numbers<[2], [2], [1], [1], [0, 0, 0, 1, 1, 1], [0], [0]>} : vector<2x8x16xf32>, vector<2x8x16xf32>, vector<2x8x8xf32> -> vector<2x8x8xf32>
    "tpu.trace_stop"() : () -> ()
    %cst_25 = arith.constant dense<0xFF800000> : vector<2x8xf32>
    %58 = vector.multi_reduction <maximumf>, %57, %cst_25 [2] : vector<2x8x8xf32> to vector<2x8xf32>
    %59 = vector.shape_cast %58 : vector<2x8xf32> to vector<2x8x1xf32>
    %60 = vector.broadcast %59 : vector<2x8x1xf32> to vector<2x8x8xf32>
    %61 = arith.subf %57, %60 : vector<2x8x8xf32>
    %62 = math.exp %61 : vector<2x8x8xf32>
    %cst_26 = arith.constant dense<0.000000e+00> : vector<2x8xf32>
    %63 = vector.multi_reduction <add>, %62, %cst_26 [2] : vector<2x8x8xf32> to vector<2x8xf32>
    %64 = vector.shape_cast %63 : vector<2x8xf32> to vector<2x8x1xf32>
    %65 = vector.broadcast %64 : vector<2x8x1xf32> to vector<2x8x8xf32>
    %66 = arith.divf %62, %65 : vector<2x8x8xf32>
    "tpu.trace_start"() <{level = 10 : i32, message = "bnm,bmd->bnd"}> : () -> ()
    %cst_27 = arith.constant dense<0.000000e+00> : vector<2x8x16xf32>
    %67 = tpu.matmul %66, %56, %cst_27 {dimension_numbers = #tpu.dot_dimension_numbers<[2], [1], [1], [2], [0, 0, 0, 1, 1, 2], [0], [0]>} : vector<2x8x8xf32>, vector<2x8x16xf32>, vector<2x8x16xf32> -> vector<2x8x16xf32>
    "tpu.trace_stop"() : () -> ()
    %68 = vector.shape_cast %67 : vector<2x8x16xf32> to vector<16x16xf32>
    %69 = vector.extract_strided_slice %50 {offsets = [0, 16], sizes = [16, 16], strides = [1, 1]} : vector<16x256xf32> to vector<16x16xf32>
    %70 = vector.extract_strided_slice %50 {offsets = [0, 80], sizes = [16, 16], strides = [1, 1]} : vector<16x256xf32> to vector<16x16xf32>
    %71 = vector.extract_strided_slice %50 {offsets = [0, 144], sizes = [16, 16], strides = [1, 1]} : vector<16x256xf32> to vector<16x16xf32>
    %72 = vector.shape_cast %69 : vector<16x16xf32> to vector<2x8x16xf32>
    %73 = vector.shape_cast %70 : vector<16x16xf32> to vector<2x8x16xf32>
    %74 = vector.shape_cast %71 : vector<16x16xf32> to vector<2x8x16xf32>
    "tpu.trace_start"() <{level = 10 : i32, message = "bnd,bmd->bnm"}> : () -> ()
    %cst_28 = arith.constant dense<0.000000e+00> : vector<2x8x8xf32>
    %75 = tpu.matmul %72, %73, %cst_28 {dimension_numbers = #tpu.dot_dimension_numbers<[2], [2], [1], [1], [0, 0, 0, 1, 1, 1], [0], [0]>} : vector<2x8x16xf32>, vector<2x8x16xf32>, vector<2x8x8xf32> -> vector<2x8x8xf32>
    "tpu.trace_stop"() : () -> ()
    %cst_29 = arith.constant dense<0xFF800000> : vector<2x8xf32>
    %76 = vector.multi_reduction <maximumf>, %75, %cst_29 [2] : vector<2x8x8xf32> to vector<2x8xf32>
    %77 = vector.shape_cast %76 : vector<2x8xf32> to vector<2x8x1xf32>
    %78 = vector.broadcast %77 : vector<2x8x1xf32> to vector<2x8x8xf32>
    %79 = arith.subf %75, %78 : vector<2x8x8xf32>
    %80 = math.exp %79 : vector<2x8x8xf32>
    %cst_30 = arith.constant dense<0.000000e+00> : vector<2x8xf32>
    %81 = vector.multi_reduction <add>, %80, %cst_30 [2] : vector<2x8x8xf32> to vector<2x8xf32>
    %82 = vector.shape_cast %81 : vector<2x8xf32> to vector<2x8x1xf32>
    %83 = vector.broadcast %82 : vector<2x8x1xf32> to vector<2x8x8xf32>
    %84 = arith.divf %80, %83 : vector<2x8x8xf32>
    "tpu.trace_start"() <{level = 10 : i32, message = "bnm,bmd->bnd"}> : () -> ()
    %cst_31 = arith.constant dense<0.000000e+00> : vector<2x8x16xf32>
    %85 = tpu.matmul %84, %74, %cst_31 {dimension_numbers = #tpu.dot_dimension_numbers<[2], [1], [1], [2], [0, 0, 0, 1, 1, 2], [0], [0]>} : vector<2x8x8xf32>, vector<2x8x16xf32>, vector<2x8x16xf32> -> vector<2x8x16xf32>
    "tpu.trace_stop"() : () -> ()
    %86 = vector.shape_cast %85 : vector<2x8x16xf32> to vector<16x16xf32>
    %87 = vector.extract_strided_slice %50 {offsets = [0, 32], sizes = [16, 16], strides = [1, 1]} : vector<16x256xf32> to vector<16x16xf32>
    %88 = vector.extract_strided_slice %50 {offsets = [0, 96], sizes = [16, 16], strides = [1, 1]} : vector<16x256xf32> to vector<16x16xf32>
    %89 = vector.extract_strided_slice %50 {offsets = [0, 160], sizes = [16, 16], strides = [1, 1]} : vector<16x256xf32> to vector<16x16xf32>
    %90 = vector.shape_cast %87 : vector<16x16xf32> to vector<2x8x16xf32>
    %91 = vector.shape_cast %88 : vector<16x16xf32> to vector<2x8x16xf32>
    %92 = vector.shape_cast %89 : vector<16x16xf32> to vector<2x8x16xf32>
    "tpu.trace_start"() <{level = 10 : i32, message = "bnd,bmd->bnm"}> : () -> ()
    %cst_32 = arith.constant dense<0.000000e+00> : vector<2x8x8xf32>
    %93 = tpu.matmul %90, %91, %cst_32 {dimension_numbers = #tpu.dot_dimension_numbers<[2], [2], [1], [1], [0, 0, 0, 1, 1, 1], [0], [0]>} : vector<2x8x16xf32>, vector<2x8x16xf32>, vector<2x8x8xf32> -> vector<2x8x8xf32>
    "tpu.trace_stop"() : () -> ()
    %cst_33 = arith.constant dense<0xFF800000> : vector<2x8xf32>
    %94 = vector.multi_reduction <maximumf>, %93, %cst_33 [2] : vector<2x8x8xf32> to vector<2x8xf32>
    %95 = vector.shape_cast %94 : vector<2x8xf32> to vector<2x8x1xf32>
    %96 = vector.broadcast %95 : vector<2x8x1xf32> to vector<2x8x8xf32>
    %97 = arith.subf %93, %96 : vector<2x8x8xf32>
    %98 = math.exp %97 : vector<2x8x8xf32>
    %cst_34 = arith.constant dense<0.000000e+00> : vector<2x8xf32>
    %99 = vector.multi_reduction <add>, %98, %cst_34 [2] : vector<2x8x8xf32> to vector<2x8xf32>
    %100 = vector.shape_cast %99 : vector<2x8xf32> to vector<2x8x1xf32>
    %101 = vector.broadcast %100 : vector<2x8x1xf32> to vector<2x8x8xf32>
    %102 = arith.divf %98, %101 : vector<2x8x8xf32>
    "tpu.trace_start"() <{level = 10 : i32, message = "bnm,bmd->bnd"}> : () -> ()
    %cst_35 = arith.constant dense<0.000000e+00> : vector<2x8x16xf32>
    %103 = tpu.matmul %102, %92, %cst_35 {dimension_numbers = #tpu.dot_dimension_numbers<[2], [1], [1], [2], [0, 0, 0, 1, 1, 2], [0], [0]>} : vector<2x8x8xf32>, vector<2x8x16xf32>, vector<2x8x16xf32> -> vector<2x8x16xf32>
    "tpu.trace_stop"() : () -> ()
    %104 = vector.shape_cast %103 : vector<2x8x16xf32> to vector<16x16xf32>
    %105 = vector.extract_strided_slice %50 {offsets = [0, 48], sizes = [16, 16], strides = [1, 1]} : vector<16x256xf32> to vector<16x16xf32>
    %106 = vector.extract_strided_slice %50 {offsets = [0, 112], sizes = [16, 16], strides = [1, 1]} : vector<16x256xf32> to vector<16x16xf32>
    %107 = vector.extract_strided_slice %50 {offsets = [0, 176], sizes = [16, 16], strides = [1, 1]} : vector<16x256xf32> to vector<16x16xf32>
    %108 = vector.shape_cast %105 : vector<16x16xf32> to vector<2x8x16xf32>
    %109 = vector.shape_cast %106 : vector<16x16xf32> to vector<2x8x16xf32>
    %110 = vector.shape_cast %107 : vector<16x16xf32> to vector<2x8x16xf32>
    "tpu.trace_start"() <{level = 10 : i32, message = "bnd,bmd->bnm"}> : () -> ()
    %cst_36 = arith.constant dense<0.000000e+00> : vector<2x8x8xf32>
    %111 = tpu.matmul %108, %109, %cst_36 {dimension_numbers = #tpu.dot_dimension_numbers<[2], [2], [1], [1], [0, 0, 0, 1, 1, 1], [0], [0]>} : vector<2x8x16xf32>, vector<2x8x16xf32>, vector<2x8x8xf32> -> vector<2x8x8xf32>
    "tpu.trace_stop"() : () -> ()
    %cst_37 = arith.constant dense<0xFF800000> : vector<2x8xf32>
    %112 = vector.multi_reduction <maximumf>, %111, %cst_37 [2] : vector<2x8x8xf32> to vector<2x8xf32>
    %113 = vector.shape_cast %112 : vector<2x8xf32> to vector<2x8x1xf32>
    %114 = vector.broadcast %113 : vector<2x8x1xf32> to vector<2x8x8xf32>
    %115 = arith.subf %111, %114 : vector<2x8x8xf32>
    %116 = math.exp %115 : vector<2x8x8xf32>
    %cst_38 = arith.constant dense<0.000000e+00> : vector<2x8xf32>
    %117 = vector.multi_reduction <add>, %116, %cst_38 [2] : vector<2x8x8xf32> to vector<2x8xf32>
    %118 = vector.shape_cast %117 : vector<2x8xf32> to vector<2x8x1xf32>
    %119 = vector.broadcast %118 : vector<2x8x1xf32> to vector<2x8x8xf32>
    %120 = arith.divf %116, %119 : vector<2x8x8xf32>
    "tpu.trace_start"() <{level = 10 : i32, message = "bnm,bmd->bnd"}> : () -> ()
    %cst_39 = arith.constant dense<0.000000e+00> : vector<2x8x16xf32>
    %121 = tpu.matmul %120, %110, %cst_39 {dimension_numbers = #tpu.dot_dimension_numbers<[2], [1], [1], [2], [0, 0, 0, 1, 1, 2], [0], [0]>} : vector<2x8x8xf32>, vector<2x8x16xf32>, vector<2x8x16xf32> -> vector<2x8x16xf32>
    "tpu.trace_stop"() : () -> ()
    %122 = vector.shape_cast %121 : vector<2x8x16xf32> to vector<16x16xf32>
    %123 = tpu.concatenate %68, %86, %104, %122 in 1 : vector<16x16xf32>, vector<16x16xf32>, vector<16x16xf32>, vector<16x16xf32> -> vector<16x64xf32>
    %cst_40 = arith.constant dense<0.000000e+00> : vector<16x32xf32>
    %124 = tpu.matmul %123, %11, %cst_40 {dimension_numbers = #tpu.dot_dimension_numbers<[1], [0], [0], [1], [0, 0, 1, 1], [], []>} : vector<16x64xf32>, vector<64x32xf32>, vector<16x32xf32> -> vector<16x32xf32>
    %125 = arith.addf %7, %124 : vector<16x32xf32>
    %126 = vector.broadcast %20 : vector<1x32xf32> to vector<16x32xf32>
    %127 = arith.addf %125, %126 : vector<16x32xf32>
    %cst_41 = arith.constant dense<0.000000e+00> : vector<16xf32>
    %128 = vector.multi_reduction <add>, %127, %cst_41 [1] : vector<16x32xf32> to vector<16xf32>
    %129 = vector.shape_cast %128 : vector<16xf32> to vector<16x1xf32>
    %cst_42 = arith.constant 3.200000e+01 : f32
    %130 = vector.broadcast %cst_42 : f32 to vector<16x1xf32>
    %131 = arith.divf %129, %130 : vector<16x1xf32>
    %132 = vector.broadcast %131 : vector<16x1xf32> to vector<16x32xf32>
    %133 = arith.subf %127, %132 : vector<16x32xf32>
    %134 = vector.broadcast %131 : vector<16x1xf32> to vector<16x32xf32>
    %135 = arith.subf %127, %134 : vector<16x32xf32>
    %136 = arith.mulf %133, %135 : vector<16x32xf32>
    %cst_43 = arith.constant dense<0.000000e+00> : vector<16xf32>
    %137 = vector.multi_reduction <add>, %136, %cst_43 [1] : vector<16x32xf32> to vector<16xf32>
    %138 = vector.shape_cast %137 : vector<16xf32> to vector<16x1xf32>
    %cst_44 = arith.constant 3.200000e+01 : f32
    %139 = vector.broadcast %cst_44 : f32 to vector<16x1xf32>
    %140 = arith.divf %138, %139 : vector<16x1xf32>
    %141 = vector.broadcast %131 : vector<16x1xf32> to vector<16x32xf32>
    %142 = arith.subf %127, %141 : vector<16x32xf32>
    %cst_45 = arith.constant 9.99999974E-6 : f32
    %143 = vector.broadcast %cst_45 : f32 to vector<16x1xf32>
    %144 = arith.addf %140, %143 : vector<16x1xf32>
    %145 = math.rsqrt %144 : vector<16x1xf32>
    %146 = vector.broadcast %145 : vector<16x1xf32> to vector<16x32xf32>
    %147 = arith.mulf %142, %146 : vector<16x32xf32>
    %148 = vector.broadcast %21 : vector<1x32xf32> to vector<16x32xf32>
    %149 = arith.mulf %147, %148 : vector<16x32xf32>
    %150 = vector.broadcast %22 : vector<1x32xf32> to vector<16x32xf32>
    %151 = arith.addf %149, %150 : vector<16x32xf32>
    %cst_46 = arith.constant dense<0.000000e+00> : vector<16x256xf32>
    %152 = tpu.matmul %151, %13, %cst_46 {dimension_numbers = #tpu.dot_dimension_numbers<[1], [0], [0], [1], [0, 0, 1, 1], [], []>} : vector<16x32xf32>, vector<32x256xf32>, vector<16x256xf32> -> vector<16x256xf32>
    %153 = vector.extract_strided_slice %152 {offsets = [0, 0], sizes = [16, 128], strides = [1, 1]} : vector<16x256xf32> to vector<16x128xf32>
    %154 = vector.broadcast %24 : vector<1x128xf32> to vector<16x128xf32>
    %155 = arith.addf %153, %154 : vector<16x128xf32>
    %156 = vector.extract_strided_slice %152 {offsets = [0, 128], sizes = [16, 128], strides = [1, 1]} : vector<16x256xf32> to vector<16x128xf32>
    %157 = vector.broadcast %25 : vector<1x128xf32> to vector<16x128xf32>
    %158 = arith.addf %156, %157 : vector<16x128xf32>
    %cst_47 = arith.constant 5.000000e-01 : f32
    %159 = vector.broadcast %cst_47 : f32 to vector<16x128xf32>
    %160 = arith.mulf %159, %158 : vector<16x128xf32>
    %cst_48 = arith.constant 0.707106769 : f32
    %161 = vector.broadcast %cst_48 : f32 to vector<16x128xf32>
    %162 = arith.mulf %158, %161 : vector<16x128xf32>
    %cst_49 = arith.constant 0.000000e+00 : f32
    %163 = vector.broadcast %cst_49 : f32 to vector<16x128xf32>
    %164 = arith.cmpf oge, %162, %163 : vector<16x128xf32>
    %cst_50 = arith.constant 1.000000e+00 : f32
    %cst_51 = arith.constant -1.000000e+00 : f32
    %165 = vector.broadcast %cst_50 : f32 to vector<16x128xf32>
    %166 = vector.broadcast %cst_51 : f32 to vector<16x128xf32>
    %167 = arith.select %164, %165, %166 : vector<16x128xi1>, vector<16x128xf32>
    %168 = math.absf %162 : vector<16x128xf32>
    %cst_52 = arith.constant 0.327591091 : f32
    %169 = vector.broadcast %cst_52 : f32 to vector<16x128xf32>
    %170 = arith.mulf %169, %168 : vector<16x128xf32>
    %cst_53 = arith.constant 1.000000e+00 : f32
    %171 = vector.broadcast %cst_53 : f32 to vector<16x128xf32>
    %172 = arith.addf %171, %170 : vector<16x128xf32>
    %cst_54 = arith.constant 1.000000e+00 : f32
    %173 = vector.broadcast %cst_54 : f32 to vector<16x128xf32>
    %174 = arith.divf %173, %172 : vector<16x128xf32>
    %cst_55 = arith.constant 1.06140542 : f32
    %175 = vector.broadcast %cst_55 : f32 to vector<16x128xf32>
    %176 = arith.mulf %175, %174 : vector<16x128xf32>
    %cst_56 = arith.constant -1.45315206 : f32
    %177 = vector.broadcast %cst_56 : f32 to vector<16x128xf32>
    %178 = arith.addf %176, %177 : vector<16x128xf32>
    %179 = arith.mulf %178, %174 : vector<16x128xf32>
    %cst_57 = arith.constant 1.42141378 : f32
    %180 = vector.broadcast %cst_57 : f32 to vector<16x128xf32>
    %181 = arith.addf %179, %180 : vector<16x128xf32>
    %182 = arith.mulf %181, %174 : vector<16x128xf32>
    %cst_58 = arith.constant -0.284496725 : f32
    %183 = vector.broadcast %cst_58 : f32 to vector<16x128xf32>
    %184 = arith.addf %182, %183 : vector<16x128xf32>
    %185 = arith.mulf %184, %174 : vector<16x128xf32>
    %cst_59 = arith.constant 0.254829586 : f32
    %186 = vector.broadcast %cst_59 : f32 to vector<16x128xf32>
    %187 = arith.addf %185, %186 : vector<16x128xf32>
    %188 = arith.mulf %187, %174 : vector<16x128xf32>
    %cst_60 = arith.constant 0.000000e+00 : f32
    %189 = vector.broadcast %cst_60 : f32 to vector<16x128xf32>
    %190 = arith.subf %189, %168 : vector<16x128xf32>
    %191 = arith.mulf %190, %168 : vector<16x128xf32>
    %192 = math.exp %191 : vector<16x128xf32>
    %193 = arith.mulf %188, %192 : vector<16x128xf32>
    %cst_61 = arith.constant 1.000000e+00 : f32
    %194 = vector.broadcast %cst_61 : f32 to vector<16x128xf32>
    %195 = arith.subf %194, %193 : vector<16x128xf32>
    %196 = arith.mulf %167, %195 : vector<16x128xf32>
    %cst_62 = arith.constant 1.000000e+00 : f32
    %197 = vector.broadcast %cst_62 : f32 to vector<16x128xf32>
    %198 = arith.addf %197, %196 : vector<16x128xf32>
    %199 = arith.mulf %160, %198 : vector<16x128xf32>
    %200 = arith.mulf %155, %199 : vector<16x128xf32>
    %cst_63 = arith.constant dense<0.000000e+00> : vector<16x32xf32>
    %201 = tpu.matmul %200, %15, %cst_63 {dimension_numbers = #tpu.dot_dimension_numbers<[1], [0], [0], [1], [0, 0, 1, 1], [], []>} : vector<16x128xf32>, vector<128x32xf32>, vector<16x32xf32> -> vector<16x32xf32>
    %202 = vector.broadcast %23 : vector<1x32xf32> to vector<16x32xf32>
    %203 = arith.addf %201, %202 : vector<16x32xf32>
    %204 = arith.addf %203, %127 : vector<16x32xf32>
    %c1 = arith.constant 1 : index
    %c0_64 = arith.constant 0 : index
    %c0_65 = arith.constant 0 : index
    %205 = vector.load %arg2[%c1, %c0_64, %c0_65] : memref<2x32x256xf32, #tpu.memory_space<vmem>>, vector<1x32x256xf32>
    %206 = vector.shape_cast %205 : vector<1x32x256xf32> to vector<32x256xf32>
    %c1_66 = arith.constant 1 : index
    %c0_67 = arith.constant 0 : index
    %c0_68 = arith.constant 0 : index
    %207 = vector.load %arg3[%c1_66, %c0_67, %c0_68] : memref<2x64x32xf32, #tpu.memory_space<vmem>>, vector<1x64x32xf32>
    %208 = vector.shape_cast %207 : vector<1x64x32xf32> to vector<64x32xf32>
    %c1_69 = arith.constant 1 : index
    %c0_70 = arith.constant 0 : index
    %c0_71 = arith.constant 0 : index
    %209 = vector.load %arg4[%c1_69, %c0_70, %c0_71] : memref<2x32x256xf32, #tpu.memory_space<vmem>>, vector<1x32x256xf32>
    %210 = vector.shape_cast %209 : vector<1x32x256xf32> to vector<32x256xf32>
    %c1_72 = arith.constant 1 : index
    %c0_73 = arith.constant 0 : index
    %c0_74 = arith.constant 0 : index
    %211 = vector.load %arg5[%c1_72, %c0_73, %c0_74] : memref<2x128x32xf32, #tpu.memory_space<vmem>>, vector<1x128x32xf32>
    %212 = vector.shape_cast %211 : vector<1x128x32xf32> to vector<128x32xf32>
    %c1_75 = arith.constant 1 : index
    %c0_76 = arith.constant 0 : index
    %c0_77 = arith.constant 0 : index
    %213 = vector.load %arg6[%c1_75, %c0_76, %c0_77] : memref<2x8x128xf32, #tpu.memory_space<vmem>>, vector<1x8x128xf32>
    %214 = vector.shape_cast %213 : vector<1x8x128xf32> to vector<8x128xf32>
    %215 = vector.extract_strided_slice %214 {offsets = [0, 0], sizes = [1, 32], strides = [1, 1]} : vector<8x128xf32> to vector<1x32xf32>
    %216 = vector.extract_strided_slice %214 {offsets = [1, 0], sizes = [1, 32], strides = [1, 1]} : vector<8x128xf32> to vector<1x32xf32>
    %217 = vector.extract_strided_slice %214 {offsets = [2, 0], sizes = [1, 32], strides = [1, 1]} : vector<8x128xf32> to vector<1x32xf32>
    %218 = vector.extract_strided_slice %214 {offsets = [3, 0], sizes = [1, 32], strides = [1, 1]} : vector<8x128xf32> to vector<1x32xf32>
    %219 = vector.extract_strided_slice %214 {offsets = [4, 0], sizes = [1, 32], strides = [1, 1]} : vector<8x128xf32> to vector<1x32xf32>
    %220 = vector.extract_strided_slice %214 {offsets = [5, 0], sizes = [1, 32], strides = [1, 1]} : vector<8x128xf32> to vector<1x32xf32>
    %221 = vector.extract_strided_slice %214 {offsets = [6, 0], sizes = [1, 128], strides = [1, 1]} : vector<8x128xf32> to vector<1x128xf32>
    %222 = vector.extract_strided_slice %214 {offsets = [7, 0], sizes = [1, 128], strides = [1, 1]} : vector<8x128xf32> to vector<1x128xf32>
    %cst_78 = arith.constant dense<0.000000e+00> : vector<16xf32>
    %223 = vector.multi_reduction <add>, %204, %cst_78 [1] : vector<16x32xf32> to vector<16xf32>
    %224 = vector.shape_cast %223 : vector<16xf32> to vector<16x1xf32>
    %cst_79 = arith.constant 3.200000e+01 : f32
    %225 = vector.broadcast %cst_79 : f32 to vector<16x1xf32>
    %226 = arith.divf %224, %225 : vector<16x1xf32>
    %227 = vector.broadcast %226 : vector<16x1xf32> to vector<16x32xf32>
    %228 = arith.subf %204, %227 : vector<16x32xf32>
    %229 = vector.broadcast %226 : vector<16x1xf32> to vector<16x32xf32>
    %230 = arith.subf %204, %229 : vector<16x32xf32>
    %231 = arith.mulf %228, %230 : vector<16x32xf32>
    %cst_80 = arith.constant dense<0.000000e+00> : vector<16xf32>
    %232 = vector.multi_reduction <add>, %231, %cst_80 [1] : vector<16x32xf32> to vector<16xf32>
    %233 = vector.shape_cast %232 : vector<16xf32> to vector<16x1xf32>
    %cst_81 = arith.constant 3.200000e+01 : f32
    %234 = vector.broadcast %cst_81 : f32 to vector<16x1xf32>
    %235 = arith.divf %233, %234 : vector<16x1xf32>
    %236 = vector.broadcast %226 : vector<16x1xf32> to vector<16x32xf32>
    %237 = arith.subf %204, %236 : vector<16x32xf32>
    %cst_82 = arith.constant 9.99999974E-6 : f32
    %238 = vector.broadcast %cst_82 : f32 to vector<16x1xf32>
    %239 = arith.addf %235, %238 : vector<16x1xf32>
    %240 = math.rsqrt %239 : vector<16x1xf32>
    %241 = vector.broadcast %240 : vector<16x1xf32> to vector<16x32xf32>
    %242 = arith.mulf %237, %241 : vector<16x32xf32>
    %243 = vector.broadcast %215 : vector<1x32xf32> to vector<16x32xf32>
    %244 = arith.mulf %242, %243 : vector<16x32xf32>
    %245 = vector.broadcast %216 : vector<1x32xf32> to vector<16x32xf32>
    %246 = arith.addf %244, %245 : vector<16x32xf32>
    %cst_83 = arith.constant dense<0.000000e+00> : vector<16x256xf32>
    %247 = tpu.matmul %246, %206, %cst_83 {dimension_numbers = #tpu.dot_dimension_numbers<[1], [0], [0], [1], [0, 0, 1, 1], [], []>} : vector<16x32xf32>, vector<32x256xf32>, vector<16x256xf32> -> vector<16x256xf32>
    %248 = vector.extract_strided_slice %247 {offsets = [0, 0], sizes = [16, 16], strides = [1, 1]} : vector<16x256xf32> to vector<16x16xf32>
    %249 = vector.extract_strided_slice %247 {offsets = [0, 64], sizes = [16, 16], strides = [1, 1]} : vector<16x256xf32> to vector<16x16xf32>
    %250 = vector.extract_strided_slice %247 {offsets = [0, 128], sizes = [16, 16], strides = [1, 1]} : vector<16x256xf32> to vector<16x16xf32>
    %251 = vector.shape_cast %248 : vector<16x16xf32> to vector<2x8x16xf32>
    %252 = vector.shape_cast %249 : vector<16x16xf32> to vector<2x8x16xf32>
    %253 = vector.shape_cast %250 : vector<16x16xf32> to vector<2x8x16xf32>
    "tpu.trace_start"() <{level = 10 : i32, message = "bnd,bmd->bnm"}> : () -> ()
    %cst_84 = arith.constant dense<0.000000e+00> : vector<2x8x8xf32>
    %254 = tpu.matmul %251, %252, %cst_84 {dimension_numbers = #tpu.dot_dimension_numbers<[2], [2], [1], [1], [0, 0, 0, 1, 1, 1], [0], [0]>} : vector<2x8x16xf32>, vector<2x8x16xf32>, vector<2x8x8xf32> -> vector<2x8x8xf32>
    "tpu.trace_stop"() : () -> ()
    %cst_85 = arith.constant dense<0xFF800000> : vector<2x8xf32>
    %255 = vector.multi_reduction <maximumf>, %254, %cst_85 [2] : vector<2x8x8xf32> to vector<2x8xf32>
    %256 = vector.shape_cast %255 : vector<2x8xf32> to vector<2x8x1xf32>
    %257 = vector.broadcast %256 : vector<2x8x1xf32> to vector<2x8x8xf32>
    %258 = arith.subf %254, %257 : vector<2x8x8xf32>
    %259 = math.exp %258 : vector<2x8x8xf32>
    %cst_86 = arith.constant dense<0.000000e+00> : vector<2x8xf32>
    %260 = vector.multi_reduction <add>, %259, %cst_86 [2] : vector<2x8x8xf32> to vector<2x8xf32>
    %261 = vector.shape_cast %260 : vector<2x8xf32> to vector<2x8x1xf32>
    %262 = vector.broadcast %261 : vector<2x8x1xf32> to vector<2x8x8xf32>
    %263 = arith.divf %259, %262 : vector<2x8x8xf32>
    "tpu.trace_start"() <{level = 10 : i32, message = "bnm,bmd->bnd"}> : () -> ()
    %cst_87 = arith.constant dense<0.000000e+00> : vector<2x8x16xf32>
    %264 = tpu.matmul %263, %253, %cst_87 {dimension_numbers = #tpu.dot_dimension_numbers<[2], [1], [1], [2], [0, 0, 0, 1, 1, 2], [0], [0]>} : vector<2x8x8xf32>, vector<2x8x16xf32>, vector<2x8x16xf32> -> vector<2x8x16xf32>
    "tpu.trace_stop"() : () -> ()
    %265 = vector.shape_cast %264 : vector<2x8x16xf32> to vector<16x16xf32>
    %266 = vector.extract_strided_slice %247 {offsets = [0, 16], sizes = [16, 16], strides = [1, 1]} : vector<16x256xf32> to vector<16x16xf32>
    %267 = vector.extract_strided_slice %247 {offsets = [0, 80], sizes = [16, 16], strides = [1, 1]} : vector<16x256xf32> to vector<16x16xf32>
    %268 = vector.extract_strided_slice %247 {offsets = [0, 144], sizes = [16, 16], strides = [1, 1]} : vector<16x256xf32> to vector<16x16xf32>
    %269 = vector.shape_cast %266 : vector<16x16xf32> to vector<2x8x16xf32>
    %270 = vector.shape_cast %267 : vector<16x16xf32> to vector<2x8x16xf32>
    %271 = vector.shape_cast %268 : vector<16x16xf32> to vector<2x8x16xf32>
    "tpu.trace_start"() <{level = 10 : i32, message = "bnd,bmd->bnm"}> : () -> ()
    %cst_88 = arith.constant dense<0.000000e+00> : vector<2x8x8xf32>
    %272 = tpu.matmul %269, %270, %cst_88 {dimension_numbers = #tpu.dot_dimension_numbers<[2], [2], [1], [1], [0, 0, 0, 1, 1, 1], [0], [0]>} : vector<2x8x16xf32>, vector<2x8x16xf32>, vector<2x8x8xf32> -> vector<2x8x8xf32>
    "tpu.trace_stop"() : () -> ()
    %cst_89 = arith.constant dense<0xFF800000> : vector<2x8xf32>
    %273 = vector.multi_reduction <maximumf>, %272, %cst_89 [2] : vector<2x8x8xf32> to vector<2x8xf32>
    %274 = vector.shape_cast %273 : vector<2x8xf32> to vector<2x8x1xf32>
    %275 = vector.broadcast %274 : vector<2x8x1xf32> to vector<2x8x8xf32>
    %276 = arith.subf %272, %275 : vector<2x8x8xf32>
    %277 = math.exp %276 : vector<2x8x8xf32>
    %cst_90 = arith.constant dense<0.000000e+00> : vector<2x8xf32>
    %278 = vector.multi_reduction <add>, %277, %cst_90 [2] : vector<2x8x8xf32> to vector<2x8xf32>
    %279 = vector.shape_cast %278 : vector<2x8xf32> to vector<2x8x1xf32>
    %280 = vector.broadcast %279 : vector<2x8x1xf32> to vector<2x8x8xf32>
    %281 = arith.divf %277, %280 : vector<2x8x8xf32>
    "tpu.trace_start"() <{level = 10 : i32, message = "bnm,bmd->bnd"}> : () -> ()
    %cst_91 = arith.constant dense<0.000000e+00> : vector<2x8x16xf32>
    %282 = tpu.matmul %281, %271, %cst_91 {dimension_numbers = #tpu.dot_dimension_numbers<[2], [1], [1], [2], [0, 0, 0, 1, 1, 2], [0], [0]>} : vector<2x8x8xf32>, vector<2x8x16xf32>, vector<2x8x16xf32> -> vector<2x8x16xf32>
    "tpu.trace_stop"() : () -> ()
    %283 = vector.shape_cast %282 : vector<2x8x16xf32> to vector<16x16xf32>
    %284 = vector.extract_strided_slice %247 {offsets = [0, 32], sizes = [16, 16], strides = [1, 1]} : vector<16x256xf32> to vector<16x16xf32>
    %285 = vector.extract_strided_slice %247 {offsets = [0, 96], sizes = [16, 16], strides = [1, 1]} : vector<16x256xf32> to vector<16x16xf32>
    %286 = vector.extract_strided_slice %247 {offsets = [0, 160], sizes = [16, 16], strides = [1, 1]} : vector<16x256xf32> to vector<16x16xf32>
    %287 = vector.shape_cast %284 : vector<16x16xf32> to vector<2x8x16xf32>
    %288 = vector.shape_cast %285 : vector<16x16xf32> to vector<2x8x16xf32>
    %289 = vector.shape_cast %286 : vector<16x16xf32> to vector<2x8x16xf32>
    "tpu.trace_start"() <{level = 10 : i32, message = "bnd,bmd->bnm"}> : () -> ()
    %cst_92 = arith.constant dense<0.000000e+00> : vector<2x8x8xf32>
    %290 = tpu.matmul %287, %288, %cst_92 {dimension_numbers = #tpu.dot_dimension_numbers<[2], [2], [1], [1], [0, 0, 0, 1, 1, 1], [0], [0]>} : vector<2x8x16xf32>, vector<2x8x16xf32>, vector<2x8x8xf32> -> vector<2x8x8xf32>
    "tpu.trace_stop"() : () -> ()
    %cst_93 = arith.constant dense<0xFF800000> : vector<2x8xf32>
    %291 = vector.multi_reduction <maximumf>, %290, %cst_93 [2] : vector<2x8x8xf32> to vector<2x8xf32>
    %292 = vector.shape_cast %291 : vector<2x8xf32> to vector<2x8x1xf32>
    %293 = vector.broadcast %292 : vector<2x8x1xf32> to vector<2x8x8xf32>
    %294 = arith.subf %290, %293 : vector<2x8x8xf32>
    %295 = math.exp %294 : vector<2x8x8xf32>
    %cst_94 = arith.constant dense<0.000000e+00> : vector<2x8xf32>
    %296 = vector.multi_reduction <add>, %295, %cst_94 [2] : vector<2x8x8xf32> to vector<2x8xf32>
    %297 = vector.shape_cast %296 : vector<2x8xf32> to vector<2x8x1xf32>
    %298 = vector.broadcast %297 : vector<2x8x1xf32> to vector<2x8x8xf32>
    %299 = arith.divf %295, %298 : vector<2x8x8xf32>
    "tpu.trace_start"() <{level = 10 : i32, message = "bnm,bmd->bnd"}> : () -> ()
    %cst_95 = arith.constant dense<0.000000e+00> : vector<2x8x16xf32>
    %300 = tpu.matmul %299, %289, %cst_95 {dimension_numbers = #tpu.dot_dimension_numbers<[2], [1], [1], [2], [0, 0, 0, 1, 1, 2], [0], [0]>} : vector<2x8x8xf32>, vector<2x8x16xf32>, vector<2x8x16xf32> -> vector<2x8x16xf32>
    "tpu.trace_stop"() : () -> ()
    %301 = vector.shape_cast %300 : vector<2x8x16xf32> to vector<16x16xf32>
    %302 = vector.extract_strided_slice %247 {offsets = [0, 48], sizes = [16, 16], strides = [1, 1]} : vector<16x256xf32> to vector<16x16xf32>
    %303 = vector.extract_strided_slice %247 {offsets = [0, 112], sizes = [16, 16], strides = [1, 1]} : vector<16x256xf32> to vector<16x16xf32>
    %304 = vector.extract_strided_slice %247 {offsets = [0, 176], sizes = [16, 16], strides = [1, 1]} : vector<16x256xf32> to vector<16x16xf32>
    %305 = vector.shape_cast %302 : vector<16x16xf32> to vector<2x8x16xf32>
    %306 = vector.shape_cast %303 : vector<16x16xf32> to vector<2x8x16xf32>
    %307 = vector.shape_cast %304 : vector<16x16xf32> to vector<2x8x16xf32>
    "tpu.trace_start"() <{level = 10 : i32, message = "bnd,bmd->bnm"}> : () -> ()
    %cst_96 = arith.constant dense<0.000000e+00> : vector<2x8x8xf32>
    %308 = tpu.matmul %305, %306, %cst_96 {dimension_numbers = #tpu.dot_dimension_numbers<[2], [2], [1], [1], [0, 0, 0, 1, 1, 1], [0], [0]>} : vector<2x8x16xf32>, vector<2x8x16xf32>, vector<2x8x8xf32> -> vector<2x8x8xf32>
    "tpu.trace_stop"() : () -> ()
    %cst_97 = arith.constant dense<0xFF800000> : vector<2x8xf32>
    %309 = vector.multi_reduction <maximumf>, %308, %cst_97 [2] : vector<2x8x8xf32> to vector<2x8xf32>
    %310 = vector.shape_cast %309 : vector<2x8xf32> to vector<2x8x1xf32>
    %311 = vector.broadcast %310 : vector<2x8x1xf32> to vector<2x8x8xf32>
    %312 = arith.subf %308, %311 : vector<2x8x8xf32>
    %313 = math.exp %312 : vector<2x8x8xf32>
    %cst_98 = arith.constant dense<0.000000e+00> : vector<2x8xf32>
    %314 = vector.multi_reduction <add>, %313, %cst_98 [2] : vector<2x8x8xf32> to vector<2x8xf32>
    %315 = vector.shape_cast %314 : vector<2x8xf32> to vector<2x8x1xf32>
    %316 = vector.broadcast %315 : vector<2x8x1xf32> to vector<2x8x8xf32>
    %317 = arith.divf %313, %316 : vector<2x8x8xf32>
    "tpu.trace_start"() <{level = 10 : i32, message = "bnm,bmd->bnd"}> : () -> ()
    %cst_99 = arith.constant dense<0.000000e+00> : vector<2x8x16xf32>
    %318 = tpu.matmul %317, %307, %cst_99 {dimension_numbers = #tpu.dot_dimension_numbers<[2], [1], [1], [2], [0, 0, 0, 1, 1, 2], [0], [0]>} : vector<2x8x8xf32>, vector<2x8x16xf32>, vector<2x8x16xf32> -> vector<2x8x16xf32>
    "tpu.trace_stop"() : () -> ()
    %319 = vector.shape_cast %318 : vector<2x8x16xf32> to vector<16x16xf32>
    %320 = tpu.concatenate %265, %283, %301, %319 in 1 : vector<16x16xf32>, vector<16x16xf32>, vector<16x16xf32>, vector<16x16xf32> -> vector<16x64xf32>
    %cst_100 = arith.constant dense<0.000000e+00> : vector<16x32xf32>
    %321 = tpu.matmul %320, %208, %cst_100 {dimension_numbers = #tpu.dot_dimension_numbers<[1], [0], [0], [1], [0, 0, 1, 1], [], []>} : vector<16x64xf32>, vector<64x32xf32>, vector<16x32xf32> -> vector<16x32xf32>
    %322 = arith.addf %204, %321 : vector<16x32xf32>
    %323 = vector.broadcast %217 : vector<1x32xf32> to vector<16x32xf32>
    %324 = arith.addf %322, %323 : vector<16x32xf32>
    %cst_101 = arith.constant dense<0.000000e+00> : vector<16xf32>
    %325 = vector.multi_reduction <add>, %324, %cst_101 [1] : vector<16x32xf32> to vector<16xf32>
    %326 = vector.shape_cast %325 : vector<16xf32> to vector<16x1xf32>
    %cst_102 = arith.constant 3.200000e+01 : f32
    %327 = vector.broadcast %cst_102 : f32 to vector<16x1xf32>
    %328 = arith.divf %326, %327 : vector<16x1xf32>
    %329 = vector.broadcast %328 : vector<16x1xf32> to vector<16x32xf32>
    %330 = arith.subf %324, %329 : vector<16x32xf32>
    %331 = vector.broadcast %328 : vector<16x1xf32> to vector<16x32xf32>
    %332 = arith.subf %324, %331 : vector<16x32xf32>
    %333 = arith.mulf %330, %332 : vector<16x32xf32>
    %cst_103 = arith.constant dense<0.000000e+00> : vector<16xf32>
    %334 = vector.multi_reduction <add>, %333, %cst_103 [1] : vector<16x32xf32> to vector<16xf32>
    %335 = vector.shape_cast %334 : vector<16xf32> to vector<16x1xf32>
    %cst_104 = arith.constant 3.200000e+01 : f32
    %336 = vector.broadcast %cst_104 : f32 to vector<16x1xf32>
    %337 = arith.divf %335, %336 : vector<16x1xf32>
    %338 = vector.broadcast %328 : vector<16x1xf32> to vector<16x32xf32>
    %339 = arith.subf %324, %338 : vector<16x32xf32>
    %cst_105 = arith.constant 9.99999974E-6 : f32
    %340 = vector.broadcast %cst_105 : f32 to vector<16x1xf32>
    %341 = arith.addf %337, %340 : vector<16x1xf32>
    %342 = math.rsqrt %341 : vector<16x1xf32>
    %343 = vector.broadcast %342 : vector<16x1xf32> to vector<16x32xf32>
    %344 = arith.mulf %339, %343 : vector<16x32xf32>
    %345 = vector.broadcast %218 : vector<1x32xf32> to vector<16x32xf32>
    %346 = arith.mulf %344, %345 : vector<16x32xf32>
    %347 = vector.broadcast %219 : vector<1x32xf32> to vector<16x32xf32>
    %348 = arith.addf %346, %347 : vector<16x32xf32>
    %cst_106 = arith.constant dense<0.000000e+00> : vector<16x256xf32>
    %349 = tpu.matmul %348, %210, %cst_106 {dimension_numbers = #tpu.dot_dimension_numbers<[1], [0], [0], [1], [0, 0, 1, 1], [], []>} : vector<16x32xf32>, vector<32x256xf32>, vector<16x256xf32> -> vector<16x256xf32>
    %350 = vector.extract_strided_slice %349 {offsets = [0, 0], sizes = [16, 128], strides = [1, 1]} : vector<16x256xf32> to vector<16x128xf32>
    %351 = vector.broadcast %221 : vector<1x128xf32> to vector<16x128xf32>
    %352 = arith.addf %350, %351 : vector<16x128xf32>
    %353 = vector.extract_strided_slice %349 {offsets = [0, 128], sizes = [16, 128], strides = [1, 1]} : vector<16x256xf32> to vector<16x128xf32>
    %354 = vector.broadcast %222 : vector<1x128xf32> to vector<16x128xf32>
    %355 = arith.addf %353, %354 : vector<16x128xf32>
    %cst_107 = arith.constant 5.000000e-01 : f32
    %356 = vector.broadcast %cst_107 : f32 to vector<16x128xf32>
    %357 = arith.mulf %356, %355 : vector<16x128xf32>
    %cst_108 = arith.constant 0.707106769 : f32
    %358 = vector.broadcast %cst_108 : f32 to vector<16x128xf32>
    %359 = arith.mulf %355, %358 : vector<16x128xf32>
    %cst_109 = arith.constant 0.000000e+00 : f32
    %360 = vector.broadcast %cst_109 : f32 to vector<16x128xf32>
    %361 = arith.cmpf oge, %359, %360 : vector<16x128xf32>
    %cst_110 = arith.constant 1.000000e+00 : f32
    %cst_111 = arith.constant -1.000000e+00 : f32
    %362 = vector.broadcast %cst_110 : f32 to vector<16x128xf32>
    %363 = vector.broadcast %cst_111 : f32 to vector<16x128xf32>
    %364 = arith.select %361, %362, %363 : vector<16x128xi1>, vector<16x128xf32>
    %365 = math.absf %359 : vector<16x128xf32>
    %cst_112 = arith.constant 0.327591091 : f32
    %366 = vector.broadcast %cst_112 : f32 to vector<16x128xf32>
    %367 = arith.mulf %366, %365 : vector<16x128xf32>
    %cst_113 = arith.constant 1.000000e+00 : f32
    %368 = vector.broadcast %cst_113 : f32 to vector<16x128xf32>
    %369 = arith.addf %368, %367 : vector<16x128xf32>
    %cst_114 = arith.constant 1.000000e+00 : f32
    %370 = vector.broadcast %cst_114 : f32 to vector<16x128xf32>
    %371 = arith.divf %370, %369 : vector<16x128xf32>
    %cst_115 = arith.constant 1.06140542 : f32
    %372 = vector.broadcast %cst_115 : f32 to vector<16x128xf32>
    %373 = arith.mulf %372, %371 : vector<16x128xf32>
    %cst_116 = arith.constant -1.45315206 : f32
    %374 = vector.broadcast %cst_116 : f32 to vector<16x128xf32>
    %375 = arith.addf %373, %374 : vector<16x128xf32>
    %376 = arith.mulf %375, %371 : vector<16x128xf32>
    %cst_117 = arith.constant 1.42141378 : f32
    %377 = vector.broadcast %cst_117 : f32 to vector<16x128xf32>
    %378 = arith.addf %376, %377 : vector<16x128xf32>
    %379 = arith.mulf %378, %371 : vector<16x128xf32>
    %cst_118 = arith.constant -0.284496725 : f32
    %380 = vector.broadcast %cst_118 : f32 to vector<16x128xf32>
    %381 = arith.addf %379, %380 : vector<16x128xf32>
    %382 = arith.mulf %381, %371 : vector<16x128xf32>
    %cst_119 = arith.constant 0.254829586 : f32
    %383 = vector.broadcast %cst_119 : f32 to vector<16x128xf32>
    %384 = arith.addf %382, %383 : vector<16x128xf32>
    %385 = arith.mulf %384, %371 : vector<16x128xf32>
    %cst_120 = arith.constant 0.000000e+00 : f32
    %386 = vector.broadcast %cst_120 : f32 to vector<16x128xf32>
    %387 = arith.subf %386, %365 : vector<16x128xf32>
    %388 = arith.mulf %387, %365 : vector<16x128xf32>
    %389 = math.exp %388 : vector<16x128xf32>
    %390 = arith.mulf %385, %389 : vector<16x128xf32>
    %cst_121 = arith.constant 1.000000e+00 : f32
    %391 = vector.broadcast %cst_121 : f32 to vector<16x128xf32>
    %392 = arith.subf %391, %390 : vector<16x128xf32>
    %393 = arith.mulf %364, %392 : vector<16x128xf32>
    %cst_122 = arith.constant 1.000000e+00 : f32
    %394 = vector.broadcast %cst_122 : f32 to vector<16x128xf32>
    %395 = arith.addf %394, %393 : vector<16x128xf32>
    %396 = arith.mulf %357, %395 : vector<16x128xf32>
    %397 = arith.mulf %352, %396 : vector<16x128xf32>
    %cst_123 = arith.constant dense<0.000000e+00> : vector<16x32xf32>
    %398 = tpu.matmul %397, %212, %cst_123 {dimension_numbers = #tpu.dot_dimension_numbers<[1], [0], [0], [1], [0, 0, 1, 1], [], []>} : vector<16x128xf32>, vector<128x32xf32>, vector<16x32xf32> -> vector<16x32xf32>
    %399 = vector.broadcast %220 : vector<1x32xf32> to vector<16x32xf32>
    %400 = arith.addf %398, %399 : vector<16x32xf32>
    %401 = arith.addf %400, %324 : vector<16x32xf32>
    %c0_124 = arith.constant 0 : index
    %c0_125 = arith.constant 0 : index
    %402 = vector.load %arg7[%c0_124, %c0_125] : memref<16x32xf32, #tpu.memory_space<vmem>>, vector<16x32xf32>
    tpu.vector_store %arg7[%c0_124, %c0_125], %401 {strides = array<i32>} : memref<16x32xf32, #tpu.memory_space<vmem>>, vector<16x32xf32>,
    return
  }
}

</mosaic_0001>

<llo_original>
// kernel: tpu_custom_call.1
$region0: #{tpu_custom_call.1}
  #allocation0 [shape = 'u32[]', space=smem, size = 0x4, offset = 0x4, fixed_abs, tag = 'smem constant byte address 0x4 - core index']
  #allocation1 [shape = 'u32[144,128]{1,0:T(1,128)}', space=vmem, size = 0x12000, scoped, tag = 'internal scratch']
  %s0 = inlined_call_operand.vmem [shape: s32[16,1], index: 0, kind: input, shape index: {}]
  %s1 = inlined_call_operand.vmem [shape: f32[16,32], index: 1, kind: input, shape index: {}]
  %s2 = inlined_call_operand.vmem [shape: f32[2,32,256], index: 2, kind: input, shape index: {}]
  %s3 = inlined_call_operand.vmem [shape: f32[2,64,32], index: 3, kind: input, shape index: {}]
  %s4 = inlined_call_operand.vmem [shape: f32[2,32,256], index: 4, kind: input, shape index: {}]
  %s5 = inlined_call_operand.vmem [shape: f32[2,128,32], index: 5, kind: input, shape index: {}]
  %s6 = inlined_call_operand.vmem [shape: f32[2,8,128], index: 6, kind: input, shape index: {}]
  %s7 = inlined_call_operand.hbm [shape: f32[16,32], index: 7, kind: output, shape index: {}]
  %s8 = sld [smem:[#allocation0]]
  $region38: #{tpu_custom_call.1} parent=0
    _
  %s10 = ssub.s32 1, %s8
  %s11 = scalar_select 0, %s10, %s8
  $region1: #{tpu_custom_call.1} parent=0
    #allocation2 [shape = 'u8[8192]{0}', space=vmem, size = 0x2000, scoped, tag = 'output window, operand 0, single buffered']
    #allocation3 [shape = 's32[1]{0}', space=sflag, size = 0x4, scoped, tag = 'scoped memory for tpu_custom_call.1']
    %12 = vsyncpa [#allocation3], 0
    // Predicated region
    $region2: #{tpu_custom_call.1} parent=1 // pred_check
      _
    $region3: #{tpu_custom_call.1} parent=1 // pred_check_branch
      %14 = sbr.rel (0) target = $region5
    $region4: #{tpu_custom_call.1} parent=1 // pred_region
      _
    $region5: #{tpu_custom_call.1} parent=1 // pred_fallthru
      _
    // Predicated region
    $region6: #{tpu_custom_call.1} parent=1 // pred_check
      _
    $region7: #{tpu_custom_call.1} parent=1 // pred_check_branch
      %16 = sbr.rel (0) target = $region9
    $region8: #{tpu_custom_call.1} parent=1 // pred_region
      _
    $region9: #{tpu_custom_call.1} parent=1 // pred_fallthru
      _
    // Predicated region
    $region10: #{tpu_custom_call.1} parent=1 // pred_check
      _
    $region11: #{tpu_custom_call.1} parent=1 // pred_check_branch
      %18 = sbr.rel (0) target = $region13
    $region12: #{tpu_custom_call.1} parent=1 // pred_region
      _
    $region13: #{tpu_custom_call.1} parent=1 // pred_fallthru
      _
    // Predicated region
    $region14: #{tpu_custom_call.1} parent=1 // pred_check
      _
    $region15: #{tpu_custom_call.1} parent=1 // pred_check_branch
      %20 = sbr.rel (0) target = $region17
    $region16: #{tpu_custom_call.1} parent=1 // pred_region
      _
    $region17: #{tpu_custom_call.1} parent=1 // pred_fallthru
      _
    // Predicated region
    $region18: #{tpu_custom_call.1} parent=1 // pred_check
      _
    $region19: #{tpu_custom_call.1} parent=1 // pred_check_branch
      %22 = sbr.rel (0) target = $region21
    $region20: #{tpu_custom_call.1} parent=1 // pred_region
      _
    $region21: #{tpu_custom_call.1} parent=1 // pred_fallthru
      _
    // Predicated region
    $region22: #{tpu_custom_call.1} parent=1 // pred_check
      _
    $region23: #{tpu_custom_call.1} parent=1 // pred_check_branch
      %24 = sbr.rel (0) target = $region25
    $region24: #{tpu_custom_call.1} parent=1 // pred_region
      _
    $region25: #{tpu_custom_call.1} parent=1 // pred_fallthru
      _
    // Predicated region
    $region26: #{tpu_custom_call.1} parent=1 // pred_check
      _
    $region27: #{tpu_custom_call.1} parent=1 // pred_check_branch
      %26 = sbr.rel (0) target = $region29
    $region28: #{tpu_custom_call.1} parent=1 // pred_region
      _
    $region29: #{tpu_custom_call.1} parent=1 // pred_fallthru
      _
    %v27 = vld [vmem:[%s0] sm:$0xff]
    %v28 = vld [vmem:[%s0 + $0x8] sm:$0xff]
    %v29 = vlaneseq
    %v30 = vand.u32 %v29, 127
    %31 = vset.pattern.permute.xlu0 0
    %32 = vperm.xlu0 %31, %v27
    %v33 = vpop.permute.xlu0 %32
    %34 = vset.pattern.permute.xlu0 0
    %35 = vperm.xlu0 %34, %v28
    %v36 = vpop.permute.xlu0 %35
    %vm37 = vcmp.eq.s32.totalorder %v33, %v30
    %vm38 = vcmp.eq.s32.totalorder %v36, %v30
    %v39 = vsel %vm37, 1, 0
    %v40 = vsel %vm38, 1, 0
    %v41 = vcvt.s32.f32 %v39
    %v42 = vcvt.s32.f32 %v40
    %v43 = vld [vmem:[%s1] sm:$0xff]
    %v44 = vld [vmem:[%s1 + $0x8] sm:$0xff]
    %vm45 = vcmask 130048
    %v47 = vsel %vm45, %v41, 0
    %v50 = vsel %vm45, %v42, 0
    %52 = vmatprep.subr.mxu0 0.0
    %53 = vmatpush1.msra.mxu0 0.0
    %54 = vmatprep.subr.mxu0 0.0
    %55 = vmatpush1.msra.mxu0 0.0
    %56 = vmatprep.subr.mxu0 0.0
    %57 = vmatpush1.msra.mxu0 0.0
    %58 = vmatprep.subr.mxu0 0.0
    %59 = vmatpush1.msra.mxu0 0.0
    %60 = vmatprep.subr.mxu0 0.0
    %61 = vmatpush1.msra.mxu0 0.0
    %62 = vmatprep.subr.mxu0 0.0
    %63 = vmatpush1.msra.mxu0 0.0
    %64 = vmatprep.subr.mxu0 0.0
    %65 = vmatpush1.msra.mxu0 0.0
    %66 = vmatprep.subr.mxu0 0.0
    %67 = vmatpush1.msra.mxu0 0.0
    %68 = vmatprep.subr.mxu0 0.0
    %69 = vmatpush1.msra.mxu0 0.0
    %70 = vmatprep.subr.mxu0 0.0
    %71 = vmatpush1.msra.mxu0 0.0
    %72 = vmatprep.subr.mxu0 0.0
    %73 = vmatpush1.msra.mxu0 0.0
    %74 = vmatprep.subr.mxu0 0.0
    %75 = vmatpush1.msra.mxu0 0.0
    %76 = vmatprep.subr.mxu0 0.0
    %77 = vmatpush1.msra.mxu0 0.0
    %78 = vmatprep.subr.mxu0 0.0
    %79 = vmatpush1.msra.mxu0 0.0
    %80 = vmatprep.subr.mxu0 0.0
    %81 = vmatpush1.msra.mxu0 %v44
    %82 = vmatprep.subr.mxu0 0.0
    %83 = vmatpush1.msra.mxu0 %v43
    %84 = vmatprep.subr.mxu0 0.0
    %85 = vmatpush2.msra.mxu0 0.0
    %86 = vmatprep.subr.mxu0 0.0
    %87 = vmatpush2.msra.mxu0 0.0
    %88 = vmatprep.subr.mxu0 0.0
    %89 = vmatpush2.msra.mxu0 0.0
    %90 = vmatprep.subr.mxu0 0.0
    %91 = vmatpush2.msra.mxu0 0.0
    %92 = vmatprep.subr.mxu0 0.0
    %93 = vmatpush2.msra.mxu0 0.0
    %94 = vmatprep.subr.mxu0 0.0
    %95 = vmatpush2.msra.mxu0 0.0
    %96 = vmatprep.subr.mxu0 0.0
    %97 = vmatpush2.msra.mxu0 0.0
    %98 = vmatprep.subr.mxu0 0.0
    %99 = vmatpush2.msra.mxu0 0.0
    %100 = vmatprep.subr.mxu0 0.0
    %101 = vmatpush2.msra.mxu0 0.0
    %102 = vmatprep.subr.mxu0 0.0
    %103 = vmatpush2.msra.mxu0 0.0
    %104 = vmatprep.subr.mxu0 0.0
    %105 = vmatpush2.msra.mxu0 0.0
    %106 = vmatprep.subr.mxu0 0.0
    %107 = vmatpush2.msra.mxu0 0.0
    %108 = vmatprep.subr.mxu0 0.0
    %109 = vmatpush2.msra.mxu0 0.0
    %110 = vmatprep.subr.mxu0 0.0
    %111 = vmatpush2.msra.mxu0 0.0
    %112 = vmatprep.subr.mxu0 0.0
    %113 = vmatpush2.msra.mxu0 0.0
    %114 = vmatprep.subr.mxu0 0.0
    %115 = vmatpush2.msra.mxu0 0.0
    %116 = vmatprep.mubr.f32.mxu0 0.0
    %117 = vmatmul.mubr.f32.gmra.mxu0 %v47
    %v118 = vpop.f32.mrf.mxu0
    %v119 = vadd.f32 0.0, %v118
    %v120 = vpop.f32.mrf.mxu0
    %121 = vmatprep.mubr.f32.mxu0 0.0
    %122 = vmatmul.mubr.f32.gmra.mxu0 %v50
    %v123 = vpop.f32.mrf.mxu0
    %v124 = vadd.f32 0.0, %v123
    %v125 = vpop.f32.mrf.mxu0
    %126 = vdwg.mxu0
    %v127 = vld [vmem:[%s2] sm:$0xff]
    %v128 = vld [vmem:[%s2 + $0x8] sm:$0xff]
    %v129 = vld [vmem:[%s2 + $0x10] sm:$0xff]
    %v130 = vld [vmem:[%s2 + $0x18] sm:$0xff]
    %v131 = vld [vmem:[%s2 + $0x20] sm:$0xff]
    %v132 = vld [vmem:[%s2 + $0x28] sm:$0xff]
    %v133 = vld [vmem:[%s2 + $0x30] sm:$0xff]
    %v134 = vld [vmem:[%s2 + $0x38] sm:$0xff]
    %v135 = vld [vmem:[%s3] sm:$0xff]
    %v136 = vld [vmem:[%s3 + $0x8] sm:$0xff]
    %v137 = vld [vmem:[%s3 + $0x10] sm:$0xff]
    %v138 = vld [vmem:[%s3 + $0x18] sm:$0xff]
    %v139 = vld [vmem:[%s3 + $0x20] sm:$0xff]
    %v140 = vld [vmem:[%s3 + $0x28] sm:$0xff]
    %v141 = vld [vmem:[%s3 + $0x30] sm:$0xff]
    %v142 = vld [vmem:[%s3 + $0x38] sm:$0xff]
    %v143 = vld [vmem:[%s4] sm:$0xff]
    %v144 = vld [vmem:[%s4 + $0x8] sm:$0xff]
    %v145 = vld [vmem:[%s4 + $0x10] sm:$0xff]
    %v146 = vld [vmem:[%s4 + $0x18] sm:$0xff]
    %v147 = vld [vmem:[%s4 + $0x20] sm:$0xff]
    %v148 = vld [vmem:[%s4 + $0x28] sm:$0xff]
    %v149 = vld [vmem:[%s4 + $0x30] sm:$0xff]
    %v150 = vld [vmem:[%s4 + $0x38] sm:$0xff]
    %v151 = vld [vmem:[%s5] sm:$0xff]
    %v152 = vld [vmem:[%s5 + $0x8] sm:$0xff]
    %v153 = vld [vmem:[%s5 + $0x10] sm:$0xff]
    %v154 = vld [vmem:[%s5 + $0x18] sm:$0xff]
    %v155 = vld [vmem:[%s5 + $0x20] sm:$0xff]
    %v156 = vld [vmem:[%s5 + $0x28] sm:$0xff]
    %v157 = vld [vmem:[%s5 + $0x30] sm:$0xff]
    %v158 = vld [vmem:[%s5 + $0x38] sm:$0xff]
    %v159 = vld [vmem:[%s5 + $0x40] sm:$0xff]
    %v160 = vld [vmem:[%s5 + $0x48] sm:$0xff]
    %v161 = vld [vmem:[%s5 + $0x50] sm:$0xff]
    %v162 = vld [vmem:[%s5 + $0x58] sm:$0xff]
    %v163 = vld [vmem:[%s5 + $0x60] sm:$0xff]
    %v164 = vld [vmem:[%s5 + $0x68] sm:$0xff]
    %v165 = vld [vmem:[%s5 + $0x70] sm:$0xff]
    %v166 = vld [vmem:[%s5 + $0x78] sm:$0xff]
    %v167 = vld [vmem:[%s6] sm:$0xff]
    %vm168 = vcmask 261120
    %v169 = vsel %vm168, %v119, 0.0
    %170 = vadd.xlane.f32.xlu0 %v169
    %v171 = vpop.xlane.xlu0 %170
    %v172 = vsel %vm168, %v124, 0.0
    %173 = vadd.xlane.f32.xlu0 %v172
    %v174 = vpop.xlane.xlu0 %173
    %v175 = vrcp.pop 32.0
    %v176 = vmul.f32 %v171, %v175
    %v177 = vmul.f32 %v174, %v175
    %v178 = vsub.f32 %v119, %v176
    %v179 = vsub.f32 %v124, %v177
    %v180 = vmul.f32 %v178, %v178
    %v181 = vmul.f32 %v179, %v179
    %v182 = vsel %vm168, %v180, 0.0
    %183 = vadd.xlane.f32.xlu0 %v182
    %v184 = vpop.xlane.xlu0 %183
    %v185 = vsel %vm168, %v181, 0.0
    %186 = vadd.xlane.f32.xlu0 %v185
    %v187 = vpop.xlane.xlu0 %186
    %v188 = vmul.f32 %v184, %v175
    %v189 = vmul.f32 %v187, %v175
    %v190 = vadd.f32 %v188, 1e-05
    %v191 = vadd.f32 %v189, 1e-05
    %v192 = vrsqrt.pop %v190
    %v193 = vrsqrt.pop %v191
    %v194 = vmul.f32 %v178, %v192
    %v195 = vmul.f32 %v179, %v193
    %v196 = vlaneseq
    %v197 = vshrl.u32 %v196, 7
    %v198 = vsub.s32 0, %v197
    %v199 = vrot.slane %v167, %v198
    %v200 = vmul.f32 %v194, %v199
    %v201 = vmul.f32 %v195, %v199
    %v202 = vlaneseq
    %v203 = vshrl.u32 %v202, 7
    %v204 = vsub.s32 1, %v203
    %v205 = vrot.slane %v167, %v204
    %v206 = vadd.f32 %v200, %v205
    %v207 = vadd.f32 %v201, %v205
    %v209 = vsel %vm168, %v206, 0
    %v212 = vsel %vm168, %v207, 0
    %214 = vmatprep.subr.mxu0 0.0
    %215 = vmatpush1.msra.mxu0 0.0
    %216 = vmatprep.subr.mxu0 0.0
    %217 = vmatpush1.msra.mxu0 0.0
    %218 = vmatprep.subr.mxu0 0.0
    %219 = vmatpush1.msra.mxu0 0.0
    %220 = vmatprep.subr.mxu0 0.0
    %221 = vmatpush1.msra.mxu0 0.0
    %222 = vmatprep.subr.mxu0 0.0
    %223 = vmatpush1.msra.mxu0 0.0
    %224 = vmatprep.subr.mxu0 0.0
    %225 = vmatpush1.msra.mxu0 0.0
    %226 = vmatprep.subr.mxu0 0.0
    %227 = vmatpush1.msra.mxu0 0.0
    %228 = vmatprep.subr.mxu0 0.0
    %229 = vmatpush1.msra.mxu0 0.0
    %230 = vmatprep.subr.mxu0 0.0
    %231 = vmatpush1.msra.mxu0 0.0
    %232 = vmatprep.subr.mxu0 0.0
    %233 = vmatpush1.msra.mxu0 0.0
    %234 = vmatprep.subr.mxu0 0.0
    %235 = vmatpush1.msra.mxu0 0.0
    %236 = vmatprep.subr.mxu0 0.0
    %237 = vmatpush1.msra.mxu0 0.0
    %238 = vmatprep.subr.mxu0 %v134
    %239 = vmatpush1.msra.mxu0 %v133
    %240 = vmatprep.subr.mxu0 %v132
    %241 = vmatpush1.msra.mxu0 %v131
    %242 = vmatprep.subr.mxu0 %v130
    %243 = vmatpush1.msra.mxu0 %v129
    %244 = vmatprep.subr.mxu0 %v128
    %245 = vmatpush1.msra.mxu0 %v127
    %246 = vmatprep.subr.mxu0 0.0
    %247 = vmatpush2.msra.mxu0 0.0
    %248 = vmatprep.subr.mxu0 0.0
    %249 = vmatpush2.msra.mxu0 0.0
    %250 = vmatprep.subr.mxu0 0.0
    %251 = vmatpush2.msra.mxu0 0.0
    %252 = vmatprep.subr.mxu0 0.0
    %253 = vmatpush2.msra.mxu0 0.0
    %254 = vmatprep.subr.mxu0 0.0
    %255 = vmatpush2.msra.mxu0 0.0
    %256 = vmatprep.subr.mxu0 0.0
    %257 = vmatpush2.msra.mxu0 0.0
    %258 = vmatprep.subr.mxu0 0.0
    %259 = vmatpush2.msra.mxu0 0.0
    %260 = vmatprep.subr.mxu0 0.0
    %261 = vmatpush2.msra.mxu0 0.0
    %262 = vmatprep.subr.mxu0 0.0
    %263 = vmatpush2.msra.mxu0 0.0
    %264 = vmatprep.subr.mxu0 0.0
    %265 = vmatpush2.msra.mxu0 0.0
    %266 = vmatprep.subr.mxu0 0.0
    %267 = vmatpush2.msra.mxu0 0.0
    %268 = vmatprep.subr.mxu0 0.0
    %269 = vmatpush2.msra.mxu0 0.0
    %270 = vmatprep.subr.mxu0 0.0
    %271 = vmatpush2.msra.mxu0 0.0
    %272 = vmatprep.subr.mxu0 0.0
    %273 = vmatpush2.msra.mxu0 0.0
    %274 = vmatprep.subr.mxu0 0.0
    %275 = vmatpush2.msra.mxu0 0.0
    %276 = vmatprep.subr.mxu0 0.0
    %277 = vmatpush2.msra.mxu0 0.0
    %278 = vmatprep.mubr.f32.mxu0 0.0
    %279 = vmatmul.mubr.f32.gmra.mxu0 %v209
    %v280 = vpop.f32.mrf.mxu0
    %v281 = vadd.f32 0.0, %v280
    %v282 = vpop.f32.mrf.mxu0
    %v283 = vadd.f32 0.0, %v282
    %284 = vmatprep.mubr.f32.mxu0 0.0
    %285 = vmatmul.mubr.f32.gmra.mxu0 %v212
    %v286 = vpop.f32.mrf.mxu0
    %v287 = vadd.f32 0.0, %v286
    %v288 = vpop.f32.mrf.mxu0
    %v289 = vadd.f32 0.0, %v288
    %290 = vdwg.mxu0
    %292 = vrot.lane.b32.xlu0 %v281, 64
    %v293 = vpop.permute.xlu0 %292
    %v294 = vsel %vm45, %v281, 0
    %v296 = vsel %vm45, %v293, 0
    %298 = vmatprep.subr.mxu0 0.0
    %299 = vmatpush1.xpose.msra.mxu0 0.0
    %300 = vmatprep.subr.mxu0 0.0
    %301 = vmatpush1.xpose.msra.mxu0 0.0
    %302 = vmatprep.subr.mxu0 0.0
    %303 = vmatpush1.xpose.msra.mxu0 0.0
    %304 = vmatprep.subr.mxu0 0.0
    %305 = vmatpush1.xpose.msra.mxu0 0.0
    %306 = vmatprep.subr.mxu0 0.0
    %307 = vmatpush1.xpose.msra.mxu0 0.0
    %308 = vmatprep.subr.mxu0 0.0
    %309 = vmatpush1.xpose.msra.mxu0 0.0
    %310 = vmatprep.subr.mxu0 0.0
    %311 = vmatpush1.xpose.msra.mxu0 0.0
    %312 = vmatprep.subr.mxu0 0.0
    %313 = vmatpush1.xpose.msra.mxu0 0.0
    %314 = vmatprep.subr.mxu0 0.0
    %315 = vmatpush1.xpose.msra.mxu0 0.0
    %316 = vmatprep.subr.mxu0 0.0
    %317 = vmatpush1.xpose.msra.mxu0 0.0
    %318 = vmatprep.subr.mxu0 0.0
    %319 = vmatpush1.xpose.msra.mxu0 0.0
    %320 = vmatprep.subr.mxu0 0.0
    %321 = vmatpush1.xpose.msra.mxu0 0.0
    %322 = vmatprep.subr.mxu0 0.0
    %323 = vmatpush1.xpose.msra.mxu0 0.0
    %324 = vmatprep.subr.mxu0 0.0
    %325 = vmatpush1.xpose.msra.mxu0 0.0
    %326 = vmatprep.subr.mxu0 0.0
    %327 = vmatpush1.xpose.msra.mxu0 0.0
    %328 = vmatprep.subr.mxu0 0.0
    %329 = vmatpush1.xpose.msra.mxu0 %v296
    %330 = vmatprep.subr.mxu0 0.0
    %331 = vmatpush2.xpose.msra.mxu0 0.0
    %332 = vmatprep.subr.mxu0 0.0
    %333 = vmatpush2.xpose.msra.mxu0 0.0
    %334 = vmatprep.subr.mxu0 0.0
    %335 = vmatpush2.xpose.msra.mxu0 0.0
    %336 = vmatprep.subr.mxu0 0.0
    %337 = vmatpush2.xpose.msra.mxu0 0.0
    %338 = vmatprep.subr.mxu0 0.0
    %339 = vmatpush2.xpose.msra.mxu0 0.0
    %340 = vmatprep.subr.mxu0 0.0
    %341 = vmatpush2.xpose.msra.mxu0 0.0
    %342 = vmatprep.subr.mxu0 0.0
    %343 = vmatpush2.xpose.msra.mxu0 0.0
    %344 = vmatprep.subr.mxu0 0.0
    %345 = vmatpush2.xpose.msra.mxu0 0.0
    %346 = vmatprep.subr.mxu0 0.0
    %347 = vmatpush2.xpose.msra.mxu0 0.0
    %348 = vmatprep.subr.mxu0 0.0
    %349 = vmatpush2.xpose.msra.mxu0 0.0
    %350 = vmatprep.subr.mxu0 0.0
    %351 = vmatpush2.xpose.msra.mxu0 0.0
    %352 = vmatprep.subr.mxu0 0.0
    %353 = vmatpush2.xpose.msra.mxu0 0.0
    %354 = vmatprep.subr.mxu0 0.0
    %355 = vmatpush2.xpose.msra.mxu0 0.0
    %356 = vmatprep.subr.mxu0 0.0
    %357 = vmatpush2.xpose.msra.mxu0 0.0
    %358 = vmatprep.subr.mxu0 0.0
    %359 = vmatpush2.xpose.msra.mxu0 0.0
    %360 = vmatprep.subr.mxu0 0.0
    %361 = vmatpush2.xpose.msra.mxu0 0.0
    %362 = vmatprep.mubr.f32.mxu0 0.0
    %363 = vmatmul.mubr.f32.gmra.mxu0 %v294
    %v364 = vpop.f32.mrf.mxu0
    %v365 = vadd.f32 0.0, %v364
    %v366 = vpop.f32.mrf.mxu0
    %367 = vdwg.mxu0
    %369 = vrot.lane.b32.xlu0 %v287, 64
    %v370 = vpop.permute.xlu0 %369
    %v371 = vsel %vm45, %v287, 0
    %v373 = vsel %vm45, %v370, 0
    %375 = vmatprep.subr.mxu0 0.0
    %376 = vmatpush1.xpose.msra.mxu0 0.0
    %377 = vmatprep.subr.mxu0 0.0
    %378 = vmatpush1.xpose.msra.mxu0 0.0
    %379 = vmatprep.subr.mxu0 0.0
    %380 = vmatpush1.xpose.msra.mxu0 0.0
    %381 = vmatprep.subr.mxu0 0.0
    %382 = vmatpush1.xpose.msra.mxu0 0.0
    %383 = vmatprep.subr.mxu0 0.0
    %384 = vmatpush1.xpose.msra.mxu0 0.0
    %385 = vmatprep.subr.mxu0 0.0
    %386 = vmatpush1.xpose.msra.mxu0 0.0
    %387 = vmatprep.subr.mxu0 0.0
    %388 = vmatpush1.xpose.msra.mxu0 0.0
    %389 = vmatprep.subr.mxu0 0.0
    %390 = vmatpush1.xpose.msra.mxu0 0.0
    %391 = vmatprep.subr.mxu0 0.0
    %392 = vmatpush1.xpose.msra.mxu0 0.0
    %393 = vmatprep.subr.mxu0 0.0
    %394 = vmatpush1.xpose.msra.mxu0 0.0
    %395 = vmatprep.subr.mxu0 0.0
    %396 = vmatpush1.xpose.msra.mxu0 0.0
    %397 = vmatprep.subr.mxu0 0.0
    %398 = vmatpush1.xpose.msra.mxu0 0.0
    %399 = vmatprep.subr.mxu0 0.0
    %400 = vmatpush1.xpose.msra.mxu0 0.0
    %401 = vmatprep.subr.mxu0 0.0
    %402 = vmatpush1.xpose.msra.mxu0 0.0
    %403 = vmatprep.subr.mxu0 0.0
    %404 = vmatpush1.xpose.msra.mxu0 0.0
    %405 = vmatprep.subr.mxu0 0.0
    %406 = vmatpush1.xpose.msra.mxu0 %v373
    %407 = vmatprep.subr.mxu0 0.0
    %408 = vmatpush2.xpose.msra.mxu0 0.0
    %409 = vmatprep.subr.mxu0 0.0
    %410 = vmatpush2.xpose.msra.mxu0 0.0
    %411 = vmatprep.subr.mxu0 0.0
    %412 = vmatpush2.xpose.msra.mxu0 0.0
    %413 = vmatprep.subr.mxu0 0.0
    %414 = vmatpush2.xpose.msra.mxu0 0.0
    %415 = vmatprep.subr.mxu0 0.0
    %416 = vmatpush2.xpose.msra.mxu0 0.0
    %417 = vmatprep.subr.mxu0 0.0
    %418 = vmatpush2.xpose.msra.mxu0 0.0
    %419 = vmatprep.subr.mxu0 0.0
    %420 = vmatpush2.xpose.msra.mxu0 0.0
    %421 = vmatprep.subr.mxu0 0.0
    %422 = vmatpush2.xpose.msra.mxu0 0.0
    %423 = vmatprep.subr.mxu0 0.0
    %424 = vmatpush2.xpose.msra.mxu0 0.0
    %425 = vmatprep.subr.mxu0 0.0
    %426 = vmatpush2.xpose.msra.mxu0 0.0
    %427 = vmatprep.subr.mxu0 0.0
    %428 = vmatpush2.xpose.msra.mxu0 0.0
    %429 = vmatprep.subr.mxu0 0.0
    %430 = vmatpush2.xpose.msra.mxu0 0.0
    %431 = vmatprep.subr.mxu0 0.0
    %432 = vmatpush2.xpose.msra.mxu0 0.0
    %433 = vmatprep.subr.mxu0 0.0
    %434 = vmatpush2.xpose.msra.mxu0 0.0
    %435 = vmatprep.subr.mxu0 0.0
    %436 = vmatpush2.xpose.msra.mxu0 0.0
    %437 = vmatprep.subr.mxu0 0.0
    %438 = vmatpush2.xpose.msra.mxu0 0.0
    %439 = vmatprep.mubr.f32.mxu0 0.0
    %440 = vmatmul.mubr.f32.gmra.mxu0 %v371
    %v441 = vpop.f32.mrf.mxu0
    %v442 = vadd.f32 0.0, %v441
    %v443 = vpop.f32.mrf.mxu0
    %444 = vdwg.mxu0
    %vm445 = vcmask 64512
    %v446 = vsel %vm445, %v365, -inf
    %447 = vmax.xlane.f32.xlu0 %v446
    %v448 = vpop.xlane.xlu0 %447
    %v449 = vsel %vm445, %v442, -inf
    %450 = vmax.xlane.f32.xlu0 %v449
    %v451 = vpop.xlane.xlu0 %450
    %v452 = vsub.f32 %v365, %v448
    %v453 = vsub.f32 %v442, %v451
    %v454 = vmul.f32 %v452, 1.442695
    %v455 = vpow.pop %v454
    %v456 = vmul.f32 %v453, 1.442695
    %v457 = vpow.pop %v456
    %v458 = vsel %vm445, %v455, 0.0
    %459 = vadd.xlane.f32.xlu0 %v458
    %v460 = vpop.xlane.xlu0 %459
    %v461 = vsel %vm445, %v457, 0.0
    %462 = vadd.xlane.f32.xlu0 %v461
    %v463 = vpop.xlane.xlu0 %462
    %v464 = vrcp.pop %v460
    %v465 = vmul.f32 %v455, %v464
    %v466 = vrcp.pop %v463
    %v467 = vmul.f32 %v457, %v466
    %v469 = vsel %vm445, %v465, 0
    %471 = vmatprep.subr.mxu0 0.0
    %472 = vmatpush1.msra.mxu0 0.0
    %473 = vmatprep.subr.mxu0 0.0
    %474 = vmatpush1.msra.mxu0 0.0
    %475 = vmatprep.subr.mxu0 0.0
    %476 = vmatpush1.msra.mxu0 0.0
    %477 = vmatprep.subr.mxu0 0.0
    %478 = vmatpush1.msra.mxu0 0.0
    %479 = vmatprep.subr.mxu0 0.0
    %480 = vmatpush1.msra.mxu0 0.0
    %481 = vmatprep.subr.mxu0 0.0
    %482 = vmatpush1.msra.mxu0 0.0
    %483 = vmatprep.subr.mxu0 0.0
    %484 = vmatpush1.msra.mxu0 0.0
    %485 = vmatprep.subr.mxu0 0.0
    %486 = vmatpush1.msra.mxu0 0.0
    %487 = vmatprep.subr.mxu0 0.0
    %488 = vmatpush1.msra.mxu0 0.0
    %489 = vmatprep.subr.mxu0 0.0
    %490 = vmatpush1.msra.mxu0 0.0
    %491 = vmatprep.subr.mxu0 0.0
    %492 = vmatpush1.msra.mxu0 0.0
    %493 = vmatprep.subr.mxu0 0.0
    %494 = vmatpush1.msra.mxu0 0.0
    %495 = vmatprep.subr.mxu0 0.0
    %496 = vmatpush1.msra.mxu0 0.0
    %497 = vmatprep.subr.mxu0 0.0
    %498 = vmatpush1.msra.mxu0 0.0
    %499 = vmatprep.subr.mxu0 0.0
    %500 = vmatpush1.msra.mxu0 0.0
    %501 = vmatprep.subr.mxu0 0.0
    %502 = vmatpush1.msra.mxu0 %v283
    %503 = vmatprep.subr.mxu0 0.0
    %504 = vmatpush2.msra.mxu0 0.0
    %505 = vmatprep.subr.mxu0 0.0
    %506 = vmatpush2.msra.mxu0 0.0
    %507 = vmatprep.subr.mxu0 0.0
    %508 = vmatpush2.msra.mxu0 0.0
    %509 = vmatprep.subr.mxu0 0.0
    %510 = vmatpush2.msra.mxu0 0.0
    %511 = vmatprep.subr.mxu0 0.0
    %512 = vmatpush2.msra.mxu0 0.0
    %513 = vmatprep.subr.mxu0 0.0
    %514 = vmatpush2.msra.mxu0 0.0
    %515 = vmatprep.subr.mxu0 0.0
    %516 = vmatpush2.msra.mxu0 0.0
    %517 = vmatprep.subr.mxu0 0.0
    %518 = vmatpush2.msra.mxu0 0.0
    %519 = vmatprep.subr.mxu0 0.0
    %520 = vmatpush2.msra.mxu0 0.0
    %521 = vmatprep.subr.mxu0 0.0
    %522 = vmatpush2.msra.mxu0 0.0
    %523 = vmatprep.subr.mxu0 0.0
    %524 = vmatpush2.msra.mxu0 0.0
    %525 = vmatprep.subr.mxu0 0.0
    %526 = vmatpush2.msra.mxu0 0.0
    %527 = vmatprep.subr.mxu0 0.0
    %528 = vmatpush2.msra.mxu0 0.0
    %529 = vmatprep.subr.mxu0 0.0
    %530 = vmatpush2.msra.mxu0 0.0
    %531 = vmatprep.subr.mxu0 0.0
    %532 = vmatpush2.msra.mxu0 0.0
    %533 = vmatprep.subr.mxu0 0.0
    %534 = vmatpush2.msra.mxu0 0.0
    %535 = vmatprep.mubr.f32.mxu0 0.0
    %536 = vmatmul.mubr.f32.gmra.mxu0 %v469
    %v537 = vpop.f32.mrf.mxu0
    %v538 = vadd.f32 0.0, %v537
    %v539 = vpop.f32.mrf.mxu0
    %540 = vdwg.mxu0
    %v542 = vsel %vm445, %v467, 0
    %544 = vmatprep.subr.mxu0 0.0
    %545 = vmatpush1.msra.mxu0 0.0
    %546 = vmatprep.subr.mxu0 0.0
    %547 = vmatpush1.msra.mxu0 0.0
    %548 = vmatprep.subr.mxu0 0.0
    %549 = vmatpush1.msra.mxu0 0.0
    %550 = vmatprep.subr.mxu0 0.0
    %551 = vmatpush1.msra.mxu0 0.0
    %552 = vmatprep.subr.mxu0 0.0
    %553 = vmatpush1.msra.mxu0 0.0
    %554 = vmatprep.subr.mxu0 0.0
    %555 = vmatpush1.msra.mxu0 0.0
    %556 = vmatprep.subr.mxu0 0.0
    %557 = vmatpush1.msra.mxu0 0.0
    %558 = vmatprep.subr.mxu0 0.0
    %559 = vmatpush1.msra.mxu0 0.0
    %560 = vmatprep.subr.mxu0 0.0
    %561 = vmatpush1.msra.mxu0 0.0
    %562 = vmatprep.subr.mxu0 0.0
    %563 = vmatpush1.msra.mxu0 0.0
    %564 = vmatprep.subr.mxu0 0.0
    %565 = vmatpush1.msra.mxu0 0.0
    %566 = vmatprep.subr.mxu0 0.0
    %567 = vmatpush1.msra.mxu0 0.0
    %568 = vmatprep.subr.mxu0 0.0
    %569 = vmatpush1.msra.mxu0 0.0
    %570 = vmatprep.subr.mxu0 0.0
    %571 = vmatpush1.msra.mxu0 0.0
    %572 = vmatprep.subr.mxu0 0.0
    %573 = vmatpush1.msra.mxu0 0.0
    %574 = vmatprep.subr.mxu0 0.0
    %575 = vmatpush1.msra.mxu0 %v289
    %576 = vmatprep.subr.mxu0 0.0
    %577 = vmatpush2.msra.mxu0 0.0
    %578 = vmatprep.subr.mxu0 0.0
    %579 = vmatpush2.msra.mxu0 0.0
    %580 = vmatprep.subr.mxu0 0.0
    %581 = vmatpush2.msra.mxu0 0.0
    %582 = vmatprep.subr.mxu0 0.0
    %583 = vmatpush2.msra.mxu0 0.0
    %584 = vmatprep.subr.mxu0 0.0
    %585 = vmatpush2.msra.mxu0 0.0
    %586 = vmatprep.subr.mxu0 0.0
    %587 = vmatpush2.msra.mxu0 0.0
    %588 = vmatprep.subr.mxu0 0.0
    %589 = vmatpush2.msra.mxu0 0.0
    %590 = vmatprep.subr.mxu0 0.0
    %591 = vmatpush2.msra.mxu0 0.0
    %592 = vmatprep.subr.mxu0 0.0
    %593 = vmatpush2.msra.mxu0 0.0
    %594 = vmatprep.subr.mxu0 0.0
    %595 = vmatpush2.msra.mxu0 0.0
    %596 = vmatprep.subr.mxu0 0.0
    %597 = vmatpush2.msra.mxu0 0.0
    %598 = vmatprep.subr.mxu0 0.0
    %599 = vmatpush2.msra.mxu0 0.0
    %600 = vmatprep.subr.mxu0 0.0
    %601 = vmatpush2.msra.mxu0 0.0
    %602 = vmatprep.subr.mxu0 0.0
    %603 = vmatpush2.msra.mxu0 0.0
    %604 = vmatprep.subr.mxu0 0.0
    %605 = vmatpush2.msra.mxu0 0.0
    %606 = vmatprep.subr.mxu0 0.0
    %607 = vmatpush2.msra.mxu0 0.0
    %608 = vmatprep.mubr.f32.mxu0 0.0
    %609 = vmatmul.mubr.f32.gmra.mxu0 %v542
    %v610 = vpop.f32.mrf.mxu0
    %v611 = vadd.f32 0.0, %v610
    %v612 = vpop.f32.mrf.mxu0
    %613 = vdwg.mxu0
    %614 = vrot.lane.b32.xlu0 %v281, 112
    %v615 = vpop.permute.xlu0 %614
    %616 = vrot.lane.b32.xlu0 %v281, 48
    %v617 = vpop.permute.xlu0 %616
    %v618 = vsel %vm45, %v615, 0
    %v620 = vsel %vm45, %v617, 0
    %622 = vmatprep.subr.mxu0 0.0
    %623 = vmatpush1.xpose.msra.mxu0 0.0
    %624 = vmatprep.subr.mxu0 0.0
    %625 = vmatpush1.xpose.msra.mxu0 0.0
    %626 = vmatprep.subr.mxu0 0.0
    %627 = vmatpush1.xpose.msra.mxu0 0.0
    %628 = vmatprep.subr.mxu0 0.0
    %629 = vmatpush1.xpose.msra.mxu0 0.0
    %630 = vmatprep.subr.mxu0 0.0
    %631 = vmatpush1.xpose.msra.mxu0 0.0
    %632 = vmatprep.subr.mxu0 0.0
    %633 = vmatpush1.xpose.msra.mxu0 0.0
    %634 = vmatprep.subr.mxu0 0.0
    %635 = vmatpush1.xpose.msra.mxu0 0.0
    %636 = vmatprep.subr.mxu0 0.0
    %637 = vmatpush1.xpose.msra.mxu0 0.0
    %638 = vmatprep.subr.mxu0 0.0
    %639 = vmatpush1.xpose.msra.mxu0 0.0
    %640 = vmatprep.subr.mxu0 0.0
    %641 = vmatpush1.xpose.msra.mxu0 0.0
    %642 = vmatprep.subr.mxu0 0.0
    %643 = vmatpush1.xpose.msra.mxu0 0.0
    %644 = vmatprep.subr.mxu0 0.0
    %645 = vmatpush1.xpose.msra.mxu0 0.0
    %646 = vmatprep.subr.mxu0 0.0
    %647 = vmatpush1.xpose.msra.mxu0 0.0
    %648 = vmatprep.subr.mxu0 0.0
    %649 = vmatpush1.xpose.msra.mxu0 0.0
    %650 = vmatprep.subr.mxu0 0.0
    %651 = vmatpush1.xpose.msra.mxu0 0.0
    %652 = vmatprep.subr.mxu0 0.0
    %653 = vmatpush1.xpose.msra.mxu0 %v620
    %654 = vmatprep.subr.mxu0 0.0
    %655 = vmatpush2.xpose.msra.mxu0 0.0
    %656 = vmatprep.subr.mxu0 0.0
    %657 = vmatpush2.xpose.msra.mxu0 0.0
    %658 = vmatprep.subr.mxu0 0.0
    %659 = vmatpush2.xpose.msra.mxu0 0.0
    %660 = vmatprep.subr.mxu0 0.0
    %661 = vmatpush2.xpose.msra.mxu0 0.0
    %662 = vmatprep.subr.mxu0 0.0
    %663 = vmatpush2.xpose.msra.mxu0 0.0
    %664 = vmatprep.subr.mxu0 0.0
    %665 = vmatpush2.xpose.msra.mxu0 0.0
    %666 = vmatprep.subr.mxu0 0.0
    %667 = vmatpush2.xpose.msra.mxu0 0.0
    %668 = vmatprep.subr.mxu0 0.0
    %669 = vmatpush2.xpose.msra.mxu0 0.0
    %670 = vmatprep.subr.mxu0 0.0
    %671 = vmatpush2.xpose.msra.mxu0 0.0
    %672 = vmatprep.subr.mxu0 0.0
    %673 = vmatpush2.xpose.msra.mxu0 0.0
    %674 = vmatprep.subr.mxu0 0.0
    %675 = vmatpush2.xpose.msra.mxu0 0.0
    %676 = vmatprep.subr.mxu0 0.0
    %677 = vmatpush2.xpose.msra.mxu0 0.0
    %678 = vmatprep.subr.mxu0 0.0
    %679 = vmatpush2.xpose.msra.mxu0 0.0
    %680 = vmatprep.subr.mxu0 0.0
    %681 = vmatpush2.xpose.msra.mxu0 0.0
    %682 = vmatprep.subr.mxu0 0.0
    %683 = vmatpush2.xpose.msra.mxu0 0.0
    %684 = vmatprep.subr.mxu0 0.0
    %685 = vmatpush2.xpose.msra.mxu0 0.0
    %686 = vmatprep.mubr.f32.mxu0 0.0
    %687 = vmatmul.mubr.f32.gmra.mxu0 %v618
    %v688 = vpop.f32.mrf.mxu0
    %v689 = vadd.f32 0.0, %v688
    %v690 = vpop.f32.mrf.mxu0
    %691 = vdwg.mxu0
    %692 = vrot.lane.b32.xlu0 %v287, 112
    %v693 = vpop.permute.xlu0 %692
    %694 = vrot.lane.b32.xlu0 %v287, 48
    %v695 = vpop.permute.xlu0 %694
    %v696 = vsel %vm45, %v693, 0
    %v698 = vsel %vm45, %v695, 0
    %700 = vmatprep.subr.mxu0 0.0
    %701 = vmatpush1.xpose.msra.mxu0 0.0
    %702 = vmatprep.subr.mxu0 0.0
    %703 = vmatpush1.xpose.msra.mxu0 0.0
    %704 = vmatprep.subr.mxu0 0.0
    %705 = vmatpush1.xpose.msra.mxu0 0.0
    %706 = vmatprep.subr.mxu0 0.0
    %707 = vmatpush1.xpose.msra.mxu0 0.0
    %708 = vmatprep.subr.mxu0 0.0
    %709 = vmatpush1.xpose.msra.mxu0 0.0
    %710 = vmatprep.subr.mxu0 0.0
    %711 = vmatpush1.xpose.msra.mxu0 0.0
    %712 = vmatprep.subr.mxu0 0.0
    %713 = vmatpush1.xpose.msra.mxu0 0.0
    %714 = vmatprep.subr.mxu0 0.0
    %715 = vmatpush1.xpose.msra.mxu0 0.0
    %716 = vmatprep.subr.mxu0 0.0
    %717 = vmatpush1.xpose.msra.mxu0 0.0
    %718 = vmatprep.subr.mxu0 0.0
    %719 = vmatpush1.xpose.msra.mxu0 0.0
    %720 = vmatprep.subr.mxu0 0.0
    %721 = vmatpush1.xpose.msra.mxu0 0.0
    %722 = vmatprep.subr.mxu0 0.0
    %723 = vmatpush1.xpose.msra.mxu0 0.0
    %724 = vmatprep.subr.mxu0 0.0
    %725 = vmatpush1.xpose.msra.mxu0 0.0
    %726 = vmatprep.subr.mxu0 0.0
    %727 = vmatpush1.xpose.msra.mxu0 0.0
    %728 = vmatprep.subr.mxu0 0.0
    %729 = vmatpush1.xpose.msra.mxu0 0.0
    %730 = vmatprep.subr.mxu0 0.0
    %731 = vmatpush1.xpose.msra.mxu0 %v698
    %732 = vmatprep.subr.mxu0 0.0
    %733 = vmatpush2.xpose.msra.mxu0 0.0
    %734 = vmatprep.subr.mxu0 0.0
    %735 = vmatpush2.xpose.msra.mxu0 0.0
    %736 = vmatprep.subr.mxu0 0.0
    %737 = vmatpush2.xpose.msra.mxu0 0.0
    %738 = vmatprep.subr.mxu0 0.0
    %739 = vmatpush2.xpose.msra.mxu0 0.0
    %740 = vmatprep.subr.mxu0 0.0
    %741 = vmatpush2.xpose.msra.mxu0 0.0
    %742 = vmatprep.subr.mxu0 0.0
    %743 = vmatpush2.xpose.msra.mxu0 0.0
    %744 = vmatprep.subr.mxu0 0.0
    %745 = vmatpush2.xpose.msra.mxu0 0.0
    %746 = vmatprep.subr.mxu0 0.0
    %747 = vmatpush2.xpose.msra.mxu0 0.0
    %748 = vmatprep.subr.mxu0 0.0
    %749 = vmatpush2.xpose.msra.mxu0 0.0
    %750 = vmatprep.subr.mxu0 0.0
    %751 = vmatpush2.xpose.msra.mxu0 0.0
    %752 = vmatprep.subr.mxu0 0.0
    %753 = vmatpush2.xpose.msra.mxu0 0.0
    %754 = vmatprep.subr.mxu0 0.0
    %755 = vmatpush2.xpose.msra.mxu0 0.0
    %756 = vmatprep.subr.mxu0 0.0
    %757 = vmatpush2.xpose.msra.mxu0 0.0
    %758 = vmatprep.subr.mxu0 0.0
    %759 = vmatpush2.xpose.msra.mxu0 0.0
    %760 = vmatprep.subr.mxu0 0.0
    %761 = vmatpush2.xpose.msra.mxu0 0.0
    %762 = vmatprep.subr.mxu0 0.0
    %763 = vmatpush2.xpose.msra.mxu0 0.0
    %764 = vmatprep.mubr.f32.mxu0 0.0
    %765 = vmatmul.mubr.f32.gmra.mxu0 %v696
    %v766 = vpop.f32.mrf.mxu0
    %v767 = vadd.f32 0.0, %v766
    %v768 = vpop.f32.mrf.mxu0
    %769 = vdwg.mxu0
    %v770 = vsel %vm445, %v689, -inf
    %771 = vmax.xlane.f32.xlu0 %v770
    %v772 = vpop.xlane.xlu0 %771
    %v773 = vsel %vm445, %v767, -inf
    %774 = vmax.xlane.f32.xlu0 %v773
    %v775 = vpop.xlane.xlu0 %774
    %v776 = vsub.f32 %v689, %v772
    %v777 = vsub.f32 %v767, %v775
    %v778 = vmul.f32 %v776, 1.442695
    %v779 = vpow.pop %v778
    %v780 = vmul.f32 %v777, 1.442695
    %v781 = vpow.pop %v780
    %v782 = vsel %vm445, %v779, 0.0
    %783 = vadd.xlane.f32.xlu0 %v782
    %v784 = vpop.xlane.xlu0 %783
    %v785 = vsel %vm445, %v781, 0.0
    %786 = vadd.xlane.f32.xlu0 %v785
    %v787 = vpop.xlane.xlu0 %786
    %v788 = vrcp.pop %v784
    %v789 = vmul.f32 %v779, %v788
    %v790 = vrcp.pop %v787
    %v791 = vmul.f32 %v781, %v790
    %793 = vrot.lane.b32.xlu0 %v283, 112
    %v794 = vpop.permute.xlu0 %793
    %v797 = vsel %vm445, %v789, 0
    %799 = vmatprep.subr.mxu0 0.0
    %800 = vmatpush1.msra.mxu0 0.0
    %801 = vmatprep.subr.mxu0 0.0
    %802 = vmatpush1.msra.mxu0 0.0
    %803 = vmatprep.subr.mxu0 0.0
    %804 = vmatpush1.msra.mxu0 0.0
    %805 = vmatprep.subr.mxu0 0.0
    %806 = vmatpush1.msra.mxu0 0.0
    %807 = vmatprep.subr.mxu0 0.0
    %808 = vmatpush1.msra.mxu0 0.0
    %809 = vmatprep.subr.mxu0 0.0
    %810 = vmatpush1.msra.mxu0 0.0
    %811 = vmatprep.subr.mxu0 0.0
    %812 = vmatpush1.msra.mxu0 0.0
    %813 = vmatprep.subr.mxu0 0.0
    %814 = vmatpush1.msra.mxu0 0.0
    %815 = vmatprep.subr.mxu0 0.0
    %816 = vmatpush1.msra.mxu0 0.0
    %817 = vmatprep.subr.mxu0 0.0
    %818 = vmatpush1.msra.mxu0 0.0
    %819 = vmatprep.subr.mxu0 0.0
    %820 = vmatpush1.msra.mxu0 0.0
    %821 = vmatprep.subr.mxu0 0.0
    %822 = vmatpush1.msra.mxu0 0.0
    %823 = vmatprep.subr.mxu0 0.0
    %824 = vmatpush1.msra.mxu0 0.0
    %825 = vmatprep.subr.mxu0 0.0
    %826 = vmatpush1.msra.mxu0 0.0
    %827 = vmatprep.subr.mxu0 0.0
    %828 = vmatpush1.msra.mxu0 0.0
    %829 = vmatprep.subr.mxu0 0.0
    %830 = vmatpush1.msra.mxu0 %v794
    %831 = vmatprep.subr.mxu0 0.0
    %832 = vmatpush2.msra.mxu0 0.0
    %833 = vmatprep.subr.mxu0 0.0
    %834 = vmatpush2.msra.mxu0 0.0
    %835 = vmatprep.subr.mxu0 0.0
    %836 = vmatpush2.msra.mxu0 0.0
    %837 = vmatprep.subr.mxu0 0.0
    %838 = vmatpush2.msra.mxu0 0.0
    %839 = vmatprep.subr.mxu0 0.0
    %840 = vmatpush2.msra.mxu0 0.0
    %841 = vmatprep.subr.mxu0 0.0
    %842 = vmatpush2.msra.mxu0 0.0
    %843 = vmatprep.subr.mxu0 0.0
    %844 = vmatpush2.msra.mxu0 0.0
    %845 = vmatprep.subr.mxu0 0.0
    %846 = vmatpush2.msra.mxu0 0.0
    %847 = vmatprep.subr.mxu0 0.0
    %848 = vmatpush2.msra.mxu0 0.0
    %849 = vmatprep.subr.mxu0 0.0
    %850 = vmatpush2.msra.mxu0 0.0
    %851 = vmatprep.subr.mxu0 0.0
    %852 = vmatpush2.msra.mxu0 0.0
    %853 = vmatprep.subr.mxu0 0.0
    %854 = vmatpush2.msra.mxu0 0.0
    %855 = vmatprep.subr.mxu0 0.0
    %856 = vmatpush2.msra.mxu0 0.0
    %857 = vmatprep.subr.mxu0 0.0
    %858 = vmatpush2.msra.mxu0 0.0
    %859 = vmatprep.subr.mxu0 0.0
    %860 = vmatpush2.msra.mxu0 0.0
    %861 = vmatprep.subr.mxu0 0.0
    %862 = vmatpush2.msra.mxu0 0.0
    %863 = vmatprep.mubr.f32.mxu0 0.0
    %864 = vmatmul.mubr.f32.gmra.mxu0 %v797
    %v865 = vpop.f32.mrf.mxu0
    %v866 = vadd.f32 0.0, %v865
    %v867 = vpop.f32.mrf.mxu0
    %868 = vdwg.mxu0
    %870 = vrot.lane.b32.xlu0 %v289, 112
    %v871 = vpop.permute.xlu0 %870
    %v874 = vsel %vm445, %v791, 0
    %876 = vmatprep.subr.mxu0 0.0
    %877 = vmatpush1.msra.mxu0 0.0
    %878 = vmatprep.subr.mxu0 0.0
    %879 = vmatpush1.msra.mxu0 0.0
    %880 = vmatprep.subr.mxu0 0.0
    %881 = vmatpush1.msra.mxu0 0.0
    %882 = vmatprep.subr.mxu0 0.0
    %883 = vmatpush1.msra.mxu0 0.0
    %884 = vmatprep.subr.mxu0 0.0
    %885 = vmatpush1.msra.mxu0 0.0
    %886 = vmatprep.subr.mxu0 0.0
    %887 = vmatpush1.msra.mxu0 0.0
    %888 = vmatprep.subr.mxu0 0.0
    %889 = vmatpush1.msra.mxu0 0.0
    %890 = vmatprep.subr.mxu0 0.0
    %891 = vmatpush1.msra.mxu0 0.0
    %892 = vmatprep.subr.mxu0 0.0
    %893 = vmatpush1.msra.mxu0 0.0
    %894 = vmatprep.subr.mxu0 0.0
    %895 = vmatpush1.msra.mxu0 0.0
    %896 = vmatprep.subr.mxu0 0.0
    %897 = vmatpush1.msra.mxu0 0.0
    %898 = vmatprep.subr.mxu0 0.0
    %899 = vmatpush1.msra.mxu0 0.0
    %900 = vmatprep.subr.mxu0 0.0
    %901 = vmatpush1.msra.mxu0 0.0
    %902 = vmatprep.subr.mxu0 0.0
    %903 = vmatpush1.msra.mxu0 0.0
    %904 = vmatprep.subr.mxu0 0.0
    %905 = vmatpush1.msra.mxu0 0.0
    %906 = vmatprep.subr.mxu0 0.0
    %907 = vmatpush1.msra.mxu0 %v871
    %908 = vmatprep.subr.mxu0 0.0
    %909 = vmatpush2.msra.mxu0 0.0
    %910 = vmatprep.subr.mxu0 0.0
    %911 = vmatpush2.msra.mxu0 0.0
    %912 = vmatprep.subr.mxu0 0.0
    %913 = vmatpush2.msra.mxu0 0.0
    %914 = vmatprep.subr.mxu0 0.0
    %915 = vmatpush2.msra.mxu0 0.0
    %916 = vmatprep.subr.mxu0 0.0
    %917 = vmatpush2.msra.mxu0 0.0
    %918 = vmatprep.subr.mxu0 0.0
    %919 = vmatpush2.msra.mxu0 0.0
    %920 = vmatprep.subr.mxu0 0.0
    %921 = vmatpush2.msra.mxu0 0.0
    %922 = vmatprep.subr.mxu0 0.0
    %923 = vmatpush2.msra.mxu0 0.0
    %924 = vmatprep.subr.mxu0 0.0
    %925 = vmatpush2.msra.mxu0 0.0
    %926 = vmatprep.subr.mxu0 0.0
    %927 = vmatpush2.msra.mxu0 0.0
    %928 = vmatprep.subr.mxu0 0.0
    %929 = vmatpush2.msra.mxu0 0.0
    %930 = vmatprep.subr.mxu0 0.0
    %931 = vmatpush2.msra.mxu0 0.0
    %932 = vmatprep.subr.mxu0 0.0
    %933 = vmatpush2.msra.mxu0 0.0
    %934 = vmatprep.subr.mxu0 0.0
    %935 = vmatpush2.msra.mxu0 0.0
    %936 = vmatprep.subr.mxu0 0.0
    %937 = vmatpush2.msra.mxu0 0.0
    %938 = vmatprep.subr.mxu0 0.0
    %939 = vmatpush2.msra.mxu0 0.0
    %940 = vmatprep.mubr.f32.mxu0 0.0
    %941 = vmatmul.mubr.f32.gmra.mxu0 %v874
    %v942 = vpop.f32.mrf.mxu0
    %v943 = vadd.f32 0.0, %v942
    %v944 = vpop.f32.mrf.mxu0
    %945 = vdwg.mxu0
    %946 = vrot.lane.b32.xlu0 %v281, 96
    %v947 = vpop.permute.xlu0 %946
    %948 = vrot.lane.b32.xlu0 %v281, 32
    %v949 = vpop.permute.xlu0 %948
    %v950 = vsel %vm45, %v947, 0
    %v952 = vsel %vm45, %v949, 0
    %954 = vmatprep.subr.mxu0 0.0
    %955 = vmatpush1.xpose.msra.mxu0 0.0
    %956 = vmatprep.subr.mxu0 0.0
    %957 = vmatpush1.xpose.msra.mxu0 0.0
    %958 = vmatprep.subr.mxu0 0.0
    %959 = vmatpush1.xpose.msra.mxu0 0.0
    %960 = vmatprep.subr.mxu0 0.0
    %961 = vmatpush1.xpose.msra.mxu0 0.0
    %962 = vmatprep.subr.mxu0 0.0
    %963 = vmatpush1.xpose.msra.mxu0 0.0
    %964 = vmatprep.subr.mxu0 0.0
    %965 = vmatpush1.xpose.msra.mxu0 0.0
    %966 = vmatprep.subr.mxu0 0.0
    %967 = vmatpush1.xpose.msra.mxu0 0.0
    %968 = vmatprep.subr.mxu0 0.0
    %969 = vmatpush1.xpose.msra.mxu0 0.0
    %970 = vmatprep.subr.mxu0 0.0
    %971 = vmatpush1.xpose.msra.mxu0 0.0
    %972 = vmatprep.subr.mxu0 0.0
    %973 = vmatpush1.xpose.msra.mxu0 0.0
    %974 = vmatprep.subr.mxu0 0.0
    %975 = vmatpush1.xpose.msra.mxu0 0.0
    %976 = vmatprep.subr.mxu0 0.0
    %977 = vmatpush1.xpose.msra.mxu0 0.0
    %978 = vmatprep.subr.mxu0 0.0
    %979 = vmatpush1.xpose.msra.mxu0 0.0
    %980 = vmatprep.subr.mxu0 0.0
    %981 = vmatpush1.xpose.msra.mxu0 0.0
    %982 = vmatprep.subr.mxu0 0.0
    %983 = vmatpush1.xpose.msra.mxu0 0.0
    %984 = vmatprep.subr.mxu0 0.0
    %985 = vmatpush1.xpose.msra.mxu0 %v952
    %986 = vmatprep.subr.mxu0 0.0
    %987 = vmatpush2.xpose.msra.mxu0 0.0
    %988 = vmatprep.subr.mxu0 0.0
    %989 = vmatpush2.xpose.msra.mxu0 0.0
    %990 = vmatprep.subr.mxu0 0.0
    %991 = vmatpush2.xpose.msra.mxu0 0.0
    %992 = vmatprep.subr.mxu0 0.0
    %993 = vmatpush2.xpose.msra.mxu0 0.0
    %994 = vmatprep.subr.mxu0 0.0
    %995 = vmatpush2.xpose.msra.mxu0 0.0
    %996 = vmatprep.subr.mxu0 0.0
    %997 = vmatpush2.xpose.msra.mxu0 0.0
    %998 = vmatprep.subr.mxu0 0.0
    %999 = vmatpush2.xpose.msra.mxu0 0.0
    %1000 = vmatprep.subr.mxu0 0.0
    %1001 = vmatpush2.xpose.msra.mxu0 0.0
    %1002 = vmatprep.subr.mxu0 0.0
    %1003 = vmatpush2.xpose.msra.mxu0 0.0
    %1004 = vmatprep.subr.mxu0 0.0
    %1005 = vmatpush2.xpose.msra.mxu0 0.0
    %1006 = vmatprep.subr.mxu0 0.0
    %1007 = vmatpush2.xpose.msra.mxu0 0.0
    %1008 = vmatprep.subr.mxu0 0.0
    %1009 = vmatpush2.xpose.msra.mxu0 0.0
    %1010 = vmatprep.subr.mxu0 0.0
    %1011 = vmatpush2.xpose.msra.mxu0 0.0
    %1012 = vmatprep.subr.mxu0 0.0
    %1013 = vmatpush2.xpose.msra.mxu0 0.0
    %1014 = vmatprep.subr.mxu0 0.0
    %1015 = vmatpush2.xpose.msra.mxu0 0.0
    %1016 = vmatprep.subr.mxu0 0.0
    %1017 = vmatpush2.xpose.msra.mxu0 0.0
    %1018 = vmatprep.mubr.f32.mxu0 0.0
    %1019 = vmatmul.mubr.f32.gmra.mxu0 %v950
    %v1020 = vpop.f32.mrf.mxu0
    %v1021 = vadd.f32 0.0, %v1020
    %v1022 = vpop.f32.mrf.mxu0
    %1023 = vdwg.mxu0
    %1024 = vrot.lane.b32.xlu0 %v287, 96
    %v1025 = vpop.permute.xlu0 %1024
    %1026 = vrot.lane.b32.xlu0 %v287, 32
    %v1027 = vpop.permute.xlu0 %1026
    %v1028 = vsel %vm45, %v1025, 0
    %v1030 = vsel %vm45, %v1027, 0
    %1032 = vmatprep.subr.mxu0 0.0
    %1033 = vmatpush1.xpose.msra.mxu0 0.0
    %1034 = vmatprep.subr.mxu0 0.0
    %1035 = vmatpush1.xpose.msra.mxu0 0.0
    %1036 = vmatprep.subr.mxu0 0.0
    %1037 = vmatpush1.xpose.msra.mxu0 0.0
    %1038 = vmatprep.subr.mxu0 0.0
    %1039 = vmatpush1.xpose.msra.mxu0 0.0
    %1040 = vmatprep.subr.mxu0 0.0
    %1041 = vmatpush1.xpose.msra.mxu0 0.0
    %1042 = vmatprep.subr.mxu0 0.0
    %1043 = vmatpush1.xpose.msra.mxu0 0.0
    %1044 = vmatprep.subr.mxu0 0.0
    %1045 = vmatpush1.xpose.msra.mxu0 0.0
    %1046 = vmatprep.subr.mxu0 0.0
    %1047 = vmatpush1.xpose.msra.mxu0 0.0
    %1048 = vmatprep.subr.mxu0 0.0
    %1049 = vmatpush1.xpose.msra.mxu0 0.0
    %1050 = vmatprep.subr.mxu0 0.0
    %1051 = vmatpush1.xpose.msra.mxu0 0.0
    %1052 = vmatprep.subr.mxu0 0.0
    %1053 = vmatpush1.xpose.msra.mxu0 0.0
    %1054 = vmatprep.subr.mxu0 0.0
    %1055 = vmatpush1.xpose.msra.mxu0 0.0
    %1056 = vmatprep.subr.mxu0 0.0
    %1057 = vmatpush1.xpose.msra.mxu0 0.0
    %1058 = vmatprep.subr.mxu0 0.0
    %1059 = vmatpush1.xpose.msra.mxu0 0.0
    %1060 = vmatprep.subr.mxu0 0.0
    %1061 = vmatpush1.xpose.msra.mxu0 0.0
    %1062 = vmatprep.subr.mxu0 0.0
    %1063 = vmatpush1.xpose.msra.mxu0 %v1030
    %1064 = vmatprep.subr.mxu0 0.0
    %1065 = vmatpush2.xpose.msra.mxu0 0.0
    %1066 = vmatprep.subr.mxu0 0.0
    %1067 = vmatpush2.xpose.msra.mxu0 0.0
    %1068 = vmatprep.subr.mxu0 0.0
    %1069 = vmatpush2.xpose.msra.mxu0 0.0
    %1070 = vmatprep.subr.mxu0 0.0
    %1071 = vmatpush2.xpose.msra.mxu0 0.0
    %1072 = vmatprep.subr.mxu0 0.0
    %1073 = vmatpush2.xpose.msra.mxu0 0.0
    %1074 = vmatprep.subr.mxu0 0.0
    %1075 = vmatpush2.xpose.msra.mxu0 0.0
    %1076 = vmatprep.subr.mxu0 0.0
    %1077 = vmatpush2.xpose.msra.mxu0 0.0
    %1078 = vmatprep.subr.mxu0 0.0
    %1079 = vmatpush2.xpose.msra.mxu0 0.0
    %1080 = vmatprep.subr.mxu0 0.0
    %1081 = vmatpush2.xpose.msra.mxu0 0.0
    %1082 = vmatprep.subr.mxu0 0.0
    %1083 = vmatpush2.xpose.msra.mxu0 0.0
    %1084 = vmatprep.subr.mxu0 0.0
    %1085 = vmatpush2.xpose.msra.mxu0 0.0
    %1086 = vmatprep.subr.mxu0 0.0
    %1087 = vmatpush2.xpose.msra.mxu0 0.0
    %1088 = vmatprep.subr.mxu0 0.0
    %1089 = vmatpush2.xpose.msra.mxu0 0.0
    %1090 = vmatprep.subr.mxu0 0.0
    %1091 = vmatpush2.xpose.msra.mxu0 0.0
    %1092 = vmatprep.subr.mxu0 0.0
    %1093 = vmatpush2.xpose.msra.mxu0 0.0
    %1094 = vmatprep.subr.mxu0 0.0
    %1095 = vmatpush2.xpose.msra.mxu0 0.0
    %1096 = vmatprep.mubr.f32.mxu0 0.0
    %1097 = vmatmul.mubr.f32.gmra.mxu0 %v1028
    %v1098 = vpop.f32.mrf.mxu0
    %v1099 = vadd.f32 0.0, %v1098
    %v1100 = vpop.f32.mrf.mxu0
    %1101 = vdwg.mxu0
    %v1102 = vsel %vm445, %v1021, -inf
    %1103 = vmax.xlane.f32.xlu0 %v1102
    %v1104 = vpop.xlane.xlu0 %1103
    %v1105 = vsel %vm445, %v1099, -inf
    %1106 = vmax.xlane.f32.xlu0 %v1105
    %v1107 = vpop.xlane.xlu0 %1106
    %v1108 = vsub.f32 %v1021, %v1104
    %v1109 = vsub.f32 %v1099, %v1107
    %v1110 = vmul.f32 %v1108, 1.442695
    %v1111 = vpow.pop %v1110
    %v1112 = vmul.f32 %v1109, 1.442695
    %v1113 = vpow.pop %v1112
    %v1114 = vsel %vm445, %v1111, 0.0
    %1115 = vadd.xlane.f32.xlu0 %v1114
    %v1116 = vpop.xlane.xlu0 %1115
    %v1117 = vsel %vm445, %v1113, 0.0
    %1118 = vadd.xlane.f32.xlu0 %v1117
    %v1119 = vpop.xlane.xlu0 %1118
    %v1120 = vrcp.pop %v1116
    %v1121 = vmul.f32 %v1111, %v1120
    %v1122 = vrcp.pop %v1119
    %v1123 = vmul.f32 %v1113, %v1122
    %1124 = vrot.lane.b32.xlu0 %v283, 96
    %v1125 = vpop.permute.xlu0 %1124
    %v1128 = vsel %vm445, %v1121, 0
    %1130 = vmatprep.subr.mxu0 0.0
    %1131 = vmatpush1.msra.mxu0 0.0
    %1132 = vmatprep.subr.mxu0 0.0
    %1133 = vmatpush1.msra.mxu0 0.0
    %1134 = vmatprep.subr.mxu0 0.0
    %1135 = vmatpush1.msra.mxu0 0.0
    %1136 = vmatprep.subr.mxu0 0.0
    %1137 = vmatpush1.msra.mxu0 0.0
    %1138 = vmatprep.subr.mxu0 0.0
    %1139 = vmatpush1.msra.mxu0 0.0
    %1140 = vmatprep.subr.mxu0 0.0
    %1141 = vmatpush1.msra.mxu0 0.0
    %1142 = vmatprep.subr.mxu0 0.0
    %1143 = vmatpush1.msra.mxu0 0.0
    %1144 = vmatprep.subr.mxu0 0.0
    %1145 = vmatpush1.msra.mxu0 0.0
    %1146 = vmatprep.subr.mxu0 0.0
    %1147 = vmatpush1.msra.mxu0 0.0
    %1148 = vmatprep.subr.mxu0 0.0
    %1149 = vmatpush1.msra.mxu0 0.0
    %1150 = vmatprep.subr.mxu0 0.0
    %1151 = vmatpush1.msra.mxu0 0.0
    %1152 = vmatprep.subr.mxu0 0.0
    %1153 = vmatpush1.msra.mxu0 0.0
    %1154 = vmatprep.subr.mxu0 0.0
    %1155 = vmatpush1.msra.mxu0 0.0
    %1156 = vmatprep.subr.mxu0 0.0
    %1157 = vmatpush1.msra.mxu0 0.0
    %1158 = vmatprep.subr.mxu0 0.0
    %1159 = vmatpush1.msra.mxu0 0.0
    %1160 = vmatprep.subr.mxu0 0.0
    %1161 = vmatpush1.msra.mxu0 %v1125
    %1162 = vmatprep.subr.mxu0 0.0
    %1163 = vmatpush2.msra.mxu0 0.0
    %1164 = vmatprep.subr.mxu0 0.0
    %1165 = vmatpush2.msra.mxu0 0.0
    %1166 = vmatprep.subr.mxu0 0.0
    %1167 = vmatpush2.msra.mxu0 0.0
    %1168 = vmatprep.subr.mxu0 0.0
    %1169 = vmatpush2.msra.mxu0 0.0
    %1170 = vmatprep.subr.mxu0 0.0
    %1171 = vmatpush2.msra.mxu0 0.0
    %1172 = vmatprep.subr.mxu0 0.0
    %1173 = vmatpush2.msra.mxu0 0.0
    %1174 = vmatprep.subr.mxu0 0.0
    %1175 = vmatpush2.msra.mxu0 0.0
    %1176 = vmatprep.subr.mxu0 0.0
    %1177 = vmatpush2.msra.mxu0 0.0
    %1178 = vmatprep.subr.mxu0 0.0
    %1179 = vmatpush2.msra.mxu0 0.0
    %1180 = vmatprep.subr.mxu0 0.0
    %1181 = vmatpush2.msra.mxu0 0.0
    %1182 = vmatprep.subr.mxu0 0.0
    %1183 = vmatpush2.msra.mxu0 0.0
    %1184 = vmatprep.subr.mxu0 0.0
    %1185 = vmatpush2.msra.mxu0 0.0
    %1186 = vmatprep.subr.mxu0 0.0
    %1187 = vmatpush2.msra.mxu0 0.0
    %1188 = vmatprep.subr.mxu0 0.0
    %1189 = vmatpush2.msra.mxu0 0.0
    %1190 = vmatprep.subr.mxu0 0.0
    %1191 = vmatpush2.msra.mxu0 0.0
    %1192 = vmatprep.subr.mxu0 0.0
    %1193 = vmatpush2.msra.mxu0 0.0
    %1194 = vmatprep.mubr.f32.mxu0 0.0
    %1195 = vmatmul.mubr.f32.gmra.mxu0 %v1128
    %v1196 = vpop.f32.mrf.mxu0
    %v1197 = vadd.f32 0.0, %v1196
    %v1198 = vpop.f32.mrf.mxu0
    %1199 = vdwg.mxu0
    %1200 = vrot.lane.b32.xlu0 %v289, 96
    %v1201 = vpop.permute.xlu0 %1200
    %v1204 = vsel %vm445, %v1123, 0
    %1206 = vmatprep.subr.mxu0 0.0
    %1207 = vmatpush1.msra.mxu0 0.0
    %1208 = vmatprep.subr.mxu0 0.0
    %1209 = vmatpush1.msra.mxu0 0.0
    %1210 = vmatprep.subr.mxu0 0.0
    %1211 = vmatpush1.msra.mxu0 0.0
    %1212 = vmatprep.subr.mxu0 0.0
    %1213 = vmatpush1.msra.mxu0 0.0
    %1214 = vmatprep.subr.mxu0 0.0
    %1215 = vmatpush1.msra.mxu0 0.0
    %1216 = vmatprep.subr.mxu0 0.0
    %1217 = vmatpush1.msra.mxu0 0.0
    %1218 = vmatprep.subr.mxu0 0.0
    %1219 = vmatpush1.msra.mxu0 0.0
    %1220 = vmatprep.subr.mxu0 0.0
    %1221 = vmatpush1.msra.mxu0 0.0
    %1222 = vmatprep.subr.mxu0 0.0
    %1223 = vmatpush1.msra.mxu0 0.0
    %1224 = vmatprep.subr.mxu0 0.0
    %1225 = vmatpush1.msra.mxu0 0.0
    %1226 = vmatprep.subr.mxu0 0.0
    %1227 = vmatpush1.msra.mxu0 0.0
    %1228 = vmatprep.subr.mxu0 0.0
    %1229 = vmatpush1.msra.mxu0 0.0
    %1230 = vmatprep.subr.mxu0 0.0
    %1231 = vmatpush1.msra.mxu0 0.0
    %1232 = vmatprep.subr.mxu0 0.0
    %1233 = vmatpush1.msra.mxu0 0.0
    %1234 = vmatprep.subr.mxu0 0.0
    %1235 = vmatpush1.msra.mxu0 0.0
    %1236 = vmatprep.subr.mxu0 0.0
    %1237 = vmatpush1.msra.mxu0 %v1201
    %1238 = vmatprep.subr.mxu0 0.0
    %1239 = vmatpush2.msra.mxu0 0.0
    %1240 = vmatprep.subr.mxu0 0.0
    %1241 = vmatpush2.msra.mxu0 0.0
    %1242 = vmatprep.subr.mxu0 0.0
    %1243 = vmatpush2.msra.mxu0 0.0
    %1244 = vmatprep.subr.mxu0 0.0
    %1245 = vmatpush2.msra.mxu0 0.0
    %1246 = vmatprep.subr.mxu0 0.0
    %1247 = vmatpush2.msra.mxu0 0.0
    %1248 = vmatprep.subr.mxu0 0.0
    %1249 = vmatpush2.msra.mxu0 0.0
    %1250 = vmatprep.subr.mxu0 0.0
    %1251 = vmatpush2.msra.mxu0 0.0
    %1252 = vmatprep.subr.mxu0 0.0
    %1253 = vmatpush2.msra.mxu0 0.0
    %1254 = vmatprep.subr.mxu0 0.0
    %1255 = vmatpush2.msra.mxu0 0.0
    %1256 = vmatprep.subr.mxu0 0.0
    %1257 = vmatpush2.msra.mxu0 0.0
    %1258 = vmatprep.subr.mxu0 0.0
    %1259 = vmatpush2.msra.mxu0 0.0
    %1260 = vmatprep.subr.mxu0 0.0
    %1261 = vmatpush2.msra.mxu0 0.0
    %1262 = vmatprep.subr.mxu0 0.0
    %1263 = vmatpush2.msra.mxu0 0.0
    %1264 = vmatprep.subr.mxu0 0.0
    %1265 = vmatpush2.msra.mxu0 0.0
    %1266 = vmatprep.subr.mxu0 0.0
    %1267 = vmatpush2.msra.mxu0 0.0
    %1268 = vmatprep.subr.mxu0 0.0
    %1269 = vmatpush2.msra.mxu0 0.0
    %1270 = vmatprep.mubr.f32.mxu0 0.0
    %1271 = vmatmul.mubr.f32.gmra.mxu0 %v1204
    %v1272 = vpop.f32.mrf.mxu0
    %v1273 = vadd.f32 0.0, %v1272
    %v1274 = vpop.f32.mrf.mxu0
    %1275 = vdwg.mxu0
    %1276 = vrot.lane.b32.xlu0 %v281, 80
    %v1277 = vpop.permute.xlu0 %1276
    %1278 = vrot.lane.b32.xlu0 %v281, 16
    %v1279 = vpop.permute.xlu0 %1278
    %v1280 = vsel %vm45, %v1277, 0
    %v1282 = vsel %vm45, %v1279, 0
    %1284 = vmatprep.subr.mxu0 0.0
    %1285 = vmatpush1.xpose.msra.mxu0 0.0
    %1286 = vmatprep.subr.mxu0 0.0
    %1287 = vmatpush1.xpose.msra.mxu0 0.0
    %1288 = vmatprep.subr.mxu0 0.0
    %1289 = vmatpush1.xpose.msra.mxu0 0.0
    %1290 = vmatprep.subr.mxu0 0.0
    %1291 = vmatpush1.xpose.msra.mxu0 0.0
    %1292 = vmatprep.subr.mxu0 0.0
    %1293 = vmatpush1.xpose.msra.mxu0 0.0
    %1294 = vmatprep.subr.mxu0 0.0
    %1295 = vmatpush1.xpose.msra.mxu0 0.0
    %1296 = vmatprep.subr.mxu0 0.0
    %1297 = vmatpush1.xpose.msra.mxu0 0.0
    %1298 = vmatprep.subr.mxu0 0.0
    %1299 = vmatpush1.xpose.msra.mxu0 0.0
    %1300 = vmatprep.subr.mxu0 0.0
    %1301 = vmatpush1.xpose.msra.mxu0 0.0
    %1302 = vmatprep.subr.mxu0 0.0
    %1303 = vmatpush1.xpose.msra.mxu0 0.0
    %1304 = vmatprep.subr.mxu0 0.0
    %1305 = vmatpush1.xpose.msra.mxu0 0.0
    %1306 = vmatprep.subr.mxu0 0.0
    %1307 = vmatpush1.xpose.msra.mxu0 0.0
    %1308 = vmatprep.subr.mxu0 0.0
    %1309 = vmatpush1.xpose.msra.mxu0 0.0
    %1310 = vmatprep.subr.mxu0 0.0
    %1311 = vmatpush1.xpose.msra.mxu0 0.0
    %1312 = vmatprep.subr.mxu0 0.0
    %1313 = vmatpush1.xpose.msra.mxu0 0.0
    %1314 = vmatprep.subr.mxu0 0.0
    %1315 = vmatpush1.xpose.msra.mxu0 %v1282
    %1316 = vmatprep.subr.mxu0 0.0
    %1317 = vmatpush2.xpose.msra.mxu0 0.0
    %1318 = vmatprep.subr.mxu0 0.0
    %1319 = vmatpush2.xpose.msra.mxu0 0.0
    %1320 = vmatprep.subr.mxu0 0.0
    %1321 = vmatpush2.xpose.msra.mxu0 0.0
    %1322 = vmatprep.subr.mxu0 0.0
    %1323 = vmatpush2.xpose.msra.mxu0 0.0
    %1324 = vmatprep.subr.mxu0 0.0
    %1325 = vmatpush2.xpose.msra.mxu0 0.0
    %1326 = vmatprep.subr.mxu0 0.0
    %1327 = vmatpush2.xpose.msra.mxu0 0.0
    %1328 = vmatprep.subr.mxu0 0.0
    %1329 = vmatpush2.xpose.msra.mxu0 0.0
    %1330 = vmatprep.subr.mxu0 0.0
    %1331 = vmatpush2.xpose.msra.mxu0 0.0
    %1332 = vmatprep.subr.mxu0 0.0
    %1333 = vmatpush2.xpose.msra.mxu0 0.0
    %1334 = vmatprep.subr.mxu0 0.0
    %1335 = vmatpush2.xpose.msra.mxu0 0.0
    %1336 = vmatprep.subr.mxu0 0.0
    %1337 = vmatpush2.xpose.msra.mxu0 0.0
    %1338 = vmatprep.subr.mxu0 0.0
    %1339 = vmatpush2.xpose.msra.mxu0 0.0
    %1340 = vmatprep.subr.mxu0 0.0
    %1341 = vmatpush2.xpose.msra.mxu0 0.0
    %1342 = vmatprep.subr.mxu0 0.0
    %1343 = vmatpush2.xpose.msra.mxu0 0.0
    %1344 = vmatprep.subr.mxu0 0.0
    %1345 = vmatpush2.xpose.msra.mxu0 0.0
    %1346 = vmatprep.subr.mxu0 0.0
    %1347 = vmatpush2.xpose.msra.mxu0 0.0
    %1348 = vmatprep.mubr.f32.mxu0 0.0
    %1349 = vmatmul.mubr.f32.gmra.mxu0 %v1280
    %v1350 = vpop.f32.mrf.mxu0
    %v1351 = vadd.f32 0.0, %v1350
    %v1352 = vpop.f32.mrf.mxu0
    %1353 = vdwg.mxu0
    %1354 = vrot.lane.b32.xlu0 %v287, 80
    %v1355 = vpop.permute.xlu0 %1354
    %1356 = vrot.lane.b32.xlu0 %v287, 16
    %v1357 = vpop.permute.xlu0 %1356
    %v1358 = vsel %vm45, %v1355, 0
    %v1360 = vsel %vm45, %v1357, 0
    %1362 = vmatprep.subr.mxu0 0.0
    %1363 = vmatpush1.xpose.msra.mxu0 0.0
    %1364 = vmatprep.subr.mxu0 0.0
    %1365 = vmatpush1.xpose.msra.mxu0 0.0
    %1366 = vmatprep.subr.mxu0 0.0
    %1367 = vmatpush1.xpose.msra.mxu0 0.0
    %1368 = vmatprep.subr.mxu0 0.0
    %1369 = vmatpush1.xpose.msra.mxu0 0.0
    %1370 = vmatprep.subr.mxu0 0.0
    %1371 = vmatpush1.xpose.msra.mxu0 0.0
    %1372 = vmatprep.subr.mxu0 0.0
    %1373 = vmatpush1.xpose.msra.mxu0 0.0
    %1374 = vmatprep.subr.mxu0 0.0
    %1375 = vmatpush1.xpose.msra.mxu0 0.0
    %1376 = vmatprep.subr.mxu0 0.0
    %1377 = vmatpush1.xpose.msra.mxu0 0.0
    %1378 = vmatprep.subr.mxu0 0.0
    %1379 = vmatpush1.xpose.msra.mxu0 0.0
    %1380 = vmatprep.subr.mxu0 0.0
    %1381 = vmatpush1.xpose.msra.mxu0 0.0
    %1382 = vmatprep.subr.mxu0 0.0
    %1383 = vmatpush1.xpose.msra.mxu0 0.0
    %1384 = vmatprep.subr.mxu0 0.0
    %1385 = vmatpush1.xpose.msra.mxu0 0.0
    %1386 = vmatprep.subr.mxu0 0.0
    %1387 = vmatpush1.xpose.msra.mxu0 0.0
    %1388 = vmatprep.subr.mxu0 0.0
    %1389 = vmatpush1.xpose.msra.mxu0 0.0
    %1390 = vmatprep.subr.mxu0 0.0
    %1391 = vmatpush1.xpose.msra.mxu0 0.0
    %1392 = vmatprep.subr.mxu0 0.0
    %1393 = vmatpush1.xpose.msra.mxu0 %v1360
    %1394 = vmatprep.subr.mxu0 0.0
    %1395 = vmatpush2.xpose.msra.mxu0 0.0
    %1396 = vmatprep.subr.mxu0 0.0
    %1397 = vmatpush2.xpose.msra.mxu0 0.0
    %1398 = vmatprep.subr.mxu0 0.0
    %1399 = vmatpush2.xpose.msra.mxu0 0.0
    %1400 = vmatprep.subr.mxu0 0.0
    %1401 = vmatpush2.xpose.msra.mxu0 0.0
    %1402 = vmatprep.subr.mxu0 0.0
    %1403 = vmatpush2.xpose.msra.mxu0 0.0
    %1404 = vmatprep.subr.mxu0 0.0
    %1405 = vmatpush2.xpose.msra.mxu0 0.0
    %1406 = vmatprep.subr.mxu0 0.0
    %1407 = vmatpush2.xpose.msra.mxu0 0.0
    %1408 = vmatprep.subr.mxu0 0.0
    %1409 = vmatpush2.xpose.msra.mxu0 0.0
    %1410 = vmatprep.subr.mxu0 0.0
    %1411 = vmatpush2.xpose.msra.mxu0 0.0
    %1412 = vmatprep.subr.mxu0 0.0
    %1413 = vmatpush2.xpose.msra.mxu0 0.0
    %1414 = vmatprep.subr.mxu0 0.0
    %1415 = vmatpush2.xpose.msra.mxu0 0.0
    %1416 = vmatprep.subr.mxu0 0.0
    %1417 = vmatpush2.xpose.msra.mxu0 0.0
    %1418 = vmatprep.subr.mxu0 0.0
    %1419 = vmatpush2.xpose.msra.mxu0 0.0
    %1420 = vmatprep.subr.mxu0 0.0
    %1421 = vmatpush2.xpose.msra.mxu0 0.0
    %1422 = vmatprep.subr.mxu0 0.0
    %1423 = vmatpush2.xpose.msra.mxu0 0.0
    %1424 = vmatprep.subr.mxu0 0.0
    %1425 = vmatpush2.xpose.msra.mxu0 0.0
    %1426 = vmatprep.mubr.f32.mxu0 0.0
    %1427 = vmatmul.mubr.f32.gmra.mxu0 %v1358
    %v1428 = vpop.f32.mrf.mxu0
    %v1429 = vadd.f32 0.0, %v1428
    %v1430 = vpop.f32.mrf.mxu0
    %1431 = vdwg.mxu0
    %v1432 = vsel %vm445, %v1351, -inf
    %1433 = vmax.xlane.f32.xlu0 %v1432
    %v1434 = vpop.xlane.xlu0 %1433
    %v1435 = vsel %vm445, %v1429, -inf
    %1436 = vmax.xlane.f32.xlu0 %v1435
    %v1437 = vpop.xlane.xlu0 %1436
    %v1438 = vsub.f32 %v1351, %v1434
    %v1439 = vsub.f32 %v1429, %v1437
    %v1440 = vmul.f32 %v1438, 1.442695
    %v1441 = vpow.pop %v1440
    %v1442 = vmul.f32 %v1439, 1.442695
    %v1443 = vpow.pop %v1442
    %v1444 = vsel %vm445, %v1441, 0.0
    %1445 = vadd.xlane.f32.xlu0 %v1444
    %v1446 = vpop.xlane.xlu0 %1445
    %v1447 = vsel %vm445, %v1443, 0.0
    %1448 = vadd.xlane.f32.xlu0 %v1447
    %v1449 = vpop.xlane.xlu0 %1448
    %v1450 = vrcp.pop %v1446
    %v1451 = vmul.f32 %v1441, %v1450
    %v1452 = vrcp.pop %v1449
    %v1453 = vmul.f32 %v1443, %v1452
    %1454 = vrot.lane.b32.xlu0 %v283, 80
    %v1455 = vpop.permute.xlu0 %1454
    %v1458 = vsel %vm445, %v1451, 0
    %1460 = vmatprep.subr.mxu0 0.0
    %1461 = vmatpush1.msra.mxu0 0.0
    %1462 = vmatprep.subr.mxu0 0.0
    %1463 = vmatpush1.msra.mxu0 0.0
    %1464 = vmatprep.subr.mxu0 0.0
    %1465 = vmatpush1.msra.mxu0 0.0
    %1466 = vmatprep.subr.mxu0 0.0
    %1467 = vmatpush1.msra.mxu0 0.0
    %1468 = vmatprep.subr.mxu0 0.0
    %1469 = vmatpush1.msra.mxu0 0.0
    %1470 = vmatprep.subr.mxu0 0.0
    %1471 = vmatpush1.msra.mxu0 0.0
    %1472 = vmatprep.subr.mxu0 0.0
    %1473 = vmatpush1.msra.mxu0 0.0
    %1474 = vmatprep.subr.mxu0 0.0
    %1475 = vmatpush1.msra.mxu0 0.0
    %1476 = vmatprep.subr.mxu0 0.0
    %1477 = vmatpush1.msra.mxu0 0.0
    %1478 = vmatprep.subr.mxu0 0.0
    %1479 = vmatpush1.msra.mxu0 0.0
    %1480 = vmatprep.subr.mxu0 0.0
    %1481 = vmatpush1.msra.mxu0 0.0
    %1482 = vmatprep.subr.mxu0 0.0
    %1483 = vmatpush1.msra.mxu0 0.0
    %1484 = vmatprep.subr.mxu0 0.0
    %1485 = vmatpush1.msra.mxu0 0.0
    %1486 = vmatprep.subr.mxu0 0.0
    %1487 = vmatpush1.msra.mxu0 0.0
    %1488 = vmatprep.subr.mxu0 0.0
    %1489 = vmatpush1.msra.mxu0 0.0
    %1490 = vmatprep.subr.mxu0 0.0
    %1491 = vmatpush1.msra.mxu0 %v1455
    %1492 = vmatprep.subr.mxu0 0.0
    %1493 = vmatpush2.msra.mxu0 0.0
    %1494 = vmatprep.subr.mxu0 0.0
    %1495 = vmatpush2.msra.mxu0 0.0
    %1496 = vmatprep.subr.mxu0 0.0
    %1497 = vmatpush2.msra.mxu0 0.0
    %1498 = vmatprep.subr.mxu0 0.0
    %1499 = vmatpush2.msra.mxu0 0.0
    %1500 = vmatprep.subr.mxu0 0.0
    %1501 = vmatpush2.msra.mxu0 0.0
    %1502 = vmatprep.subr.mxu0 0.0
    %1503 = vmatpush2.msra.mxu0 0.0
    %1504 = vmatprep.subr.mxu0 0.0
    %1505 = vmatpush2.msra.mxu0 0.0
    %1506 = vmatprep.subr.mxu0 0.0
    %1507 = vmatpush2.msra.mxu0 0.0
    %1508 = vmatprep.subr.mxu0 0.0
    %1509 = vmatpush2.msra.mxu0 0.0
    %1510 = vmatprep.subr.mxu0 0.0
    %1511 = vmatpush2.msra.mxu0 0.0
    %1512 = vmatprep.subr.mxu0 0.0
    %1513 = vmatpush2.msra.mxu0 0.0
    %1514 = vmatprep.subr.mxu0 0.0
    %1515 = vmatpush2.msra.mxu0 0.0
    %1516 = vmatprep.subr.mxu0 0.0
    %1517 = vmatpush2.msra.mxu0 0.0
    %1518 = vmatprep.subr.mxu0 0.0
    %1519 = vmatpush2.msra.mxu0 0.0
    %1520 = vmatprep.subr.mxu0 0.0
    %1521 = vmatpush2.msra.mxu0 0.0
    %1522 = vmatprep.subr.mxu0 0.0
    %1523 = vmatpush2.msra.mxu0 0.0
    %1524 = vmatprep.mubr.f32.mxu0 0.0
    %1525 = vmatmul.mubr.f32.gmra.mxu0 %v1458
    %v1526 = vpop.f32.mrf.mxu0
    %v1527 = vadd.f32 0.0, %v1526
    %v1528 = vpop.f32.mrf.mxu0
    %1529 = vdwg.mxu0
    %1530 = vrot.lane.b32.xlu0 %v289, 80
    %v1531 = vpop.permute.xlu0 %1530
    %v1534 = vsel %vm445, %v1453, 0
    %1536 = vmatprep.subr.mxu0 0.0
    %1537 = vmatpush1.msra.mxu0 0.0
    %1538 = vmatprep.subr.mxu0 0.0
    %1539 = vmatpush1.msra.mxu0 0.0
    %1540 = vmatprep.subr.mxu0 0.0
    %1541 = vmatpush1.msra.mxu0 0.0
    %1542 = vmatprep.subr.mxu0 0.0
    %1543 = vmatpush1.msra.mxu0 0.0
    %1544 = vmatprep.subr.mxu0 0.0
    %1545 = vmatpush1.msra.mxu0 0.0
    %1546 = vmatprep.subr.mxu0 0.0
    %1547 = vmatpush1.msra.mxu0 0.0
    %1548 = vmatprep.subr.mxu0 0.0
    %1549 = vmatpush1.msra.mxu0 0.0
    %1550 = vmatprep.subr.mxu0 0.0
    %1551 = vmatpush1.msra.mxu0 0.0
    %1552 = vmatprep.subr.mxu0 0.0
    %1553 = vmatpush1.msra.mxu0 0.0
    %1554 = vmatprep.subr.mxu0 0.0
    %1555 = vmatpush1.msra.mxu0 0.0
    %1556 = vmatprep.subr.mxu0 0.0
    %1557 = vmatpush1.msra.mxu0 0.0
    %1558 = vmatprep.subr.mxu0 0.0
    %1559 = vmatpush1.msra.mxu0 0.0
    %1560 = vmatprep.subr.mxu0 0.0
    %1561 = vmatpush1.msra.mxu0 0.0
    %1562 = vmatprep.subr.mxu0 0.0
    %1563 = vmatpush1.msra.mxu0 0.0
    %1564 = vmatprep.subr.mxu0 0.0
    %1565 = vmatpush1.msra.mxu0 0.0
    %1566 = vmatprep.subr.mxu0 0.0
    %1567 = vmatpush1.msra.mxu0 %v1531
    %1568 = vmatprep.subr.mxu0 0.0
    %1569 = vmatpush2.msra.mxu0 0.0
    %1570 = vmatprep.subr.mxu0 0.0
    %1571 = vmatpush2.msra.mxu0 0.0
    %1572 = vmatprep.subr.mxu0 0.0
    %1573 = vmatpush2.msra.mxu0 0.0
    %1574 = vmatprep.subr.mxu0 0.0
    %1575 = vmatpush2.msra.mxu0 0.0
    %1576 = vmatprep.subr.mxu0 0.0
    %1577 = vmatpush2.msra.mxu0 0.0
    %1578 = vmatprep.subr.mxu0 0.0
    %1579 = vmatpush2.msra.mxu0 0.0
    %1580 = vmatprep.subr.mxu0 0.0
    %1581 = vmatpush2.msra.mxu0 0.0
    %1582 = vmatprep.subr.mxu0 0.0
    %1583 = vmatpush2.msra.mxu0 0.0
    %1584 = vmatprep.subr.mxu0 0.0
    %1585 = vmatpush2.msra.mxu0 0.0
    %1586 = vmatprep.subr.mxu0 0.0
    %1587 = vmatpush2.msra.mxu0 0.0
    %1588 = vmatprep.subr.mxu0 0.0
    %1589 = vmatpush2.msra.mxu0 0.0
    %1590 = vmatprep.subr.mxu0 0.0
    %1591 = vmatpush2.msra.mxu0 0.0
    %1592 = vmatprep.subr.mxu0 0.0
    %1593 = vmatpush2.msra.mxu0 0.0
    %1594 = vmatprep.subr.mxu0 0.0
    %1595 = vmatpush2.msra.mxu0 0.0
    %1596 = vmatprep.subr.mxu0 0.0
    %1597 = vmatpush2.msra.mxu0 0.0
    %1598 = vmatprep.subr.mxu0 0.0
    %1599 = vmatpush2.msra.mxu0 0.0
    %1600 = vmatprep.mubr.f32.mxu0 0.0
    %1601 = vmatmul.mubr.f32.gmra.mxu0 %v1534
    %v1602 = vpop.f32.mrf.mxu0
    %v1603 = vadd.f32 0.0, %v1602
    %v1604 = vpop.f32.mrf.mxu0
    %1605 = vdwg.mxu0
    %1608 = vrot.lane.b32.xlu0 %v866, 16
    %v1609 = vpop.permute.xlu0 %1608
    %1610 = vrot.lane.b32.xlu0 %v943, 16
    %v1611 = vpop.permute.xlu0 %1610
    %1616 = vrot.lane.b32.xlu0 %v1197, 32
    %v1617 = vpop.permute.xlu0 %1616
    %1618 = vrot.lane.b32.xlu0 %v1273, 32
    %v1619 = vpop.permute.xlu0 %1618
    %1624 = vrot.lane.b32.xlu0 %v1527, 48
    %v1625 = vpop.permute.xlu0 %1624
    %1626 = vrot.lane.b32.xlu0 %v1603, 48
    %v1627 = vpop.permute.xlu0 %1626
    %v1630 = vsel %vm45, %v538, %v1609
    %v1631 = vsel %vm45, %v611, %v1611
    %v1632 = vsel %vm168, %v1630, %v1617
    %v1633 = vsel %vm168, %v1631, %v1619
    %vm1634 = vcmask 392192
    %v1635 = vsel %vm1634, %v1632, %v1625
    %v1636 = vsel %vm1634, %v1633, %v1627
    %vm1637 = vcmask 523264
    %v1639 = vsel %vm1637, %v1635, 0
    %v1642 = vsel %vm1637, %v1636, 0
    %1644 = vmatprep.subr.mxu0 0.0
    %1645 = vmatpush1.msra.mxu0 0.0
    %1646 = vmatprep.subr.mxu0 0.0
    %1647 = vmatpush1.msra.mxu0 0.0
    %1648 = vmatprep.subr.mxu0 0.0
    %1649 = vmatpush1.msra.mxu0 0.0
    %1650 = vmatprep.subr.mxu0 0.0
    %1651 = vmatpush1.msra.mxu0 0.0
    %1652 = vmatprep.subr.mxu0 0.0
    %1653 = vmatpush1.msra.mxu0 0.0
    %1654 = vmatprep.subr.mxu0 0.0
    %1655 = vmatpush1.msra.mxu0 0.0
    %1656 = vmatprep.subr.mxu0 0.0
    %1657 = vmatpush1.msra.mxu0 0.0
    %1658 = vmatprep.subr.mxu0 0.0
    %1659 = vmatpush1.msra.mxu0 0.0
    %1660 = vmatprep.subr.mxu0 0.0
    %1661 = vmatpush1.msra.mxu0 %v142
    %1662 = vmatprep.subr.mxu0 0.0
    %1663 = vmatpush1.msra.mxu0 %v141
    %1664 = vmatprep.subr.mxu0 0.0
    %1665 = vmatpush1.msra.mxu0 %v140
    %1666 = vmatprep.subr.mxu0 0.0
    %1667 = vmatpush1.msra.mxu0 %v139
    %1668 = vmatprep.subr.mxu0 0.0
    %1669 = vmatpush1.msra.mxu0 %v138
    %1670 = vmatprep.subr.mxu0 0.0
    %1671 = vmatpush1.msra.mxu0 %v137
    %1672 = vmatprep.subr.mxu0 0.0
    %1673 = vmatpush1.msra.mxu0 %v136
    %1674 = vmatprep.subr.mxu0 0.0
    %1675 = vmatpush1.msra.mxu0 %v135
    %1676 = vmatprep.subr.mxu0 0.0
    %1677 = vmatpush2.msra.mxu0 0.0
    %1678 = vmatprep.subr.mxu0 0.0
    %1679 = vmatpush2.msra.mxu0 0.0
    %1680 = vmatprep.subr.mxu0 0.0
    %1681 = vmatpush2.msra.mxu0 0.0
    %1682 = vmatprep.subr.mxu0 0.0
    %1683 = vmatpush2.msra.mxu0 0.0
    %1684 = vmatprep.subr.mxu0 0.0
    %1685 = vmatpush2.msra.mxu0 0.0
    %1686 = vmatprep.subr.mxu0 0.0
    %1687 = vmatpush2.msra.mxu0 0.0
    %1688 = vmatprep.subr.mxu0 0.0
    %1689 = vmatpush2.msra.mxu0 0.0
    %1690 = vmatprep.subr.mxu0 0.0
    %1691 = vmatpush2.msra.mxu0 0.0
    %1692 = vmatprep.subr.mxu0 0.0
    %1693 = vmatpush2.msra.mxu0 0.0
    %1694 = vmatprep.subr.mxu0 0.0
    %1695 = vmatpush2.msra.mxu0 0.0
    %1696 = vmatprep.subr.mxu0 0.0
    %1697 = vmatpush2.msra.mxu0 0.0
    %1698 = vmatprep.subr.mxu0 0.0
    %1699 = vmatpush2.msra.mxu0 0.0
    %1700 = vmatprep.subr.mxu0 0.0
    %1701 = vmatpush2.msra.mxu0 0.0
    %1702 = vmatprep.subr.mxu0 0.0
    %1703 = vmatpush2.msra.mxu0 0.0
    %1704 = vmatprep.subr.mxu0 0.0
    %1705 = vmatpush2.msra.mxu0 0.0
    %1706 = vmatprep.subr.mxu0 0.0
    %1707 = vmatpush2.msra.mxu0 0.0
    %1708 = vmatprep.mubr.f32.mxu0 0.0
    %1709 = vmatmul.mubr.f32.gmra.mxu0 %v1639
    %v1710 = vpop.f32.mrf.mxu0
    %v1711 = vadd.f32 0.0, %v1710
    %v1712 = vpop.f32.mrf.mxu0
    %1713 = vmatprep.mubr.f32.mxu0 0.0
    %1714 = vmatmul.mubr.f32.gmra.mxu0 %v1642
    %v1715 = vpop.f32.mrf.mxu0
    %v1716 = vadd.f32 0.0, %v1715
    %v1717 = vpop.f32.mrf.mxu0
    %1718 = vdwg.mxu0
    %v1719 = vadd.f32 %v119, %v1711
    %v1720 = vadd.f32 %v124, %v1716
    %v1721 = vlaneseq
    %v1722 = vshrl.u32 %v1721, 7
    %v1723 = vsub.s32 2, %v1722
    %v1724 = vrot.slane %v167, %v1723
    %v1725 = vadd.f32 %v1719, %v1724
    %v1726 = vadd.f32 %v1720, %v1724
    %v1727 = vsel %vm168, %v1725, 0.0
    %1728 = vadd.xlane.f32.xlu0 %v1727
    %v1729 = vpop.xlane.xlu0 %1728
    %v1730 = vsel %vm168, %v1726, 0.0
    %1731 = vadd.xlane.f32.xlu0 %v1730
    %v1732 = vpop.xlane.xlu0 %1731
    %v1733 = vmul.f32 %v1729, %v175
    %v1734 = vmul.f32 %v1732, %v175
    %v1735 = vsub.f32 %v1725, %v1733
    %v1736 = vsub.f32 %v1726, %v1734
    %v1737 = vmul.f32 %v1735, %v1735
    %v1738 = vmul.f32 %v1736, %v1736
    %v1739 = vsel %vm168, %v1737, 0.0
    %1740 = vadd.xlane.f32.xlu0 %v1739
    %v1741 = vpop.xlane.xlu0 %1740
    %v1742 = vsel %vm168, %v1738, 0.0
    %1743 = vadd.xlane.f32.xlu0 %v1742
    %v1744 = vpop.xlane.xlu0 %1743
    %v1745 = vmul.f32 %v1741, %v175
    %v1746 = vmul.f32 %v1744, %v175
    %v1747 = vadd.f32 %v1745, 1e-05
    %v1748 = vadd.f32 %v1746, 1e-05
    %v1749 = vrsqrt.pop %v1747
    %v1750 = vrsqrt.pop %v1748
    %v1751 = vmul.f32 %v1735, %v1749
    %v1752 = vmul.f32 %v1736, %v1750
    %v1753 = vlaneseq
    %v1754 = vshrl.u32 %v1753, 7
    %v1755 = vsub.s32 3, %v1754
    %v1756 = vrot.slane %v167, %v1755
    %v1757 = vmul.f32 %v1751, %v1756
    %v1758 = vmul.f32 %v1752, %v1756
    %v1759 = vlaneseq
    %v1760 = vshrl.u32 %v1759, 7
    %v1761 = vsub.s32 4, %v1760
    %v1762 = vrot.slane %v167, %v1761
    %v1763 = vadd.f32 %v1757, %v1762
    %v1764 = vadd.f32 %v1758, %v1762
    %v1766 = vsel %vm168, %v1763, 0
    %v1769 = vsel %vm168, %v1764, 0
    %1771 = vmatprep.subr.mxu0 0.0
    %1772 = vmatpush1.msra.mxu0 0.0
    %1773 = vmatprep.subr.mxu0 0.0
    %1774 = vmatpush1.msra.mxu0 0.0
    %1775 = vmatprep.subr.mxu0 0.0
    %1776 = vmatpush1.msra.mxu0 0.0
    %1777 = vmatprep.subr.mxu0 0.0
    %1778 = vmatpush1.msra.mxu0 0.0
    %1779 = vmatprep.subr.mxu0 0.0
    %1780 = vmatpush1.msra.mxu0 0.0
    %1781 = vmatprep.subr.mxu0 0.0
    %1782 = vmatpush1.msra.mxu0 0.0
    %1783 = vmatprep.subr.mxu0 0.0
    %1784 = vmatpush1.msra.mxu0 0.0
    %1785 = vmatprep.subr.mxu0 0.0
    %1786 = vmatpush1.msra.mxu0 0.0
    %1787 = vmatprep.subr.mxu0 0.0
    %1788 = vmatpush1.msra.mxu0 0.0
    %1789 = vmatprep.subr.mxu0 0.0
    %1790 = vmatpush1.msra.mxu0 0.0
    %1791 = vmatprep.subr.mxu0 0.0
    %1792 = vmatpush1.msra.mxu0 0.0
    %1793 = vmatprep.subr.mxu0 0.0
    %1794 = vmatpush1.msra.mxu0 0.0
    %1795 = vmatprep.subr.mxu0 %v150
    %1796 = vmatpush1.msra.mxu0 %v149
    %1797 = vmatprep.subr.mxu0 %v148
    %1798 = vmatpush1.msra.mxu0 %v147
    %1799 = vmatprep.subr.mxu0 %v146
    %1800 = vmatpush1.msra.mxu0 %v145
    %1801 = vmatprep.subr.mxu0 %v144
    %1802 = vmatpush1.msra.mxu0 %v143
    %1803 = vmatprep.subr.mxu0 0.0
    %1804 = vmatpush2.msra.mxu0 0.0
    %1805 = vmatprep.subr.mxu0 0.0
    %1806 = vmatpush2.msra.mxu0 0.0
    %1807 = vmatprep.subr.mxu0 0.0
    %1808 = vmatpush2.msra.mxu0 0.0
    %1809 = vmatprep.subr.mxu0 0.0
    %1810 = vmatpush2.msra.mxu0 0.0
    %1811 = vmatprep.subr.mxu0 0.0
    %1812 = vmatpush2.msra.mxu0 0.0
    %1813 = vmatprep.subr.mxu0 0.0
    %1814 = vmatpush2.msra.mxu0 0.0
    %1815 = vmatprep.subr.mxu0 0.0
    %1816 = vmatpush2.msra.mxu0 0.0
    %1817 = vmatprep.subr.mxu0 0.0
    %1818 = vmatpush2.msra.mxu0 0.0
    %1819 = vmatprep.subr.mxu0 0.0
    %1820 = vmatpush2.msra.mxu0 0.0
    %1821 = vmatprep.subr.mxu0 0.0
    %1822 = vmatpush2.msra.mxu0 0.0
    %1823 = vmatprep.subr.mxu0 0.0
    %1824 = vmatpush2.msra.mxu0 0.0
    %1825 = vmatprep.subr.mxu0 0.0
    %1826 = vmatpush2.msra.mxu0 0.0
    %1827 = vmatprep.subr.mxu0 0.0
    %1828 = vmatpush2.msra.mxu0 0.0
    %1829 = vmatprep.subr.mxu0 0.0
    %1830 = vmatpush2.msra.mxu0 0.0
    %1831 = vmatprep.subr.mxu0 0.0
    %1832 = vmatpush2.msra.mxu0 0.0
    %1833 = vmatprep.subr.mxu0 0.0
    %1834 = vmatpush2.msra.mxu0 0.0
    %1835 = vmatprep.mubr.f32.mxu0 0.0
    %1836 = vmatmul.mubr.f32.gmra.mxu0 %v1766
    %v1837 = vpop.f32.mrf.mxu0
    %v1838 = vadd.f32 0.0, %v1837
    %v1839 = vpop.f32.mrf.mxu0
    %v1840 = vadd.f32 0.0, %v1839
    %1841 = vmatprep.mubr.f32.mxu0 0.0
    %1842 = vmatmul.mubr.f32.gmra.mxu0 %v1769
    %v1843 = vpop.f32.mrf.mxu0
    %v1844 = vadd.f32 0.0, %v1843
    %v1845 = vpop.f32.mrf.mxu0
    %v1846 = vadd.f32 0.0, %v1845
    %1847 = vdwg.mxu0
    %v1848 = vlaneseq
    %v1849 = vshrl.u32 %v1848, 7
    %v1850 = vsub.s32 6, %v1849
    %v1851 = vrot.slane %v167, %v1850
    %v1852 = vadd.f32 %v1838, %v1851
    %v1853 = vadd.f32 %v1844, %v1851
    %v1854 = vlaneseq
    %v1855 = vshrl.u32 %v1854, 7
    %v1856 = vsub.s32 7, %v1855
    %v1857 = vrot.slane %v167, %v1856
    %v1858 = vadd.f32 %v1840, %v1857
    %v1859 = vadd.f32 %v1846, %v1857
    %v1860 = vmul.f32 %v1858, 0.5
    %v1861 = vmul.f32 %v1859, 0.5
    %v1862 = vmul.f32 %v1858, 0.70710677
    %v1863 = vmul.f32 %v1859, 0.70710677
    %vm1864 = vcmp.ge.f32.partialorder %v1862, 0.0
    %vm1865 = vcmp.ge.f32.partialorder %v1863, 0.0
    %v1866 = vsel %vm1864, 1.0, -1.0
    %v1867 = vsel %vm1865, 1.0, -1.0
    %v1868 = vand.u32 2147483647, %v1862
    %v1869 = vand.u32 2147483647, %v1863
    %v1870 = vmul.f32 %v1868, 0.3275911
    %v1871 = vmul.f32 %v1869, 0.3275911
    %v1872 = vadd.f32 %v1870, 1.0
    %v1873 = vadd.f32 %v1871, 1.0
    %v1874 = vrcp.pop %v1872
    %v1875 = vmul.f32 1.0, %v1874
    %v1876 = vrcp.pop %v1873
    %v1877 = vmul.f32 1.0, %v1876
    %v1878 = vmul.f32 %v1875, 1.0614054
    %v1879 = vmul.f32 %v1877, 1.0614054
    %v1880 = vadd.f32 %v1878, -1.4531521
    %v1881 = vadd.f32 %v1879, -1.4531521
    %v1882 = vmul.f32 %v1880, %v1875
    %v1883 = vmul.f32 %v1881, %v1877
    %v1884 = vadd.f32 %v1882, 1.4214138
    %v1885 = vadd.f32 %v1883, 1.4214138
    %v1886 = vmul.f32 %v1884, %v1875
    %v1887 = vmul.f32 %v1885, %v1877
    %v1888 = vadd.f32 %v1886, -0.28449672
    %v1889 = vadd.f32 %v1887, -0.28449672
    %v1890 = vmul.f32 %v1888, %v1875
    %v1891 = vmul.f32 %v1889, %v1877
    %v1892 = vadd.f32 %v1890, 0.2548296
    %v1893 = vadd.f32 %v1891, 0.2548296
    %v1894 = vmul.f32 %v1892, %v1875
    %v1895 = vmul.f32 %v1893, %v1877
    %v1896 = vsub.f32 0.0, %v1868
    %v1897 = vsub.f32 0.0, %v1869
    %v1898 = vmul.f32 %v1896, %v1868
    %v1899 = vmul.f32 %v1897, %v1869
    %v1900 = vmul.f32 %v1898, 1.442695
    %v1901 = vpow.pop %v1900
    %v1902 = vmul.f32 %v1899, 1.442695
    %v1903 = vpow.pop %v1902
    %v1904 = vmul.f32 %v1894, %v1901
    %v1905 = vmul.f32 %v1895, %v1903
    %v1906 = vsub.f32 1.0, %v1904
    %v1907 = vsub.f32 1.0, %v1905
    %v1908 = vmul.f32 %v1866, %v1906
    %v1909 = vmul.f32 %v1867, %v1907
    %v1910 = vadd.f32 %v1908, 1.0
    %v1911 = vadd.f32 %v1909, 1.0
    %v1912 = vmul.f32 %v1860, %v1910
    %v1913 = vmul.f32 %v1861, %v1911
    %v1914 = vmul.f32 %v1852, %v1912
    %v1915 = vmul.f32 %v1853, %v1913
    %v1916 = vlaneseq
    %v1917 = vshrl.u32 %v1916, 7
    %v1918 = vsub.s32 5, %v1917
    %v1919 = vrot.slane %v167, %v1918
    %1920 = vmatprep.subr.mxu0 0.0
    %1921 = vmatpush1.msra.mxu0 %v166
    %1922 = vmatprep.subr.mxu0 0.0
    %1923 = vmatpush1.msra.mxu0 %v165
    %1924 = vmatprep.subr.mxu0 0.0
    %1925 = vmatpush1.msra.mxu0 %v164
    %1926 = vmatprep.subr.mxu0 0.0
    %1927 = vmatpush1.msra.mxu0 %v163
    %1928 = vmatprep.subr.mxu0 0.0
    %1929 = vmatpush1.msra.mxu0 %v162
    %1930 = vmatprep.subr.mxu0 0.0
    %1931 = vmatpush1.msra.mxu0 %v161
    %1932 = vmatprep.subr.mxu0 0.0
    %1933 = vmatpush1.msra.mxu0 %v160
    %1934 = vmatprep.subr.mxu0 0.0
    %1935 = vmatpush1.msra.mxu0 %v159
    %1936 = vmatprep.subr.mxu0 0.0
    %1937 = vmatpush1.msra.mxu0 %v158
    %1938 = vmatprep.subr.mxu0 0.0
    %1939 = vmatpush1.msra.mxu0 %v157
    %1940 = vmatprep.subr.mxu0 0.0
    %1941 = vmatpush1.msra.mxu0 %v156
    %1942 = vmatprep.subr.mxu0 0.0
    %1943 = vmatpush1.msra.mxu0 %v155
    %1944 = vmatprep.subr.mxu0 0.0
    %1945 = vmatpush1.msra.mxu0 %v154
    %1946 = vmatprep.subr.mxu0 0.0
    %1947 = vmatpush1.msra.mxu0 %v153
    %1948 = vmatprep.subr.mxu0 0.0
    %1949 = vmatpush1.msra.mxu0 %v152
    %1950 = vmatprep.subr.mxu0 0.0
    %1951 = vmatpush1.msra.mxu0 %v151
    %1952 = vmatprep.subr.mxu0 0.0
    %1953 = vmatpush2.msra.mxu0 0.0
    %1954 = vmatprep.subr.mxu0 0.0
    %1955 = vmatpush2.msra.mxu0 0.0
    %1956 = vmatprep.subr.mxu0 0.0
    %1957 = vmatpush2.msra.mxu0 0.0
    %1958 = vmatprep.subr.mxu0 0.0
    %1959 = vmatpush2.msra.mxu0 0.0
    %1960 = vmatprep.subr.mxu0 0.0
    %1961 = vmatpush2.msra.mxu0 0.0
    %1962 = vmatprep.subr.mxu0 0.0
    %1963 = vmatpush2.msra.mxu0 0.0
    %1964 = vmatprep.subr.mxu0 0.0
    %1965 = vmatpush2.msra.mxu0 0.0
    %1966 = vmatprep.subr.mxu0 0.0
    %1967 = vmatpush2.msra.mxu0 0.0
    %1968 = vmatprep.subr.mxu0 0.0
    %1969 = vmatpush2.msra.mxu0 0.0
    %1970 = vmatprep.subr.mxu0 0.0
    %1971 = vmatpush2.msra.mxu0 0.0
    %1972 = vmatprep.subr.mxu0 0.0
    %1973 = vmatpush2.msra.mxu0 0.0
    %1974 = vmatprep.subr.mxu0 0.0
    %1975 = vmatpush2.msra.mxu0 0.0
    %1976 = vmatprep.subr.mxu0 0.0
    %1977 = vmatpush2.msra.mxu0 0.0
    %1978 = vmatprep.subr.mxu0 0.0
    %1979 = vmatpush2.msra.mxu0 0.0
    %1980 = vmatprep.subr.mxu0 0.0
    %1981 = vmatpush2.msra.mxu0 0.0
    %1982 = vmatprep.subr.mxu0 0.0
    %1983 = vmatpush2.msra.mxu0 0.0
    %1984 = vmatprep.mubr.f32.mxu0 0.0
    %1985 = vmatmul.mubr.f32.gmra.mxu0 %v1914
    %v1986 = vpop.f32.mrf.mxu0
    %v1987 = vadd.f32 %v1919, %v1986
    %v1988 = vpop.f32.mrf.mxu0
    %1989 = vmatprep.mubr.f32.mxu0 0.0
    %1990 = vmatmul.mubr.f32.gmra.mxu0 %v1915
    %v1991 = vpop.f32.mrf.mxu0
    %v1992 = vadd.f32 %v1919, %v1991
    %v1993 = vpop.f32.mrf.mxu0
    %1994 = vdwg.mxu0
    %v1995 = vadd.f32 %v1987, %v1725
    %v1996 = vadd.f32 %v1992, %v1726
    %s1997 = scalar_lea.vmem %s2, 64
    %v1998 = vld [vmem:[%s1997] sm:$0xff]
    %v1999 = vld [vmem:[%s1997 + $0x8] sm:$0xff]
    %v2000 = vld [vmem:[%s1997 + $0x10] sm:$0xff]
    %v2001 = vld [vmem:[%s1997 + $0x18] sm:$0xff]
    %v2002 = vld [vmem:[%s1997 + $0x20] sm:$0xff]
    %v2003 = vld [vmem:[%s1997 + $0x28] sm:$0xff]
    %v2004 = vld [vmem:[%s1997 + $0x30] sm:$0xff]
    %v2005 = vld [vmem:[%s1997 + $0x38] sm:$0xff]
    %s2006 = scalar_lea.vmem %s3, 64
    %v2007 = vld [vmem:[%s2006] sm:$0xff]
    %v2008 = vld [vmem:[%s2006 + $0x8] sm:$0xff]
    %v2009 = vld [vmem:[%s2006 + $0x10] sm:$0xff]
    %v2010 = vld [vmem:[%s2006 + $0x18] sm:$0xff]
    %v2011 = vld [vmem:[%s2006 + $0x20] sm:$0xff]
    %v2012 = vld [vmem:[%s2006 + $0x28] sm:$0xff]
    %v2013 = vld [vmem:[%s2006 + $0x30] sm:$0xff]
    %v2014 = vld [vmem:[%s2006 + $0x38] sm:$0xff]
    %s2015 = scalar_lea.vmem %s4, 64
    %v2016 = vld [vmem:[%s2015] sm:$0xff]
    %v2017 = vld [vmem:[%s2015 + $0x8] sm:$0xff]
    %v2018 = vld [vmem:[%s2015 + $0x10] sm:$0xff]
    %v2019 = vld [vmem:[%s2015 + $0x18] sm:$0xff]
    %v2020 = vld [vmem:[%s2015 + $0x20] sm:$0xff]
    %v2021 = vld [vmem:[%s2015 + $0x28] sm:$0xff]
    %v2022 = vld [vmem:[%s2015 + $0x30] sm:$0xff]
    %v2023 = vld [vmem:[%s2015 + $0x38] sm:$0xff]
    %s2024 = scalar_lea.vmem %s5, 128
    %v2025 = vld [vmem:[%s2024] sm:$0xff]
    %v2026 = vld [vmem:[%s2024 + $0x8] sm:$0xff]
    %v2027 = vld [vmem:[%s2024 + $0x10] sm:$0xff]
    %v2028 = vld [vmem:[%s2024 + $0x18] sm:$0xff]
    %v2029 = vld [vmem:[%s2024 + $0x20] sm:$0xff]
    %v2030 = vld [vmem:[%s2024 + $0x28] sm:$0xff]
    %v2031 = vld [vmem:[%s2024 + $0x30] sm:$0xff]
    %v2032 = vld [vmem:[%s2024 + $0x38] sm:$0xff]
    %v2033 = vld [vmem:[%s2024 + $0x40] sm:$0xff]
    %v2034 = vld [vmem:[%s2024 + $0x48] sm:$0xff]
    %v2035 = vld [vmem:[%s2024 + $0x50] sm:$0xff]
    %v2036 = vld [vmem:[%s2024 + $0x58] sm:$0xff]
    %v2037 = vld [vmem:[%s2024 + $0x60] sm:$0xff]
    %v2038 = vld [vmem:[%s2024 + $0x68] sm:$0xff]
    %v2039 = vld [vmem:[%s2024 + $0x70] sm:$0xff]
    %v2040 = vld [vmem:[%s2024 + $0x78] sm:$0xff]
    %s2041 = scalar_lea.vmem %s6, 8
    %v2042 = vld [vmem:[%s2041] sm:$0xff]
    %v2043 = vsel %vm168, %v1995, 0.0
    %2044 = vadd.xlane.f32.xlu0 %v2043
    %v2045 = vpop.xlane.xlu0 %2044
    %v2046 = vsel %vm168, %v1996, 0.0
    %2047 = vadd.xlane.f32.xlu0 %v2046
    %v2048 = vpop.xlane.xlu0 %2047
    %v2049 = vmul.f32 %v2045, %v175
    %v2050 = vmul.f32 %v2048, %v175
    %v2051 = vsub.f32 %v1995, %v2049
    %v2052 = vsub.f32 %v1996, %v2050
    %v2053 = vmul.f32 %v2051, %v2051
    %v2054 = vmul.f32 %v2052, %v2052
    %v2055 = vsel %vm168, %v2053, 0.0
    %2056 = vadd.xlane.f32.xlu0 %v2055
    %v2057 = vpop.xlane.xlu0 %2056
    %v2058 = vsel %vm168, %v2054, 0.0
    %2059 = vadd.xlane.f32.xlu0 %v2058
    %v2060 = vpop.xlane.xlu0 %2059
    %v2061 = vmul.f32 %v2057, %v175
    %v2062 = vmul.f32 %v2060, %v175
    %v2063 = vadd.f32 %v2061, 1e-05
    %v2064 = vadd.f32 %v2062, 1e-05
    %v2065 = vrsqrt.pop %v2063
    %v2066 = vrsqrt.pop %v2064
    %v2067 = vmul.f32 %v2051, %v2065
    %v2068 = vmul.f32 %v2052, %v2066
    %v2069 = vlaneseq
    %v2070 = vshrl.u32 %v2069, 7
    %v2071 = vsub.s32 0, %v2070
    %v2072 = vrot.slane %v2042, %v2071
    %v2073 = vmul.f32 %v2067, %v2072
    %v2074 = vmul.f32 %v2068, %v2072
    %v2075 = vlaneseq
    %v2076 = vshrl.u32 %v2075, 7
    %v2077 = vsub.s32 1, %v2076
    %v2078 = vrot.slane %v2042, %v2077
    %v2079 = vadd.f32 %v2073, %v2078
    %v2080 = vadd.f32 %v2074, %v2078
    %v2082 = vsel %vm168, %v2079, 0
    %v2085 = vsel %vm168, %v2080, 0
    %2087 = vmatprep.subr.mxu0 0.0
    %2088 = vmatpush1.msra.mxu0 0.0
    %2089 = vmatprep.subr.mxu0 0.0
    %2090 = vmatpush1.msra.mxu0 0.0
    %2091 = vmatprep.subr.mxu0 0.0
    %2092 = vmatpush1.msra.mxu0 0.0
    %2093 = vmatprep.subr.mxu0 0.0
    %2094 = vmatpush1.msra.mxu0 0.0
    %2095 = vmatprep.subr.mxu0 0.0
    %2096 = vmatpush1.msra.mxu0 0.0
    %2097 = vmatprep.subr.mxu0 0.0
    %2098 = vmatpush1.msra.mxu0 0.0
    %2099 = vmatprep.subr.mxu0 0.0
    %2100 = vmatpush1.msra.mxu0 0.0
    %2101 = vmatprep.subr.mxu0 0.0
    %2102 = vmatpush1.msra.mxu0 0.0
    %2103 = vmatprep.subr.mxu0 0.0
    %2104 = vmatpush1.msra.mxu0 0.0
    %2105 = vmatprep.subr.mxu0 0.0
    %2106 = vmatpush1.msra.mxu0 0.0
    %2107 = vmatprep.subr.mxu0 0.0
    %2108 = vmatpush1.msra.mxu0 0.0
    %2109 = vmatprep.subr.mxu0 0.0
    %2110 = vmatpush1.msra.mxu0 0.0
    %2111 = vmatprep.subr.mxu0 %v2005
    %2112 = vmatpush1.msra.mxu0 %v2004
    %2113 = vmatprep.subr.mxu0 %v2003
    %2114 = vmatpush1.msra.mxu0 %v2002
    %2115 = vmatprep.subr.mxu0 %v2001
    %2116 = vmatpush1.msra.mxu0 %v2000
    %2117 = vmatprep.subr.mxu0 %v1999
    %2118 = vmatpush1.msra.mxu0 %v1998
    %2119 = vmatprep.subr.mxu0 0.0
    %2120 = vmatpush2.msra.mxu0 0.0
    %2121 = vmatprep.subr.mxu0 0.0
    %2122 = vmatpush2.msra.mxu0 0.0
    %2123 = vmatprep.subr.mxu0 0.0
    %2124 = vmatpush2.msra.mxu0 0.0
    %2125 = vmatprep.subr.mxu0 0.0
    %2126 = vmatpush2.msra.mxu0 0.0
    %2127 = vmatprep.subr.mxu0 0.0
    %2128 = vmatpush2.msra.mxu0 0.0
    %2129 = vmatprep.subr.mxu0 0.0
    %2130 = vmatpush2.msra.mxu0 0.0
    %2131 = vmatprep.subr.mxu0 0.0
    %2132 = vmatpush2.msra.mxu0 0.0
    %2133 = vmatprep.subr.mxu0 0.0
    %2134 = vmatpush2.msra.mxu0 0.0
    %2135 = vmatprep.subr.mxu0 0.0
    %2136 = vmatpush2.msra.mxu0 0.0
    %2137 = vmatprep.subr.mxu0 0.0
    %2138 = vmatpush2.msra.mxu0 0.0
    %2139 = vmatprep.subr.mxu0 0.0
    %2140 = vmatpush2.msra.mxu0 0.0
    %2141 = vmatprep.subr.mxu0 0.0
    %2142 = vmatpush2.msra.mxu0 0.0
    %2143 = vmatprep.subr.mxu0 0.0
    %2144 = vmatpush2.msra.mxu0 0.0
    %2145 = vmatprep.subr.mxu0 0.0
    %2146 = vmatpush2.msra.mxu0 0.0
    %2147 = vmatprep.subr.mxu0 0.0
    %2148 = vmatpush2.msra.mxu0 0.0
    %2149 = vmatprep.subr.mxu0 0.0
    %2150 = vmatpush2.msra.mxu0 0.0
    %2151 = vmatprep.mubr.f32.mxu0 0.0
    %2152 = vmatmul.mubr.f32.gmra.mxu0 %v2082
    %v2153 = vpop.f32.mrf.mxu0
    %v2154 = vadd.f32 0.0, %v2153
    %v2155 = vpop.f32.mrf.mxu0
    %v2156 = vadd.f32 0.0, %v2155
    %2157 = vmatprep.mubr.f32.mxu0 0.0
    %2158 = vmatmul.mubr.f32.gmra.mxu0 %v2085
    %v2159 = vpop.f32.mrf.mxu0
    %v2160 = vadd.f32 0.0, %v2159
    %v2161 = vpop.f32.mrf.mxu0
    %v2162 = vadd.f32 0.0, %v2161
    %2163 = vdwg.mxu0
    %2165 = vrot.lane.b32.xlu0 %v2154, 64
    %v2166 = vpop.permute.xlu0 %2165
    %v2167 = vsel %vm45, %v2154, 0
    %v2169 = vsel %vm45, %v2166, 0
    %2171 = vmatprep.subr.mxu0 0.0
    %2172 = vmatpush1.xpose.msra.mxu0 0.0
    %2173 = vmatprep.subr.mxu0 0.0
    %2174 = vmatpush1.xpose.msra.mxu0 0.0
    %2175 = vmatprep.subr.mxu0 0.0
    %2176 = vmatpush1.xpose.msra.mxu0 0.0
    %2177 = vmatprep.subr.mxu0 0.0
    %2178 = vmatpush1.xpose.msra.mxu0 0.0
    %2179 = vmatprep.subr.mxu0 0.0
    %2180 = vmatpush1.xpose.msra.mxu0 0.0
    %2181 = vmatprep.subr.mxu0 0.0
    %2182 = vmatpush1.xpose.msra.mxu0 0.0
    %2183 = vmatprep.subr.mxu0 0.0
    %2184 = vmatpush1.xpose.msra.mxu0 0.0
    %2185 = vmatprep.subr.mxu0 0.0
    %2186 = vmatpush1.xpose.msra.mxu0 0.0
    %2187 = vmatprep.subr.mxu0 0.0
    %2188 = vmatpush1.xpose.msra.mxu0 0.0
    %2189 = vmatprep.subr.mxu0 0.0
    %2190 = vmatpush1.xpose.msra.mxu0 0.0
    %2191 = vmatprep.subr.mxu0 0.0
    %2192 = vmatpush1.xpose.msra.mxu0 0.0
    %2193 = vmatprep.subr.mxu0 0.0
    %2194 = vmatpush1.xpose.msra.mxu0 0.0
    %2195 = vmatprep.subr.mxu0 0.0
    %2196 = vmatpush1.xpose.msra.mxu0 0.0
    %2197 = vmatprep.subr.mxu0 0.0
    %2198 = vmatpush1.xpose.msra.mxu0 0.0
    %2199 = vmatprep.subr.mxu0 0.0
    %2200 = vmatpush1.xpose.msra.mxu0 0.0
    %2201 = vmatprep.subr.mxu0 0.0
    %2202 = vmatpush1.xpose.msra.mxu0 %v2169
    %2203 = vmatprep.subr.mxu0 0.0
    %2204 = vmatpush2.xpose.msra.mxu0 0.0
    %2205 = vmatprep.subr.mxu0 0.0
    %2206 = vmatpush2.xpose.msra.mxu0 0.0
    %2207 = vmatprep.subr.mxu0 0.0
    %2208 = vmatpush2.xpose.msra.mxu0 0.0
    %2209 = vmatprep.subr.mxu0 0.0
    %2210 = vmatpush2.xpose.msra.mxu0 0.0
    %2211 = vmatprep.subr.mxu0 0.0
    %2212 = vmatpush2.xpose.msra.mxu0 0.0
    %2213 = vmatprep.subr.mxu0 0.0
    %2214 = vmatpush2.xpose.msra.mxu0 0.0
    %2215 = vmatprep.subr.mxu0 0.0
    %2216 = vmatpush2.xpose.msra.mxu0 0.0
    %2217 = vmatprep.subr.mxu0 0.0
    %2218 = vmatpush2.xpose.msra.mxu0 0.0
    %2219 = vmatprep.subr.mxu0 0.0
    %2220 = vmatpush2.xpose.msra.mxu0 0.0
    %2221 = vmatprep.subr.mxu0 0.0
    %2222 = vmatpush2.xpose.msra.mxu0 0.0
    %2223 = vmatprep.subr.mxu0 0.0
    %2224 = vmatpush2.xpose.msra.mxu0 0.0
    %2225 = vmatprep.subr.mxu0 0.0
    %2226 = vmatpush2.xpose.msra.mxu0 0.0
    %2227 = vmatprep.subr.mxu0 0.0
    %2228 = vmatpush2.xpose.msra.mxu0 0.0
    %2229 = vmatprep.subr.mxu0 0.0
    %2230 = vmatpush2.xpose.msra.mxu0 0.0
    %2231 = vmatprep.subr.mxu0 0.0
    %2232 = vmatpush2.xpose.msra.mxu0 0.0
    %2233 = vmatprep.subr.mxu0 0.0
    %2234 = vmatpush2.xpose.msra.mxu0 0.0
    %2235 = vmatprep.mubr.f32.mxu0 0.0
    %2236 = vmatmul.mubr.f32.gmra.mxu0 %v2167
    %v2237 = vpop.f32.mrf.mxu0
    %v2238 = vadd.f32 0.0, %v2237
    %v2239 = vpop.f32.mrf.mxu0
    %2240 = vdwg.mxu0
    %2242 = vrot.lane.b32.xlu0 %v2160, 64
    %v2243 = vpop.permute.xlu0 %2242
    %v2244 = vsel %vm45, %v2160, 0
    %v2246 = vsel %vm45, %v2243, 0
    %2248 = vmatprep.subr.mxu0 0.0
    %2249 = vmatpush1.xpose.msra.mxu0 0.0
    %2250 = vmatprep.subr.mxu0 0.0
    %2251 = vmatpush1.xpose.msra.mxu0 0.0
    %2252 = vmatprep.subr.mxu0 0.0
    %2253 = vmatpush1.xpose.msra.mxu0 0.0
    %2254 = vmatprep.subr.mxu0 0.0
    %2255 = vmatpush1.xpose.msra.mxu0 0.0
    %2256 = vmatprep.subr.mxu0 0.0
    %2257 = vmatpush1.xpose.msra.mxu0 0.0
    %2258 = vmatprep.subr.mxu0 0.0
    %2259 = vmatpush1.xpose.msra.mxu0 0.0
    %2260 = vmatprep.subr.mxu0 0.0
    %2261 = vmatpush1.xpose.msra.mxu0 0.0
    %2262 = vmatprep.subr.mxu0 0.0
    %2263 = vmatpush1.xpose.msra.mxu0 0.0
    %2264 = vmatprep.subr.mxu0 0.0
    %2265 = vmatpush1.xpose.msra.mxu0 0.0
    %2266 = vmatprep.subr.mxu0 0.0
    %2267 = vmatpush1.xpose.msra.mxu0 0.0
    %2268 = vmatprep.subr.mxu0 0.0
    %2269 = vmatpush1.xpose.msra.mxu0 0.0
    %2270 = vmatprep.subr.mxu0 0.0
    %2271 = vmatpush1.xpose.msra.mxu0 0.0
    %2272 = vmatprep.subr.mxu0 0.0
    %2273 = vmatpush1.xpose.msra.mxu0 0.0
    %2274 = vmatprep.subr.mxu0 0.0
    %2275 = vmatpush1.xpose.msra.mxu0 0.0
    %2276 = vmatprep.subr.mxu0 0.0
    %2277 = vmatpush1.xpose.msra.mxu0 0.0
    %2278 = vmatprep.subr.mxu0 0.0
    %2279 = vmatpush1.xpose.msra.mxu0 %v2246
    %2280 = vmatprep.subr.mxu0 0.0
    %2281 = vmatpush2.xpose.msra.mxu0 0.0
    %2282 = vmatprep.subr.mxu0 0.0
    %2283 = vmatpush2.xpose.msra.mxu0 0.0
    %2284 = vmatprep.subr.mxu0 0.0
    %2285 = vmatpush2.xpose.msra.mxu0 0.0
    %2286 = vmatprep.subr.mxu0 0.0
    %2287 = vmatpush2.xpose.msra.mxu0 0.0
    %2288 = vmatprep.subr.mxu0 0.0
    %2289 = vmatpush2.xpose.msra.mxu0 0.0
    %2290 = vmatprep.subr.mxu0 0.0
    %2291 = vmatpush2.xpose.msra.mxu0 0.0
    %2292 = vmatprep.subr.mxu0 0.0
    %2293 = vmatpush2.xpose.msra.mxu0 0.0
    %2294 = vmatprep.subr.mxu0 0.0
    %2295 = vmatpush2.xpose.msra.mxu0 0.0
    %2296 = vmatprep.subr.mxu0 0.0
    %2297 = vmatpush2.xpose.msra.mxu0 0.0
    %2298 = vmatprep.subr.mxu0 0.0
    %2299 = vmatpush2.xpose.msra.mxu0 0.0
    %2300 = vmatprep.subr.mxu0 0.0
    %2301 = vmatpush2.xpose.msra.mxu0 0.0
    %2302 = vmatprep.subr.mxu0 0.0
    %2303 = vmatpush2.xpose.msra.mxu0 0.0
    %2304 = vmatprep.subr.mxu0 0.0
    %2305 = vmatpush2.xpose.msra.mxu0 0.0
    %2306 = vmatprep.subr.mxu0 0.0
    %2307 = vmatpush2.xpose.msra.mxu0 0.0
    %2308 = vmatprep.subr.mxu0 0.0
    %2309 = vmatpush2.xpose.msra.mxu0 0.0
    %2310 = vmatprep.subr.mxu0 0.0
    %2311 = vmatpush2.xpose.msra.mxu0 0.0
    %2312 = vmatprep.mubr.f32.mxu0 0.0
    %2313 = vmatmul.mubr.f32.gmra.mxu0 %v2244
    %v2314 = vpop.f32.mrf.mxu0
    %v2315 = vadd.f32 0.0, %v2314
    %v2316 = vpop.f32.mrf.mxu0
    %2317 = vdwg.mxu0
    %v2318 = vsel %vm445, %v2238, -inf
    %2319 = vmax.xlane.f32.xlu0 %v2318
    %v2320 = vpop.xlane.xlu0 %2319
    %v2321 = vsel %vm445, %v2315, -inf
    %2322 = vmax.xlane.f32.xlu0 %v2321
    %v2323 = vpop.xlane.xlu0 %2322
    %v2324 = vsub.f32 %v2238, %v2320
    %v2325 = vsub.f32 %v2315, %v2323
    %v2326 = vmul.f32 %v2324, 1.442695
    %v2327 = vpow.pop %v2326
    %v2328 = vmul.f32 %v2325, 1.442695
    %v2329 = vpow.pop %v2328
    %v2330 = vsel %vm445, %v2327, 0.0
    %2331 = vadd.xlane.f32.xlu0 %v2330
    %v2332 = vpop.xlane.xlu0 %2331
    %v2333 = vsel %vm445, %v2329, 0.0
    %2334 = vadd.xlane.f32.xlu0 %v2333
    %v2335 = vpop.xlane.xlu0 %2334
    %v2336 = vrcp.pop %v2332
    %v2337 = vmul.f32 %v2327, %v2336
    %v2338 = vrcp.pop %v2335
    %v2339 = vmul.f32 %v2329, %v2338
    %v2341 = vsel %vm445, %v2337, 0
    %2343 = vmatprep.subr.mxu0 0.0
    %2344 = vmatpush1.msra.mxu0 0.0
    %2345 = vmatprep.subr.mxu0 0.0
    %2346 = vmatpush1.msra.mxu0 0.0
    %2347 = vmatprep.subr.mxu0 0.0
    %2348 = vmatpush1.msra.mxu0 0.0
    %2349 = vmatprep.subr.mxu0 0.0
    %2350 = vmatpush1.msra.mxu0 0.0
    %2351 = vmatprep.subr.mxu0 0.0
    %2352 = vmatpush1.msra.mxu0 0.0
    %2353 = vmatprep.subr.mxu0 0.0
    %2354 = vmatpush1.msra.mxu0 0.0
    %2355 = vmatprep.subr.mxu0 0.0
    %2356 = vmatpush1.msra.mxu0 0.0
    %2357 = vmatprep.subr.mxu0 0.0
    %2358 = vmatpush1.msra.mxu0 0.0
    %2359 = vmatprep.subr.mxu0 0.0
    %2360 = vmatpush1.msra.mxu0 0.0
    %2361 = vmatprep.subr.mxu0 0.0
    %2362 = vmatpush1.msra.mxu0 0.0
    %2363 = vmatprep.subr.mxu0 0.0
    %2364 = vmatpush1.msra.mxu0 0.0
    %2365 = vmatprep.subr.mxu0 0.0
    %2366 = vmatpush1.msra.mxu0 0.0
    %2367 = vmatprep.subr.mxu0 0.0
    %2368 = vmatpush1.msra.mxu0 0.0
    %2369 = vmatprep.subr.mxu0 0.0
    %2370 = vmatpush1.msra.mxu0 0.0
    %2371 = vmatprep.subr.mxu0 0.0
    %2372 = vmatpush1.msra.mxu0 0.0
    %2373 = vmatprep.subr.mxu0 0.0
    %2374 = vmatpush1.msra.mxu0 %v2156
    %2375 = vmatprep.subr.mxu0 0.0
    %2376 = vmatpush2.msra.mxu0 0.0
    %2377 = vmatprep.subr.mxu0 0.0
    %2378 = vmatpush2.msra.mxu0 0.0
    %2379 = vmatprep.subr.mxu0 0.0
    %2380 = vmatpush2.msra.mxu0 0.0
    %2381 = vmatprep.subr.mxu0 0.0
    %2382 = vmatpush2.msra.mxu0 0.0
    %2383 = vmatprep.subr.mxu0 0.0
    %2384 = vmatpush2.msra.mxu0 0.0
    %2385 = vmatprep.subr.mxu0 0.0
    %2386 = vmatpush2.msra.mxu0 0.0
    %2387 = vmatprep.subr.mxu0 0.0
    %2388 = vmatpush2.msra.mxu0 0.0
    %2389 = vmatprep.subr.mxu0 0.0
    %2390 = vmatpush2.msra.mxu0 0.0
    %2391 = vmatprep.subr.mxu0 0.0
    %2392 = vmatpush2.msra.mxu0 0.0
    %2393 = vmatprep.subr.mxu0 0.0
    %2394 = vmatpush2.msra.mxu0 0.0
    %2395 = vmatprep.subr.mxu0 0.0
    %2396 = vmatpush2.msra.mxu0 0.0
    %2397 = vmatprep.subr.mxu0 0.0
    %2398 = vmatpush2.msra.mxu0 0.0
    %2399 = vmatprep.subr.mxu0 0.0
    %2400 = vmatpush2.msra.mxu0 0.0
    %2401 = vmatprep.subr.mxu0 0.0
    %2402 = vmatpush2.msra.mxu0 0.0
    %2403 = vmatprep.subr.mxu0 0.0
    %2404 = vmatpush2.msra.mxu0 0.0
    %2405 = vmatprep.subr.mxu0 0.0
    %2406 = vmatpush2.msra.mxu0 0.0
    %2407 = vmatprep.mubr.f32.mxu0 0.0
    %2408 = vmatmul.mubr.f32.gmra.mxu0 %v2341
    %v2409 = vpop.f32.mrf.mxu0
    %v2410 = vadd.f32 0.0, %v2409
    %v2411 = vpop.f32.mrf.mxu0
    %2412 = vdwg.mxu0
    %v2414 = vsel %vm445, %v2339, 0
    %2416 = vmatprep.subr.mxu0 0.0
    %2417 = vmatpush1.msra.mxu0 0.0
    %2418 = vmatprep.subr.mxu0 0.0
    %2419 = vmatpush1.msra.mxu0 0.0
    %2420 = vmatprep.subr.mxu0 0.0
    %2421 = vmatpush1.msra.mxu0 0.0
    %2422 = vmatprep.subr.mxu0 0.0
    %2423 = vmatpush1.msra.mxu0 0.0
    %2424 = vmatprep.subr.mxu0 0.0
    %2425 = vmatpush1.msra.mxu0 0.0
    %2426 = vmatprep.subr.mxu0 0.0
    %2427 = vmatpush1.msra.mxu0 0.0
    %2428 = vmatprep.subr.mxu0 0.0
    %2429 = vmatpush1.msra.mxu0 0.0
    %2430 = vmatprep.subr.mxu0 0.0
    %2431 = vmatpush1.msra.mxu0 0.0
    %2432 = vmatprep.subr.mxu0 0.0
    %2433 = vmatpush1.msra.mxu0 0.0
    %2434 = vmatprep.subr.mxu0 0.0
    %2435 = vmatpush1.msra.mxu0 0.0
    %2436 = vmatprep.subr.mxu0 0.0
    %2437 = vmatpush1.msra.mxu0 0.0
    %2438 = vmatprep.subr.mxu0 0.0
    %2439 = vmatpush1.msra.mxu0 0.0
    %2440 = vmatprep.subr.mxu0 0.0
    %2441 = vmatpush1.msra.mxu0 0.0
    %2442 = vmatprep.subr.mxu0 0.0
    %2443 = vmatpush1.msra.mxu0 0.0
    %2444 = vmatprep.subr.mxu0 0.0
    %2445 = vmatpush1.msra.mxu0 0.0
    %2446 = vmatprep.subr.mxu0 0.0
    %2447 = vmatpush1.msra.mxu0 %v2162
    %2448 = vmatprep.subr.mxu0 0.0
    %2449 = vmatpush2.msra.mxu0 0.0
    %2450 = vmatprep.subr.mxu0 0.0
    %2451 = vmatpush2.msra.mxu0 0.0
    %2452 = vmatprep.subr.mxu0 0.0
    %2453 = vmatpush2.msra.mxu0 0.0
    %2454 = vmatprep.subr.mxu0 0.0
    %2455 = vmatpush2.msra.mxu0 0.0
    %2456 = vmatprep.subr.mxu0 0.0
    %2457 = vmatpush2.msra.mxu0 0.0
    %2458 = vmatprep.subr.mxu0 0.0
    %2459 = vmatpush2.msra.mxu0 0.0
    %2460 = vmatprep.subr.mxu0 0.0
    %2461 = vmatpush2.msra.mxu0 0.0
    %2462 = vmatprep.subr.mxu0 0.0
    %2463 = vmatpush2.msra.mxu0 0.0
    %2464 = vmatprep.subr.mxu0 0.0
    %2465 = vmatpush2.msra.mxu0 0.0
    %2466 = vmatprep.subr.mxu0 0.0
    %2467 = vmatpush2.msra.mxu0 0.0
    %2468 = vmatprep.subr.mxu0 0.0
    %2469 = vmatpush2.msra.mxu0 0.0
    %2470 = vmatprep.subr.mxu0 0.0
    %2471 = vmatpush2.msra.mxu0 0.0
    %2472 = vmatprep.subr.mxu0 0.0
    %2473 = vmatpush2.msra.mxu0 0.0
    %2474 = vmatprep.subr.mxu0 0.0
    %2475 = vmatpush2.msra.mxu0 0.0
    %2476 = vmatprep.subr.mxu0 0.0
    %2477 = vmatpush2.msra.mxu0 0.0
    %2478 = vmatprep.subr.mxu0 0.0
    %2479 = vmatpush2.msra.mxu0 0.0
    %2480 = vmatprep.mubr.f32.mxu0 0.0
    %2481 = vmatmul.mubr.f32.gmra.mxu0 %v2414
    %v2482 = vpop.f32.mrf.mxu0
    %v2483 = vadd.f32 0.0, %v2482
    %v2484 = vpop.f32.mrf.mxu0
    %2485 = vdwg.mxu0
    %2486 = vrot.lane.b32.xlu0 %v2154, 112
    %v2487 = vpop.permute.xlu0 %2486
    %2488 = vrot.lane.b32.xlu0 %v2154, 48
    %v2489 = vpop.permute.xlu0 %2488
    %v2490 = vsel %vm45, %v2487, 0
    %v2492 = vsel %vm45, %v2489, 0
    %2494 = vmatprep.subr.mxu0 0.0
    %2495 = vmatpush1.xpose.msra.mxu0 0.0
    %2496 = vmatprep.subr.mxu0 0.0
    %2497 = vmatpush1.xpose.msra.mxu0 0.0
    %2498 = vmatprep.subr.mxu0 0.0
    %2499 = vmatpush1.xpose.msra.mxu0 0.0
    %2500 = vmatprep.subr.mxu0 0.0
    %2501 = vmatpush1.xpose.msra.mxu0 0.0
    %2502 = vmatprep.subr.mxu0 0.0
    %2503 = vmatpush1.xpose.msra.mxu0 0.0
    %2504 = vmatprep.subr.mxu0 0.0
    %2505 = vmatpush1.xpose.msra.mxu0 0.0
    %2506 = vmatprep.subr.mxu0 0.0
    %2507 = vmatpush1.xpose.msra.mxu0 0.0
    %2508 = vmatprep.subr.mxu0 0.0
    %2509 = vmatpush1.xpose.msra.mxu0 0.0
    %2510 = vmatprep.subr.mxu0 0.0
    %2511 = vmatpush1.xpose.msra.mxu0 0.0
    %2512 = vmatprep.subr.mxu0 0.0
    %2513 = vmatpush1.xpose.msra.mxu0 0.0
    %2514 = vmatprep.subr.mxu0 0.0
    %2515 = vmatpush1.xpose.msra.mxu0 0.0
    %2516 = vmatprep.subr.mxu0 0.0
    %2517 = vmatpush1.xpose.msra.mxu0 0.0
    %2518 = vmatprep.subr.mxu0 0.0
    %2519 = vmatpush1.xpose.msra.mxu0 0.0
    %2520 = vmatprep.subr.mxu0 0.0
    %2521 = vmatpush1.xpose.msra.mxu0 0.0
    %2522 = vmatprep.subr.mxu0 0.0
    %2523 = vmatpush1.xpose.msra.mxu0 0.0
    %2524 = vmatprep.subr.mxu0 0.0
    %2525 = vmatpush1.xpose.msra.mxu0 %v2492
    %2526 = vmatprep.subr.mxu0 0.0
    %2527 = vmatpush2.xpose.msra.mxu0 0.0
    %2528 = vmatprep.subr.mxu0 0.0
    %2529 = vmatpush2.xpose.msra.mxu0 0.0
    %2530 = vmatprep.subr.mxu0 0.0
    %2531 = vmatpush2.xpose.msra.mxu0 0.0
    %2532 = vmatprep.subr.mxu0 0.0
    %2533 = vmatpush2.xpose.msra.mxu0 0.0
    %2534 = vmatprep.subr.mxu0 0.0
    %2535 = vmatpush2.xpose.msra.mxu0 0.0
    %2536 = vmatprep.subr.mxu0 0.0
    %2537 = vmatpush2.xpose.msra.mxu0 0.0
    %2538 = vmatprep.subr.mxu0 0.0
    %2539 = vmatpush2.xpose.msra.mxu0 0.0
    %2540 = vmatprep.subr.mxu0 0.0
    %2541 = vmatpush2.xpose.msra.mxu0 0.0
    %2542 = vmatprep.subr.mxu0 0.0
    %2543 = vmatpush2.xpose.msra.mxu0 0.0
    %2544 = vmatprep.subr.mxu0 0.0
    %2545 = vmatpush2.xpose.msra.mxu0 0.0
    %2546 = vmatprep.subr.mxu0 0.0
    %2547 = vmatpush2.xpose.msra.mxu0 0.0
    %2548 = vmatprep.subr.mxu0 0.0
    %2549 = vmatpush2.xpose.msra.mxu0 0.0
    %2550 = vmatprep.subr.mxu0 0.0
    %2551 = vmatpush2.xpose.msra.mxu0 0.0
    %2552 = vmatprep.subr.mxu0 0.0
    %2553 = vmatpush2.xpose.msra.mxu0 0.0
    %2554 = vmatprep.subr.mxu0 0.0
    %2555 = vmatpush2.xpose.msra.mxu0 0.0
    %2556 = vmatprep.subr.mxu0 0.0
    %2557 = vmatpush2.xpose.msra.mxu0 0.0
    %2558 = vmatprep.mubr.f32.mxu0 0.0
    %2559 = vmatmul.mubr.f32.gmra.mxu0 %v2490
    %v2560 = vpop.f32.mrf.mxu0
    %v2561 = vadd.f32 0.0, %v2560
    %v2562 = vpop.f32.mrf.mxu0
    %2563 = vdwg.mxu0
    %2564 = vrot.lane.b32.xlu0 %v2160, 112
    %v2565 = vpop.permute.xlu0 %2564
    %2566 = vrot.lane.b32.xlu0 %v2160, 48
    %v2567 = vpop.permute.xlu0 %2566
    %v2568 = vsel %vm45, %v2565, 0
    %v2570 = vsel %vm45, %v2567, 0
    %2572 = vmatprep.subr.mxu0 0.0
    %2573 = vmatpush1.xpose.msra.mxu0 0.0
    %2574 = vmatprep.subr.mxu0 0.0
    %2575 = vmatpush1.xpose.msra.mxu0 0.0
    %2576 = vmatprep.subr.mxu0 0.0
    %2577 = vmatpush1.xpose.msra.mxu0 0.0
    %2578 = vmatprep.subr.mxu0 0.0
    %2579 = vmatpush1.xpose.msra.mxu0 0.0
    %2580 = vmatprep.subr.mxu0 0.0
    %2581 = vmatpush1.xpose.msra.mxu0 0.0
    %2582 = vmatprep.subr.mxu0 0.0
    %2583 = vmatpush1.xpose.msra.mxu0 0.0
    %2584 = vmatprep.subr.mxu0 0.0
    %2585 = vmatpush1.xpose.msra.mxu0 0.0
    %2586 = vmatprep.subr.mxu0 0.0
    %2587 = vmatpush1.xpose.msra.mxu0 0.0
    %2588 = vmatprep.subr.mxu0 0.0
    %2589 = vmatpush1.xpose.msra.mxu0 0.0
    %2590 = vmatprep.subr.mxu0 0.0
    %2591 = vmatpush1.xpose.msra.mxu0 0.0
    %2592 = vmatprep.subr.mxu0 0.0
    %2593 = vmatpush1.xpose.msra.mxu0 0.0
    %2594 = vmatprep.subr.mxu0 0.0
    %2595 = vmatpush1.xpose.msra.mxu0 0.0
    %2596 = vmatprep.subr.mxu0 0.0
    %2597 = vmatpush1.xpose.msra.mxu0 0.0
    %2598 = vmatprep.subr.mxu0 0.0
    %2599 = vmatpush1.xpose.msra.mxu0 0.0
    %2600 = vmatprep.subr.mxu0 0.0
    %2601 = vmatpush1.xpose.msra.mxu0 0.0
    %2602 = vmatprep.subr.mxu0 0.0
    %2603 = vmatpush1.xpose.msra.mxu0 %v2570
    %2604 = vmatprep.subr.mxu0 0.0
    %2605 = vmatpush2.xpose.msra.mxu0 0.0
    %2606 = vmatprep.subr.mxu0 0.0
    %2607 = vmatpush2.xpose.msra.mxu0 0.0
    %2608 = vmatprep.subr.mxu0 0.0
    %2609 = vmatpush2.xpose.msra.mxu0 0.0
    %2610 = vmatprep.subr.mxu0 0.0
    %2611 = vmatpush2.xpose.msra.mxu0 0.0
    %2612 = vmatprep.subr.mxu0 0.0
    %2613 = vmatpush2.xpose.msra.mxu0 0.0
    %2614 = vmatprep.subr.mxu0 0.0
    %2615 = vmatpush2.xpose.msra.mxu0 0.0
    %2616 = vmatprep.subr.mxu0 0.0
    %2617 = vmatpush2.xpose.msra.mxu0 0.0
    %2618 = vmatprep.subr.mxu0 0.0
    %2619 = vmatpush2.xpose.msra.mxu0 0.0
    %2620 = vmatprep.subr.mxu0 0.0
    %2621 = vmatpush2.xpose.msra.mxu0 0.0
    %2622 = vmatprep.subr.mxu0 0.0
    %2623 = vmatpush2.xpose.msra.mxu0 0.0
    %2624 = vmatprep.subr.mxu0 0.0
    %2625 = vmatpush2.xpose.msra.mxu0 0.0
    %2626 = vmatprep.subr.mxu0 0.0
    %2627 = vmatpush2.xpose.msra.mxu0 0.0
    %2628 = vmatprep.subr.mxu0 0.0
    %2629 = vmatpush2.xpose.msra.mxu0 0.0
    %2630 = vmatprep.subr.mxu0 0.0
    %2631 = vmatpush2.xpose.msra.mxu0 0.0
    %2632 = vmatprep.subr.mxu0 0.0
    %2633 = vmatpush2.xpose.msra.mxu0 0.0
    %2634 = vmatprep.subr.mxu0 0.0
    %2635 = vmatpush2.xpose.msra.mxu0 0.0
    %2636 = vmatprep.mubr.f32.mxu0 0.0
    %2637 = vmatmul.mubr.f32.gmra.mxu0 %v2568
    %v2638 = vpop.f32.mrf.mxu0
    %v2639 = vadd.f32 0.0, %v2638
    %v2640 = vpop.f32.mrf.mxu0
    %2641 = vdwg.mxu0
    %v2642 = vsel %vm445, %v2561, -inf
    %2643 = vmax.xlane.f32.xlu0 %v2642
    %v2644 = vpop.xlane.xlu0 %2643
    %v2645 = vsel %vm445, %v2639, -inf
    %2646 = vmax.xlane.f32.xlu0 %v2645
    %v2647 = vpop.xlane.xlu0 %2646
    %v2648 = vsub.f32 %v2561, %v2644
    %v2649 = vsub.f32 %v2639, %v2647
    %v2650 = vmul.f32 %v2648, 1.442695
    %v2651 = vpow.pop %v2650
    %v2652 = vmul.f32 %v2649, 1.442695
    %v2653 = vpow.pop %v2652
    %v2654 = vsel %vm445, %v2651, 0.0
    %2655 = vadd.xlane.f32.xlu0 %v2654
    %v2656 = vpop.xlane.xlu0 %2655
    %v2657 = vsel %vm445, %v2653, 0.0
    %2658 = vadd.xlane.f32.xlu0 %v2657
    %v2659 = vpop.xlane.xlu0 %2658
    %v2660 = vrcp.pop %v2656
    %v2661 = vmul.f32 %v2651, %v2660
    %v2662 = vrcp.pop %v2659
    %v2663 = vmul.f32 %v2653, %v2662
    %2665 = vrot.lane.b32.xlu0 %v2156, 112
    %v2666 = vpop.permute.xlu0 %2665
    %v2669 = vsel %vm445, %v2661, 0
    %2671 = vmatprep.subr.mxu0 0.0
    %2672 = vmatpush1.msra.mxu0 0.0
    %2673 = vmatprep.subr.mxu0 0.0
    %2674 = vmatpush1.msra.mxu0 0.0
    %2675 = vmatprep.subr.mxu0 0.0
    %2676 = vmatpush1.msra.mxu0 0.0
    %2677 = vmatprep.subr.mxu0 0.0
    %2678 = vmatpush1.msra.mxu0 0.0
    %2679 = vmatprep.subr.mxu0 0.0
    %2680 = vmatpush1.msra.mxu0 0.0
    %2681 = vmatprep.subr.mxu0 0.0
    %2682 = vmatpush1.msra.mxu0 0.0
    %2683 = vmatprep.subr.mxu0 0.0
    %2684 = vmatpush1.msra.mxu0 0.0
    %2685 = vmatprep.subr.mxu0 0.0
    %2686 = vmatpush1.msra.mxu0 0.0
    %2687 = vmatprep.subr.mxu0 0.0
    %2688 = vmatpush1.msra.mxu0 0.0
    %2689 = vmatprep.subr.mxu0 0.0
    %2690 = vmatpush1.msra.mxu0 0.0
    %2691 = vmatprep.subr.mxu0 0.0
    %2692 = vmatpush1.msra.mxu0 0.0
    %2693 = vmatprep.subr.mxu0 0.0
    %2694 = vmatpush1.msra.mxu0 0.0
    %2695 = vmatprep.subr.mxu0 0.0
    %2696 = vmatpush1.msra.mxu0 0.0
    %2697 = vmatprep.subr.mxu0 0.0
    %2698 = vmatpush1.msra.mxu0 0.0
    %2699 = vmatprep.subr.mxu0 0.0
    %2700 = vmatpush1.msra.mxu0 0.0
    %2701 = vmatprep.subr.mxu0 0.0
    %2702 = vmatpush1.msra.mxu0 %v2666
    %2703 = vmatprep.subr.mxu0 0.0
    %2704 = vmatpush2.msra.mxu0 0.0
    %2705 = vmatprep.subr.mxu0 0.0
    %2706 = vmatpush2.msra.mxu0 0.0
    %2707 = vmatprep.subr.mxu0 0.0
    %2708 = vmatpush2.msra.mxu0 0.0
    %2709 = vmatprep.subr.mxu0 0.0
    %2710 = vmatpush2.msra.mxu0 0.0
    %2711 = vmatprep.subr.mxu0 0.0
    %2712 = vmatpush2.msra.mxu0 0.0
    %2713 = vmatprep.subr.mxu0 0.0
    %2714 = vmatpush2.msra.mxu0 0.0
    %2715 = vmatprep.subr.mxu0 0.0
    %2716 = vmatpush2.msra.mxu0 0.0
    %2717 = vmatprep.subr.mxu0 0.0
    %2718 = vmatpush2.msra.mxu0 0.0
    %2719 = vmatprep.subr.mxu0 0.0
    %2720 = vmatpush2.msra.mxu0 0.0
    %2721 = vmatprep.subr.mxu0 0.0
    %2722 = vmatpush2.msra.mxu0 0.0
    %2723 = vmatprep.subr.mxu0 0.0
    %2724 = vmatpush2.msra.mxu0 0.0
    %2725 = vmatprep.subr.mxu0 0.0
    %2726 = vmatpush2.msra.mxu0 0.0
    %2727 = vmatprep.subr.mxu0 0.0
    %2728 = vmatpush2.msra.mxu0 0.0
    %2729 = vmatprep.subr.mxu0 0.0
    %2730 = vmatpush2.msra.mxu0 0.0
    %2731 = vmatprep.subr.mxu0 0.0
    %2732 = vmatpush2.msra.mxu0 0.0
    %2733 = vmatprep.subr.mxu0 0.0
    %2734 = vmatpush2.msra.mxu0 0.0
    %2735 = vmatprep.mubr.f32.mxu0 0.0
    %2736 = vmatmul.mubr.f32.gmra.mxu0 %v2669
    %v2737 = vpop.f32.mrf.mxu0
    %v2738 = vadd.f32 0.0, %v2737
    %v2739 = vpop.f32.mrf.mxu0
    %2740 = vdwg.mxu0
    %2742 = vrot.lane.b32.xlu0 %v2162, 112
    %v2743 = vpop.permute.xlu0 %2742
    %v2746 = vsel %vm445, %v2663, 0
    %2748 = vmatprep.subr.mxu0 0.0
    %2749 = vmatpush1.msra.mxu0 0.0
    %2750 = vmatprep.subr.mxu0 0.0
    %2751 = vmatpush1.msra.mxu0 0.0
    %2752 = vmatprep.subr.mxu0 0.0
    %2753 = vmatpush1.msra.mxu0 0.0
    %2754 = vmatprep.subr.mxu0 0.0
    %2755 = vmatpush1.msra.mxu0 0.0
    %2756 = vmatprep.subr.mxu0 0.0
    %2757 = vmatpush1.msra.mxu0 0.0
    %2758 = vmatprep.subr.mxu0 0.0
    %2759 = vmatpush1.msra.mxu0 0.0
    %2760 = vmatprep.subr.mxu0 0.0
    %2761 = vmatpush1.msra.mxu0 0.0
    %2762 = vmatprep.subr.mxu0 0.0
    %2763 = vmatpush1.msra.mxu0 0.0
    %2764 = vmatprep.subr.mxu0 0.0
    %2765 = vmatpush1.msra.mxu0 0.0
    %2766 = vmatprep.subr.mxu0 0.0
    %2767 = vmatpush1.msra.mxu0 0.0
    %2768 = vmatprep.subr.mxu0 0.0
    %2769 = vmatpush1.msra.mxu0 0.0
    %2770 = vmatprep.subr.mxu0 0.0
    %2771 = vmatpush1.msra.mxu0 0.0
    %2772 = vmatprep.subr.mxu0 0.0
    %2773 = vmatpush1.msra.mxu0 0.0
    %2774 = vmatprep.subr.mxu0 0.0
    %2775 = vmatpush1.msra.mxu0 0.0
    %2776 = vmatprep.subr.mxu0 0.0
    %2777 = vmatpush1.msra.mxu0 0.0
    %2778 = vmatprep.subr.mxu0 0.0
    %2779 = vmatpush1.msra.mxu0 %v2743
    %2780 = vmatprep.subr.mxu0 0.0
    %2781 = vmatpush2.msra.mxu0 0.0
    %2782 = vmatprep.subr.mxu0 0.0
    %2783 = vmatpush2.msra.mxu0 0.0
    %2784 = vmatprep.subr.mxu0 0.0
    %2785 = vmatpush2.msra.mxu0 0.0
    %2786 = vmatprep.subr.mxu0 0.0
    %2787 = vmatpush2.msra.mxu0 0.0
    %2788 = vmatprep.subr.mxu0 0.0
    %2789 = vmatpush2.msra.mxu0 0.0
    %2790 = vmatprep.subr.mxu0 0.0
    %2791 = vmatpush2.msra.mxu0 0.0
    %2792 = vmatprep.subr.mxu0 0.0
    %2793 = vmatpush2.msra.mxu0 0.0
    %2794 = vmatprep.subr.mxu0 0.0
    %2795 = vmatpush2.msra.mxu0 0.0
    %2796 = vmatprep.subr.mxu0 0.0
    %2797 = vmatpush2.msra.mxu0 0.0
    %2798 = vmatprep.subr.mxu0 0.0
    %2799 = vmatpush2.msra.mxu0 0.0
    %2800 = vmatprep.subr.mxu0 0.0
    %2801 = vmatpush2.msra.mxu0 0.0
    %2802 = vmatprep.subr.mxu0 0.0
    %2803 = vmatpush2.msra.mxu0 0.0
    %2804 = vmatprep.subr.mxu0 0.0
    %2805 = vmatpush2.msra.mxu0 0.0
    %2806 = vmatprep.subr.mxu0 0.0
    %2807 = vmatpush2.msra.mxu0 0.0
    %2808 = vmatprep.subr.mxu0 0.0
    %2809 = vmatpush2.msra.mxu0 0.0
    %2810 = vmatprep.subr.mxu0 0.0
    %2811 = vmatpush2.msra.mxu0 0.0
    %2812 = vmatprep.mubr.f32.mxu0 0.0
    %2813 = vmatmul.mubr.f32.gmra.mxu0 %v2746
    %v2814 = vpop.f32.mrf.mxu0
    %v2815 = vadd.f32 0.0, %v2814
    %v2816 = vpop.f32.mrf.mxu0
    %2817 = vdwg.mxu0
    %2818 = vrot.lane.b32.xlu0 %v2154, 96
    %v2819 = vpop.permute.xlu0 %2818
    %2820 = vrot.lane.b32.xlu0 %v2154, 32
    %v2821 = vpop.permute.xlu0 %2820
    %v2822 = vsel %vm45, %v2819, 0
    %v2824 = vsel %vm45, %v2821, 0
    %2826 = vmatprep.subr.mxu0 0.0
    %2827 = vmatpush1.xpose.msra.mxu0 0.0
    %2828 = vmatprep.subr.mxu0 0.0
    %2829 = vmatpush1.xpose.msra.mxu0 0.0
    %2830 = vmatprep.subr.mxu0 0.0
    %2831 = vmatpush1.xpose.msra.mxu0 0.0
    %2832 = vmatprep.subr.mxu0 0.0
    %2833 = vmatpush1.xpose.msra.mxu0 0.0
    %2834 = vmatprep.subr.mxu0 0.0
    %2835 = vmatpush1.xpose.msra.mxu0 0.0
    %2836 = vmatprep.subr.mxu0 0.0
    %2837 = vmatpush1.xpose.msra.mxu0 0.0
    %2838 = vmatprep.subr.mxu0 0.0
    %2839 = vmatpush1.xpose.msra.mxu0 0.0
    %2840 = vmatprep.subr.mxu0 0.0
    %2841 = vmatpush1.xpose.msra.mxu0 0.0
    %2842 = vmatprep.subr.mxu0 0.0
    %2843 = vmatpush1.xpose.msra.mxu0 0.0
    %2844 = vmatprep.subr.mxu0 0.0
    %2845 = vmatpush1.xpose.msra.mxu0 0.0
    %2846 = vmatprep.subr.mxu0 0.0
    %2847 = vmatpush1.xpose.msra.mxu0 0.0
    %2848 = vmatprep.subr.mxu0 0.0
    %2849 = vmatpush1.xpose.msra.mxu0 0.0
    %2850 = vmatprep.subr.mxu0 0.0
    %2851 = vmatpush1.xpose.msra.mxu0 0.0
    %2852 = vmatprep.subr.mxu0 0.0
    %2853 = vmatpush1.xpose.msra.mxu0 0.0
    %2854 = vmatprep.subr.mxu0 0.0
    %2855 = vmatpush1.xpose.msra.mxu0 0.0
    %2856 = vmatprep.subr.mxu0 0.0
    %2857 = vmatpush1.xpose.msra.mxu0 %v2824
    %2858 = vmatprep.subr.mxu0 0.0
    %2859 = vmatpush2.xpose.msra.mxu0 0.0
    %2860 = vmatprep.subr.mxu0 0.0
    %2861 = vmatpush2.xpose.msra.mxu0 0.0
    %2862 = vmatprep.subr.mxu0 0.0
    %2863 = vmatpush2.xpose.msra.mxu0 0.0
    %2864 = vmatprep.subr.mxu0 0.0
    %2865 = vmatpush2.xpose.msra.mxu0 0.0
    %2866 = vmatprep.subr.mxu0 0.0
    %2867 = vmatpush2.xpose.msra.mxu0 0.0
    %2868 = vmatprep.subr.mxu0 0.0
    %2869 = vmatpush2.xpose.msra.mxu0 0.0
    %2870 = vmatprep.subr.mxu0 0.0
    %2871 = vmatpush2.xpose.msra.mxu0 0.0
    %2872 = vmatprep.subr.mxu0 0.0
    %2873 = vmatpush2.xpose.msra.mxu0 0.0
    %2874 = vmatprep.subr.mxu0 0.0
    %2875 = vmatpush2.xpose.msra.mxu0 0.0
    %2876 = vmatprep.subr.mxu0 0.0
    %2877 = vmatpush2.xpose.msra.mxu0 0.0
    %2878 = vmatprep.subr.mxu0 0.0
    %2879 = vmatpush2.xpose.msra.mxu0 0.0
    %2880 = vmatprep.subr.mxu0 0.0
    %2881 = vmatpush2.xpose.msra.mxu0 0.0
    %2882 = vmatprep.subr.mxu0 0.0
    %2883 = vmatpush2.xpose.msra.mxu0 0.0
    %2884 = vmatprep.subr.mxu0 0.0
    %2885 = vmatpush2.xpose.msra.mxu0 0.0
    %2886 = vmatprep.subr.mxu0 0.0
    %2887 = vmatpush2.xpose.msra.mxu0 0.0
    %2888 = vmatprep.subr.mxu0 0.0
    %2889 = vmatpush2.xpose.msra.mxu0 0.0
    %2890 = vmatprep.mubr.f32.mxu0 0.0
    %2891 = vmatmul.mubr.f32.gmra.mxu0 %v2822
    %v2892 = vpop.f32.mrf.mxu0
    %v2893 = vadd.f32 0.0, %v2892
    %v2894 = vpop.f32.mrf.mxu0
    %2895 = vdwg.mxu0
    %2896 = vrot.lane.b32.xlu0 %v2160, 96
    %v2897 = vpop.permute.xlu0 %2896
    %2898 = vrot.lane.b32.xlu0 %v2160, 32
    %v2899 = vpop.permute.xlu0 %2898
    %v2900 = vsel %vm45, %v2897, 0
    %v2902 = vsel %vm45, %v2899, 0
    %2904 = vmatprep.subr.mxu0 0.0
    %2905 = vmatpush1.xpose.msra.mxu0 0.0
    %2906 = vmatprep.subr.mxu0 0.0
    %2907 = vmatpush1.xpose.msra.mxu0 0.0
    %2908 = vmatprep.subr.mxu0 0.0
    %2909 = vmatpush1.xpose.msra.mxu0 0.0
    %2910 = vmatprep.subr.mxu0 0.0
    %2911 = vmatpush1.xpose.msra.mxu0 0.0
    %2912 = vmatprep.subr.mxu0 0.0
    %2913 = vmatpush1.xpose.msra.mxu0 0.0
    %2914 = vmatprep.subr.mxu0 0.0
    %2915 = vmatpush1.xpose.msra.mxu0 0.0
    %2916 = vmatprep.subr.mxu0 0.0
    %2917 = vmatpush1.xpose.msra.mxu0 0.0
    %2918 = vmatprep.subr.mxu0 0.0
    %2919 = vmatpush1.xpose.msra.mxu0 0.0
    %2920 = vmatprep.subr.mxu0 0.0
    %2921 = vmatpush1.xpose.msra.mxu0 0.0
    %2922 = vmatprep.subr.mxu0 0.0
    %2923 = vmatpush1.xpose.msra.mxu0 0.0
    %2924 = vmatprep.subr.mxu0 0.0
    %2925 = vmatpush1.xpose.msra.mxu0 0.0
    %2926 = vmatprep.subr.mxu0 0.0
    %2927 = vmatpush1.xpose.msra.mxu0 0.0
    %2928 = vmatprep.subr.mxu0 0.0
    %2929 = vmatpush1.xpose.msra.mxu0 0.0
    %2930 = vmatprep.subr.mxu0 0.0
    %2931 = vmatpush1.xpose.msra.mxu0 0.0
    %2932 = vmatprep.subr.mxu0 0.0
    %2933 = vmatpush1.xpose.msra.mxu0 0.0
    %2934 = vmatprep.subr.mxu0 0.0
    %2935 = vmatpush1.xpose.msra.mxu0 %v2902
    %2936 = vmatprep.subr.mxu0 0.0
    %2937 = vmatpush2.xpose.msra.mxu0 0.0
    %2938 = vmatprep.subr.mxu0 0.0
    %2939 = vmatpush2.xpose.msra.mxu0 0.0
    %2940 = vmatprep.subr.mxu0 0.0
    %2941 = vmatpush2.xpose.msra.mxu0 0.0
    %2942 = vmatprep.subr.mxu0 0.0
    %2943 = vmatpush2.xpose.msra.mxu0 0.0
    %2944 = vmatprep.subr.mxu0 0.0
    %2945 = vmatpush2.xpose.msra.mxu0 0.0
    %2946 = vmatprep.subr.mxu0 0.0
    %2947 = vmatpush2.xpose.msra.mxu0 0.0
    %2948 = vmatprep.subr.mxu0 0.0
    %2949 = vmatpush2.xpose.msra.mxu0 0.0
    %2950 = vmatprep.subr.mxu0 0.0
    %2951 = vmatpush2.xpose.msra.mxu0 0.0
    %2952 = vmatprep.subr.mxu0 0.0
    %2953 = vmatpush2.xpose.msra.mxu0 0.0
    %2954 = vmatprep.subr.mxu0 0.0
    %2955 = vmatpush2.xpose.msra.mxu0 0.0
    %2956 = vmatprep.subr.mxu0 0.0
    %2957 = vmatpush2.xpose.msra.mxu0 0.0
    %2958 = vmatprep.subr.mxu0 0.0
    %2959 = vmatpush2.xpose.msra.mxu0 0.0
    %2960 = vmatprep.subr.mxu0 0.0
    %2961 = vmatpush2.xpose.msra.mxu0 0.0
    %2962 = vmatprep.subr.mxu0 0.0
    %2963 = vmatpush2.xpose.msra.mxu0 0.0
    %2964 = vmatprep.subr.mxu0 0.0
    %2965 = vmatpush2.xpose.msra.mxu0 0.0
    %2966 = vmatprep.subr.mxu0 0.0
    %2967 = vmatpush2.xpose.msra.mxu0 0.0
    %2968 = vmatprep.mubr.f32.mxu0 0.0
    %2969 = vmatmul.mubr.f32.gmra.mxu0 %v2900
    %v2970 = vpop.f32.mrf.mxu0
    %v2971 = vadd.f32 0.0, %v2970
    %v2972 = vpop.f32.mrf.mxu0
    %2973 = vdwg.mxu0
    %v2974 = vsel %vm445, %v2893, -inf
    %2975 = vmax.xlane.f32.xlu0 %v2974
    %v2976 = vpop.xlane.xlu0 %2975
    %v2977 = vsel %vm445, %v2971, -inf
    %2978 = vmax.xlane.f32.xlu0 %v2977
    %v2979 = vpop.xlane.xlu0 %2978
    %v2980 = vsub.f32 %v2893, %v2976
    %v2981 = vsub.f32 %v2971, %v2979
    %v2982 = vmul.f32 %v2980, 1.442695
    %v2983 = vpow.pop %v2982
    %v2984 = vmul.f32 %v2981, 1.442695
    %v2985 = vpow.pop %v2984
    %v2986 = vsel %vm445, %v2983, 0.0
    %2987 = vadd.xlane.f32.xlu0 %v2986
    %v2988 = vpop.xlane.xlu0 %2987
    %v2989 = vsel %vm445, %v2985, 0.0
    %2990 = vadd.xlane.f32.xlu0 %v2989
    %v2991 = vpop.xlane.xlu0 %2990
    %v2992 = vrcp.pop %v2988
    %v2993 = vmul.f32 %v2983, %v2992
    %v2994 = vrcp.pop %v2991
    %v2995 = vmul.f32 %v2985, %v2994
    %2996 = vrot.lane.b32.xlu0 %v2156, 96
    %v2997 = vpop.permute.xlu0 %2996
    %v3000 = vsel %vm445, %v2993, 0
    %3002 = vmatprep.subr.mxu0 0.0
    %3003 = vmatpush1.msra.mxu0 0.0
    %3004 = vmatprep.subr.mxu0 0.0
    %3005 = vmatpush1.msra.mxu0 0.0
    %3006 = vmatprep.subr.mxu0 0.0
    %3007 = vmatpush1.msra.mxu0 0.0
    %3008 = vmatprep.subr.mxu0 0.0
    %3009 = vmatpush1.msra.mxu0 0.0
    %3010 = vmatprep.subr.mxu0 0.0
    %3011 = vmatpush1.msra.mxu0 0.0
    %3012 = vmatprep.subr.mxu0 0.0
    %3013 = vmatpush1.msra.mxu0 0.0
    %3014 = vmatprep.subr.mxu0 0.0
    %3015 = vmatpush1.msra.mxu0 0.0
    %3016 = vmatprep.subr.mxu0 0.0
    %3017 = vmatpush1.msra.mxu0 0.0
    %3018 = vmatprep.subr.mxu0 0.0
    %3019 = vmatpush1.msra.mxu0 0.0
    %3020 = vmatprep.subr.mxu0 0.0
    %3021 = vmatpush1.msra.mxu0 0.0
    %3022 = vmatprep.subr.mxu0 0.0
    %3023 = vmatpush1.msra.mxu0 0.0
    %3024 = vmatprep.subr.mxu0 0.0
    %3025 = vmatpush1.msra.mxu0 0.0
    %3026 = vmatprep.subr.mxu0 0.0
    %3027 = vmatpush1.msra.mxu0 0.0
    %3028 = vmatprep.subr.mxu0 0.0
    %3029 = vmatpush1.msra.mxu0 0.0
    %3030 = vmatprep.subr.mxu0 0.0
    %3031 = vmatpush1.msra.mxu0 0.0
    %3032 = vmatprep.subr.mxu0 0.0
    %3033 = vmatpush1.msra.mxu0 %v2997
    %3034 = vmatprep.subr.mxu0 0.0
    %3035 = vmatpush2.msra.mxu0 0.0
    %3036 = vmatprep.subr.mxu0 0.0
    %3037 = vmatpush2.msra.mxu0 0.0
    %3038 = vmatprep.subr.mxu0 0.0
    %3039 = vmatpush2.msra.mxu0 0.0
    %3040 = vmatprep.subr.mxu0 0.0
    %3041 = vmatpush2.msra.mxu0 0.0
    %3042 = vmatprep.subr.mxu0 0.0
    %3043 = vmatpush2.msra.mxu0 0.0
    %3044 = vmatprep.subr.mxu0 0.0
    %3045 = vmatpush2.msra.mxu0 0.0
    %3046 = vmatprep.subr.mxu0 0.0
    %3047 = vmatpush2.msra.mxu0 0.0
    %3048 = vmatprep.subr.mxu0 0.0
    %3049 = vmatpush2.msra.mxu0 0.0
    %3050 = vmatprep.subr.mxu0 0.0
    %3051 = vmatpush2.msra.mxu0 0.0
    %3052 = vmatprep.subr.mxu0 0.0
    %3053 = vmatpush2.msra.mxu0 0.0
    %3054 = vmatprep.subr.mxu0 0.0
    %3055 = vmatpush2.msra.mxu0 0.0
    %3056 = vmatprep.subr.mxu0 0.0
    %3057 = vmatpush2.msra.mxu0 0.0
    %3058 = vmatprep.subr.mxu0 0.0
    %3059 = vmatpush2.msra.mxu0 0.0
    %3060 = vmatprep.subr.mxu0 0.0
    %3061 = vmatpush2.msra.mxu0 0.0
    %3062 = vmatprep.subr.mxu0 0.0
    %3063 = vmatpush2.msra.mxu0 0.0
    %3064 = vmatprep.subr.mxu0 0.0
    %3065 = vmatpush2.msra.mxu0 0.0
    %3066 = vmatprep.mubr.f32.mxu0 0.0
    %3067 = vmatmul.mubr.f32.gmra.mxu0 %v3000
    %v3068 = vpop.f32.mrf.mxu0
    %v3069 = vadd.f32 0.0, %v3068
    %v3070 = vpop.f32.mrf.mxu0
    %3071 = vdwg.mxu0
    %3072 = vrot.lane.b32.xlu0 %v2162, 96
    %v3073 = vpop.permute.xlu0 %3072
    %v3076 = vsel %vm445, %v2995, 0
    %3078 = vmatprep.subr.mxu0 0.0
    %3079 = vmatpush1.msra.mxu0 0.0
    %3080 = vmatprep.subr.mxu0 0.0
    %3081 = vmatpush1.msra.mxu0 0.0
    %3082 = vmatprep.subr.mxu0 0.0
    %3083 = vmatpush1.msra.mxu0 0.0
    %3084 = vmatprep.subr.mxu0 0.0
    %3085 = vmatpush1.msra.mxu0 0.0
    %3086 = vmatprep.subr.mxu0 0.0
    %3087 = vmatpush1.msra.mxu0 0.0
    %3088 = vmatprep.subr.mxu0 0.0
    %3089 = vmatpush1.msra.mxu0 0.0
    %3090 = vmatprep.subr.mxu0 0.0
    %3091 = vmatpush1.msra.mxu0 0.0
    %3092 = vmatprep.subr.mxu0 0.0
    %3093 = vmatpush1.msra.mxu0 0.0
    %3094 = vmatprep.subr.mxu0 0.0
    %3095 = vmatpush1.msra.mxu0 0.0
    %3096 = vmatprep.subr.mxu0 0.0
    %3097 = vmatpush1.msra.mxu0 0.0
    %3098 = vmatprep.subr.mxu0 0.0
    %3099 = vmatpush1.msra.mxu0 0.0
    %3100 = vmatprep.subr.mxu0 0.0
    %3101 = vmatpush1.msra.mxu0 0.0
    %3102 = vmatprep.subr.mxu0 0.0
    %3103 = vmatpush1.msra.mxu0 0.0
    %3104 = vmatprep.subr.mxu0 0.0
    %3105 = vmatpush1.msra.mxu0 0.0
    %3106 = vmatprep.subr.mxu0 0.0
    %3107 = vmatpush1.msra.mxu0 0.0
    %3108 = vmatprep.subr.mxu0 0.0
    %3109 = vmatpush1.msra.mxu0 %v3073
    %3110 = vmatprep.subr.mxu0 0.0
    %3111 = vmatpush2.msra.mxu0 0.0
    %3112 = vmatprep.subr.mxu0 0.0
    %3113 = vmatpush2.msra.mxu0 0.0
    %3114 = vmatprep.subr.mxu0 0.0
    %3115 = vmatpush2.msra.mxu0 0.0
    %3116 = vmatprep.subr.mxu0 0.0
    %3117 = vmatpush2.msra.mxu0 0.0
    %3118 = vmatprep.subr.mxu0 0.0
    %3119 = vmatpush2.msra.mxu0 0.0
    %3120 = vmatprep.subr.mxu0 0.0
    %3121 = vmatpush2.msra.mxu0 0.0
    %3122 = vmatprep.subr.mxu0 0.0
    %3123 = vmatpush2.msra.mxu0 0.0
    %3124 = vmatprep.subr.mxu0 0.0
    %3125 = vmatpush2.msra.mxu0 0.0
    %3126 = vmatprep.subr.mxu0 0.0
    %3127 = vmatpush2.msra.mxu0 0.0
    %3128 = vmatprep.subr.mxu0 0.0
    %3129 = vmatpush2.msra.mxu0 0.0
    %3130 = vmatprep.subr.mxu0 0.0
    %3131 = vmatpush2.msra.mxu0 0.0
    %3132 = vmatprep.subr.mxu0 0.0
    %3133 = vmatpush2.msra.mxu0 0.0
    %3134 = vmatprep.subr.mxu0 0.0
    %3135 = vmatpush2.msra.mxu0 0.0
    %3136 = vmatprep.subr.mxu0 0.0
    %3137 = vmatpush2.msra.mxu0 0.0
    %3138 = vmatprep.subr.mxu0 0.0
    %3139 = vmatpush2.msra.mxu0 0.0
    %3140 = vmatprep.subr.mxu0 0.0
    %3141 = vmatpush2.msra.mxu0 0.0
    %3142 = vmatprep.mubr.f32.mxu0 0.0
    %3143 = vmatmul.mubr.f32.gmra.mxu0 %v3076
    %v3144 = vpop.f32.mrf.mxu0
    %v3145 = vadd.f32 0.0, %v3144
    %v3146 = vpop.f32.mrf.mxu0
    %3147 = vdwg.mxu0
    %3148 = vrot.lane.b32.xlu0 %v2154, 80
    %v3149 = vpop.permute.xlu0 %3148
    %3150 = vrot.lane.b32.xlu0 %v2154, 16
    %v3151 = vpop.permute.xlu0 %3150
    %v3152 = vsel %vm45, %v3149, 0
    %v3154 = vsel %vm45, %v3151, 0
    %3156 = vmatprep.subr.mxu0 0.0
    %3157 = vmatpush1.xpose.msra.mxu0 0.0
    %3158 = vmatprep.subr.mxu0 0.0
    %3159 = vmatpush1.xpose.msra.mxu0 0.0
    %3160 = vmatprep.subr.mxu0 0.0
    %3161 = vmatpush1.xpose.msra.mxu0 0.0
    %3162 = vmatprep.subr.mxu0 0.0
    %3163 = vmatpush1.xpose.msra.mxu0 0.0
    %3164 = vmatprep.subr.mxu0 0.0
    %3165 = vmatpush1.xpose.msra.mxu0 0.0
    %3166 = vmatprep.subr.mxu0 0.0
    %3167 = vmatpush1.xpose.msra.mxu0 0.0
    %3168 = vmatprep.subr.mxu0 0.0
    %3169 = vmatpush1.xpose.msra.mxu0 0.0
    %3170 = vmatprep.subr.mxu0 0.0
    %3171 = vmatpush1.xpose.msra.mxu0 0.0
    %3172 = vmatprep.subr.mxu0 0.0
    %3173 = vmatpush1.xpose.msra.mxu0 0.0
    %3174 = vmatprep.subr.mxu0 0.0
    %3175 = vmatpush1.xpose.msra.mxu0 0.0
    %3176 = vmatprep.subr.mxu0 0.0
    %3177 = vmatpush1.xpose.msra.mxu0 0.0
    %3178 = vmatprep.subr.mxu0 0.0
    %3179 = vmatpush1.xpose.msra.mxu0 0.0
    %3180 = vmatprep.subr.mxu0 0.0
    %3181 = vmatpush1.xpose.msra.mxu0 0.0
    %3182 = vmatprep.subr.mxu0 0.0
    %3183 = vmatpush1.xpose.msra.mxu0 0.0
    %3184 = vmatprep.subr.mxu0 0.0
    %3185 = vmatpush1.xpose.msra.mxu0 0.0
    %3186 = vmatprep.subr.mxu0 0.0
    %3187 = vmatpush1.xpose.msra.mxu0 %v3154
    %3188 = vmatprep.subr.mxu0 0.0
    %3189 = vmatpush2.xpose.msra.mxu0 0.0
    %3190 = vmatprep.subr.mxu0 0.0
    %3191 = vmatpush2.xpose.msra.mxu0 0.0
    %3192 = vmatprep.subr.mxu0 0.0
    %3193 = vmatpush2.xpose.msra.mxu0 0.0
    %3194 = vmatprep.subr.mxu0 0.0
    %3195 = vmatpush2.xpose.msra.mxu0 0.0
    %3196 = vmatprep.subr.mxu0 0.0
    %3197 = vmatpush2.xpose.msra.mxu0 0.0
    %3198 = vmatprep.subr.mxu0 0.0
    %3199 = vmatpush2.xpose.msra.mxu0 0.0
    %3200 = vmatprep.subr.mxu0 0.0
    %3201 = vmatpush2.xpose.msra.mxu0 0.0
    %3202 = vmatprep.subr.mxu0 0.0
    %3203 = vmatpush2.xpose.msra.mxu0 0.0
    %3204 = vmatprep.subr.mxu0 0.0
    %3205 = vmatpush2.xpose.msra.mxu0 0.0
    %3206 = vmatprep.subr.mxu0 0.0
    %3207 = vmatpush2.xpose.msra.mxu0 0.0
    %3208 = vmatprep.subr.mxu0 0.0
    %3209 = vmatpush2.xpose.msra.mxu0 0.0
    %3210 = vmatprep.subr.mxu0 0.0
    %3211 = vmatpush2.xpose.msra.mxu0 0.0
    %3212 = vmatprep.subr.mxu0 0.0
    %3213 = vmatpush2.xpose.msra.mxu0 0.0
    %3214 = vmatprep.subr.mxu0 0.0
    %3215 = vmatpush2.xpose.msra.mxu0 0.0
    %3216 = vmatprep.subr.mxu0 0.0
    %3217 = vmatpush2.xpose.msra.mxu0 0.0
    %3218 = vmatprep.subr.mxu0 0.0
    %3219 = vmatpush2.xpose.msra.mxu0 0.0
    %3220 = vmatprep.mubr.f32.mxu0 0.0
    %3221 = vmatmul.mubr.f32.gmra.mxu0 %v3152
    %v3222 = vpop.f32.mrf.mxu0
    %v3223 = vadd.f32 0.0, %v3222
    %v3224 = vpop.f32.mrf.mxu0
    %3225 = vdwg.mxu0
    %3226 = vrot.lane.b32.xlu0 %v2160, 80
    %v3227 = vpop.permute.xlu0 %3226
    %3228 = vrot.lane.b32.xlu0 %v2160, 16
    %v3229 = vpop.permute.xlu0 %3228
    %v3230 = vsel %vm45, %v3227, 0
    %v3232 = vsel %vm45, %v3229, 0
    %3234 = vmatprep.subr.mxu0 0.0
    %3235 = vmatpush1.xpose.msra.mxu0 0.0
    %3236 = vmatprep.subr.mxu0 0.0
    %3237 = vmatpush1.xpose.msra.mxu0 0.0
    %3238 = vmatprep.subr.mxu0 0.0
    %3239 = vmatpush1.xpose.msra.mxu0 0.0
    %3240 = vmatprep.subr.mxu0 0.0
    %3241 = vmatpush1.xpose.msra.mxu0 0.0
    %3242 = vmatprep.subr.mxu0 0.0
    %3243 = vmatpush1.xpose.msra.mxu0 0.0
    %3244 = vmatprep.subr.mxu0 0.0
    %3245 = vmatpush1.xpose.msra.mxu0 0.0
    %3246 = vmatprep.subr.mxu0 0.0
    %3247 = vmatpush1.xpose.msra.mxu0 0.0
    %3248 = vmatprep.subr.mxu0 0.0
    %3249 = vmatpush1.xpose.msra.mxu0 0.0
    %3250 = vmatprep.subr.mxu0 0.0
    %3251 = vmatpush1.xpose.msra.mxu0 0.0
    %3252 = vmatprep.subr.mxu0 0.0
    %3253 = vmatpush1.xpose.msra.mxu0 0.0
    %3254 = vmatprep.subr.mxu0 0.0
    %3255 = vmatpush1.xpose.msra.mxu0 0.0
    %3256 = vmatprep.subr.mxu0 0.0
    %3257 = vmatpush1.xpose.msra.mxu0 0.0
    %3258 = vmatprep.subr.mxu0 0.0
    %3259 = vmatpush1.xpose.msra.mxu0 0.0
    %3260 = vmatprep.subr.mxu0 0.0
    %3261 = vmatpush1.xpose.msra.mxu0 0.0
    %3262 = vmatprep.subr.mxu0 0.0
    %3263 = vmatpush1.xpose.msra.mxu0 0.0
    %3264 = vmatprep.subr.mxu0 0.0
    %3265 = vmatpush1.xpose.msra.mxu0 %v3232
    %3266 = vmatprep.subr.mxu0 0.0
    %3267 = vmatpush2.xpose.msra.mxu0 0.0
    %3268 = vmatprep.subr.mxu0 0.0
    %3269 = vmatpush2.xpose.msra.mxu0 0.0
    %3270 = vmatprep.subr.mxu0 0.0
    %3271 = vmatpush2.xpose.msra.mxu0 0.0
    %3272 = vmatprep.subr.mxu0 0.0
    %3273 = vmatpush2.xpose.msra.mxu0 0.0
    %3274 = vmatprep.subr.mxu0 0.0
    %3275 = vmatpush2.xpose.msra.mxu0 0.0
    %3276 = vmatprep.subr.mxu0 0.0
    %3277 = vmatpush2.xpose.msra.mxu0 0.0
    %3278 = vmatprep.subr.mxu0 0.0
    %3279 = vmatpush2.xpose.msra.mxu0 0.0
    %3280 = vmatprep.subr.mxu0 0.0
    %3281 = vmatpush2.xpose.msra.mxu0 0.0
    %3282 = vmatprep.subr.mxu0 0.0
    %3283 = vmatpush2.xpose.msra.mxu0 0.0
    %3284 = vmatprep.subr.mxu0 0.0
    %3285 = vmatpush2.xpose.msra.mxu0 0.0
    %3286 = vmatprep.subr.mxu0 0.0
    %3287 = vmatpush2.xpose.msra.mxu0 0.0
    %3288 = vmatprep.subr.mxu0 0.0
    %3289 = vmatpush2.xpose.msra.mxu0 0.0
    %3290 = vmatprep.subr.mxu0 0.0
    %3291 = vmatpush2.xpose.msra.mxu0 0.0
    %3292 = vmatprep.subr.mxu0 0.0
    %3293 = vmatpush2.xpose.msra.mxu0 0.0
    %3294 = vmatprep.subr.mxu0 0.0
    %3295 = vmatpush2.xpose.msra.mxu0 0.0
    %3296 = vmatprep.subr.mxu0 0.0
    %3297 = vmatpush2.xpose.msra.mxu0 0.0
    %3298 = vmatprep.mubr.f32.mxu0 0.0
    %3299 = vmatmul.mubr.f32.gmra.mxu0 %v3230
    %v3300 = vpop.f32.mrf.mxu0
    %v3301 = vadd.f32 0.0, %v3300
    %v3302 = vpop.f32.mrf.mxu0
    %3303 = vdwg.mxu0
    %v3304 = vsel %vm445, %v3223, -inf
    %3305 = vmax.xlane.f32.xlu0 %v3304
    %v3306 = vpop.xlane.xlu0 %3305
    %v3307 = vsel %vm445, %v3301, -inf
    %3308 = vmax.xlane.f32.xlu0 %v3307
    %v3309 = vpop.xlane.xlu0 %3308
    %v3310 = vsub.f32 %v3223, %v3306
    %v3311 = vsub.f32 %v3301, %v3309
    %v3312 = vmul.f32 %v3310, 1.442695
    %v3313 = vpow.pop %v3312
    %v3314 = vmul.f32 %v3311, 1.442695
    %v3315 = vpow.pop %v3314
    %v3316 = vsel %vm445, %v3313, 0.0
    %3317 = vadd.xlane.f32.xlu0 %v3316
    %v3318 = vpop.xlane.xlu0 %3317
    %v3319 = vsel %vm445, %v3315, 0.0
    %3320 = vadd.xlane.f32.xlu0 %v3319
    %v3321 = vpop.xlane.xlu0 %3320
    %v3322 = vrcp.pop %v3318
    %v3323 = vmul.f32 %v3313, %v3322
    %v3324 = vrcp.pop %v3321
    %v3325 = vmul.f32 %v3315, %v3324
    %3326 = vrot.lane.b32.xlu0 %v2156, 80
    %v3327 = vpop.permute.xlu0 %3326
    %v3330 = vsel %vm445, %v3323, 0
    %3332 = vmatprep.subr.mxu0 0.0
    %3333 = vmatpush1.msra.mxu0 0.0
    %3334 = vmatprep.subr.mxu0 0.0
    %3335 = vmatpush1.msra.mxu0 0.0
    %3336 = vmatprep.subr.mxu0 0.0
    %3337 = vmatpush1.msra.mxu0 0.0
    %3338 = vmatprep.subr.mxu0 0.0
    %3339 = vmatpush1.msra.mxu0 0.0
    %3340 = vmatprep.subr.mxu0 0.0
    %3341 = vmatpush1.msra.mxu0 0.0
    %3342 = vmatprep.subr.mxu0 0.0
    %3343 = vmatpush1.msra.mxu0 0.0
    %3344 = vmatprep.subr.mxu0 0.0
    %3345 = vmatpush1.msra.mxu0 0.0
    %3346 = vmatprep.subr.mxu0 0.0
    %3347 = vmatpush1.msra.mxu0 0.0
    %3348 = vmatprep.subr.mxu0 0.0
    %3349 = vmatpush1.msra.mxu0 0.0
    %3350 = vmatprep.subr.mxu0 0.0
    %3351 = vmatpush1.msra.mxu0 0.0
    %3352 = vmatprep.subr.mxu0 0.0
    %3353 = vmatpush1.msra.mxu0 0.0
    %3354 = vmatprep.subr.mxu0 0.0
    %3355 = vmatpush1.msra.mxu0 0.0
    %3356 = vmatprep.subr.mxu0 0.0
    %3357 = vmatpush1.msra.mxu0 0.0
    %3358 = vmatprep.subr.mxu0 0.0
    %3359 = vmatpush1.msra.mxu0 0.0
    %3360 = vmatprep.subr.mxu0 0.0
    %3361 = vmatpush1.msra.mxu0 0.0
    %3362 = vmatprep.subr.mxu0 0.0
    %3363 = vmatpush1.msra.mxu0 %v3327
    %3364 = vmatprep.subr.mxu0 0.0
    %3365 = vmatpush2.msra.mxu0 0.0
    %3366 = vmatprep.subr.mxu0 0.0
    %3367 = vmatpush2.msra.mxu0 0.0
    %3368 = vmatprep.subr.mxu0 0.0
    %3369 = vmatpush2.msra.mxu0 0.0
    %3370 = vmatprep.subr.mxu0 0.0
    %3371 = vmatpush2.msra.mxu0 0.0
    %3372 = vmatprep.subr.mxu0 0.0
    %3373 = vmatpush2.msra.mxu0 0.0
    %3374 = vmatprep.subr.mxu0 0.0
    %3375 = vmatpush2.msra.mxu0 0.0
    %3376 = vmatprep.subr.mxu0 0.0
    %3377 = vmatpush2.msra.mxu0 0.0
    %3378 = vmatprep.subr.mxu0 0.0
    %3379 = vmatpush2.msra.mxu0 0.0
    %3380 = vmatprep.subr.mxu0 0.0
    %3381 = vmatpush2.msra.mxu0 0.0
    %3382 = vmatprep.subr.mxu0 0.0
    %3383 = vmatpush2.msra.mxu0 0.0
    %3384 = vmatprep.subr.mxu0 0.0
    %3385 = vmatpush2.msra.mxu0 0.0
    %3386 = vmatprep.subr.mxu0 0.0
    %3387 = vmatpush2.msra.mxu0 0.0
    %3388 = vmatprep.subr.mxu0 0.0
    %3389 = vmatpush2.msra.mxu0 0.0
    %3390 = vmatprep.subr.mxu0 0.0
    %3391 = vmatpush2.msra.mxu0 0.0
    %3392 = vmatprep.subr.mxu0 0.0
    %3393 = vmatpush2.msra.mxu0 0.0
    %3394 = vmatprep.subr.mxu0 0.0
    %3395 = vmatpush2.msra.mxu0 0.0
    %3396 = vmatprep.mubr.f32.mxu0 0.0
    %3397 = vmatmul.mubr.f32.gmra.mxu0 %v3330
    %v3398 = vpop.f32.mrf.mxu0
    %v3399 = vadd.f32 0.0, %v3398
    %v3400 = vpop.f32.mrf.mxu0
    %3401 = vdwg.mxu0
    %3402 = vrot.lane.b32.xlu0 %v2162, 80
    %v3403 = vpop.permute.xlu0 %3402
    %v3406 = vsel %vm445, %v3325, 0
    %3408 = vmatprep.subr.mxu0 0.0
    %3409 = vmatpush1.msra.mxu0 0.0
    %3410 = vmatprep.subr.mxu0 0.0
    %3411 = vmatpush1.msra.mxu0 0.0
    %3412 = vmatprep.subr.mxu0 0.0
    %3413 = vmatpush1.msra.mxu0 0.0
    %3414 = vmatprep.subr.mxu0 0.0
    %3415 = vmatpush1.msra.mxu0 0.0
    %3416 = vmatprep.subr.mxu0 0.0
    %3417 = vmatpush1.msra.mxu0 0.0
    %3418 = vmatprep.subr.mxu0 0.0
    %3419 = vmatpush1.msra.mxu0 0.0
    %3420 = vmatprep.subr.mxu0 0.0
    %3421 = vmatpush1.msra.mxu0 0.0
    %3422 = vmatprep.subr.mxu0 0.0
    %3423 = vmatpush1.msra.mxu0 0.0
    %3424 = vmatprep.subr.mxu0 0.0
    %3425 = vmatpush1.msra.mxu0 0.0
    %3426 = vmatprep.subr.mxu0 0.0
    %3427 = vmatpush1.msra.mxu0 0.0
    %3428 = vmatprep.subr.mxu0 0.0
    %3429 = vmatpush1.msra.mxu0 0.0
    %3430 = vmatprep.subr.mxu0 0.0
    %3431 = vmatpush1.msra.mxu0 0.0
    %3432 = vmatprep.subr.mxu0 0.0
    %3433 = vmatpush1.msra.mxu0 0.0
    %3434 = vmatprep.subr.mxu0 0.0
    %3435 = vmatpush1.msra.mxu0 0.0
    %3436 = vmatprep.subr.mxu0 0.0
    %3437 = vmatpush1.msra.mxu0 0.0
    %3438 = vmatprep.subr.mxu0 0.0
    %3439 = vmatpush1.msra.mxu0 %v3403
    %3440 = vmatprep.subr.mxu0 0.0
    %3441 = vmatpush2.msra.mxu0 0.0
    %3442 = vmatprep.subr.mxu0 0.0
    %3443 = vmatpush2.msra.mxu0 0.0
    %3444 = vmatprep.subr.mxu0 0.0
    %3445 = vmatpush2.msra.mxu0 0.0
    %3446 = vmatprep.subr.mxu0 0.0
    %3447 = vmatpush2.msra.mxu0 0.0
    %3448 = vmatprep.subr.mxu0 0.0
    %3449 = vmatpush2.msra.mxu0 0.0
    %3450 = vmatprep.subr.mxu0 0.0
    %3451 = vmatpush2.msra.mxu0 0.0
    %3452 = vmatprep.subr.mxu0 0.0
    %3453 = vmatpush2.msra.mxu0 0.0
    %3454 = vmatprep.subr.mxu0 0.0
    %3455 = vmatpush2.msra.mxu0 0.0
    %3456 = vmatprep.subr.mxu0 0.0
    %3457 = vmatpush2.msra.mxu0 0.0
    %3458 = vmatprep.subr.mxu0 0.0
    %3459 = vmatpush2.msra.mxu0 0.0
    %3460 = vmatprep.subr.mxu0 0.0
    %3461 = vmatpush2.msra.mxu0 0.0
    %3462 = vmatprep.subr.mxu0 0.0
    %3463 = vmatpush2.msra.mxu0 0.0
    %3464 = vmatprep.subr.mxu0 0.0
    %3465 = vmatpush2.msra.mxu0 0.0
    %3466 = vmatprep.subr.mxu0 0.0
    %3467 = vmatpush2.msra.mxu0 0.0
    %3468 = vmatprep.subr.mxu0 0.0
    %3469 = vmatpush2.msra.mxu0 0.0
    %3470 = vmatprep.subr.mxu0 0.0
    %3471 = vmatpush2.msra.mxu0 0.0
    %3472 = vmatprep.mubr.f32.mxu0 0.0
    %3473 = vmatmul.mubr.f32.gmra.mxu0 %v3406
    %v3474 = vpop.f32.mrf.mxu0
    %v3475 = vadd.f32 0.0, %v3474
    %v3476 = vpop.f32.mrf.mxu0
    %3477 = vdwg.mxu0
    %3480 = vrot.lane.b32.xlu0 %v2738, 16
    %v3481 = vpop.permute.xlu0 %3480
    %3482 = vrot.lane.b32.xlu0 %v2815, 16
    %v3483 = vpop.permute.xlu0 %3482
    %3488 = vrot.lane.b32.xlu0 %v3069, 32
    %v3489 = vpop.permute.xlu0 %3488
    %3490 = vrot.lane.b32.xlu0 %v3145, 32
    %v3491 = vpop.permute.xlu0 %3490
    %3496 = vrot.lane.b32.xlu0 %v3399, 48
    %v3497 = vpop.permute.xlu0 %3496
    %3498 = vrot.lane.b32.xlu0 %v3475, 48
    %v3499 = vpop.permute.xlu0 %3498
    %v3502 = vsel %vm45, %v2410, %v3481
    %v3503 = vsel %vm45, %v2483, %v3483
    %v3504 = vsel %vm168, %v3502, %v3489
    %v3505 = vsel %vm168, %v3503, %v3491
    %v3506 = vsel %vm1634, %v3504, %v3497
    %v3507 = vsel %vm1634, %v3505, %v3499
    %v3509 = vsel %vm1637, %v3506, 0
    %v3512 = vsel %vm1637, %v3507, 0
    %3514 = vmatprep.subr.mxu0 0.0
    %3515 = vmatpush1.msra.mxu0 0.0
    %3516 = vmatprep.subr.mxu0 0.0
    %3517 = vmatpush1.msra.mxu0 0.0
    %3518 = vmatprep.subr.mxu0 0.0
    %3519 = vmatpush1.msra.mxu0 0.0
    %3520 = vmatprep.subr.mxu0 0.0
    %3521 = vmatpush1.msra.mxu0 0.0
    %3522 = vmatprep.subr.mxu0 0.0
    %3523 = vmatpush1.msra.mxu0 0.0
    %3524 = vmatprep.subr.mxu0 0.0
    %3525 = vmatpush1.msra.mxu0 0.0
    %3526 = vmatprep.subr.mxu0 0.0
    %3527 = vmatpush1.msra.mxu0 0.0
    %3528 = vmatprep.subr.mxu0 0.0
    %3529 = vmatpush1.msra.mxu0 0.0
    %3530 = vmatprep.subr.mxu0 0.0
    %3531 = vmatpush1.msra.mxu0 %v2014
    %3532 = vmatprep.subr.mxu0 0.0
    %3533 = vmatpush1.msra.mxu0 %v2013
    %3534 = vmatprep.subr.mxu0 0.0
    %3535 = vmatpush1.msra.mxu0 %v2012
    %3536 = vmatprep.subr.mxu0 0.0
    %3537 = vmatpush1.msra.mxu0 %v2011
    %3538 = vmatprep.subr.mxu0 0.0
    %3539 = vmatpush1.msra.mxu0 %v2010
    %3540 = vmatprep.subr.mxu0 0.0
    %3541 = vmatpush1.msra.mxu0 %v2009
    %3542 = vmatprep.subr.mxu0 0.0
    %3543 = vmatpush1.msra.mxu0 %v2008
    %3544 = vmatprep.subr.mxu0 0.0
    %3545 = vmatpush1.msra.mxu0 %v2007
    %3546 = vmatprep.subr.mxu0 0.0
    %3547 = vmatpush2.msra.mxu0 0.0
    %3548 = vmatprep.subr.mxu0 0.0
    %3549 = vmatpush2.msra.mxu0 0.0
    %3550 = vmatprep.subr.mxu0 0.0
    %3551 = vmatpush2.msra.mxu0 0.0
    %3552 = vmatprep.subr.mxu0 0.0
    %3553 = vmatpush2.msra.mxu0 0.0
    %3554 = vmatprep.subr.mxu0 0.0
    %3555 = vmatpush2.msra.mxu0 0.0
    %3556 = vmatprep.subr.mxu0 0.0
    %3557 = vmatpush2.msra.mxu0 0.0
    %3558 = vmatprep.subr.mxu0 0.0
    %3559 = vmatpush2.msra.mxu0 0.0
    %3560 = vmatprep.subr.mxu0 0.0
    %3561 = vmatpush2.msra.mxu0 0.0
    %3562 = vmatprep.subr.mxu0 0.0
    %3563 = vmatpush2.msra.mxu0 0.0
    %3564 = vmatprep.subr.mxu0 0.0
    %3565 = vmatpush2.msra.mxu0 0.0
    %3566 = vmatprep.subr.mxu0 0.0
    %3567 = vmatpush2.msra.mxu0 0.0
    %3568 = vmatprep.subr.mxu0 0.0
    %3569 = vmatpush2.msra.mxu0 0.0
    %3570 = vmatprep.subr.mxu0 0.0
    %3571 = vmatpush2.msra.mxu0 0.0
    %3572 = vmatprep.subr.mxu0 0.0
    %3573 = vmatpush2.msra.mxu0 0.0
    %3574 = vmatprep.subr.mxu0 0.0
    %3575 = vmatpush2.msra.mxu0 0.0
    %3576 = vmatprep.subr.mxu0 0.0
    %3577 = vmatpush2.msra.mxu0 0.0
    %3578 = vmatprep.mubr.f32.mxu0 0.0
    %3579 = vmatmul.mubr.f32.gmra.mxu0 %v3509
    %v3580 = vpop.f32.mrf.mxu0
    %v3581 = vadd.f32 0.0, %v3580
    %v3582 = vpop.f32.mrf.mxu0
    %3583 = vmatprep.mubr.f32.mxu0 0.0
    %3584 = vmatmul.mubr.f32.gmra.mxu0 %v3512
    %v3585 = vpop.f32.mrf.mxu0
    %v3586 = vadd.f32 0.0, %v3585
    %v3587 = vpop.f32.mrf.mxu0
    %3588 = vdwg.mxu0
    %v3589 = vadd.f32 %v1995, %v3581
    %v3590 = vadd.f32 %v1996, %v3586
    %v3591 = vlaneseq
    %v3592 = vshrl.u32 %v3591, 7
    %v3593 = vsub.s32 2, %v3592
    %v3594 = vrot.slane %v2042, %v3593
    %v3595 = vadd.f32 %v3589, %v3594
    %v3596 = vadd.f32 %v3590, %v3594
    %v3597 = vsel %vm168, %v3595, 0.0
    %3598 = vadd.xlane.f32.xlu0 %v3597
    %v3599 = vpop.xlane.xlu0 %3598
    %v3600 = vsel %vm168, %v3596, 0.0
    %3601 = vadd.xlane.f32.xlu0 %v3600
    %v3602 = vpop.xlane.xlu0 %3601
    %v3603 = vmul.f32 %v3599, %v175
    %v3604 = vmul.f32 %v3602, %v175
    %v3605 = vsub.f32 %v3595, %v3603
    %v3606 = vsub.f32 %v3596, %v3604
    %v3607 = vmul.f32 %v3605, %v3605
    %v3608 = vmul.f32 %v3606, %v3606
    %v3609 = vsel %vm168, %v3607, 0.0
    %3610 = vadd.xlane.f32.xlu0 %v3609
    %v3611 = vpop.xlane.xlu0 %3610
    %v3612 = vsel %vm168, %v3608, 0.0
    %3613 = vadd.xlane.f32.xlu0 %v3612
    %v3614 = vpop.xlane.xlu0 %3613
    %v3615 = vmul.f32 %v3611, %v175
    %v3616 = vmul.f32 %v3614, %v175
    %v3617 = vadd.f32 %v3615, 1e-05
    %v3618 = vadd.f32 %v3616, 1e-05
    %v3619 = vrsqrt.pop %v3617
    %v3620 = vrsqrt.pop %v3618
    %v3621 = vmul.f32 %v3605, %v3619
    %v3622 = vmul.f32 %v3606, %v3620
    %v3623 = vlaneseq
    %v3624 = vshrl.u32 %v3623, 7
    %v3625 = vsub.s32 3, %v3624
    %v3626 = vrot.slane %v2042, %v3625
    %v3627 = vmul.f32 %v3621, %v3626
    %v3628 = vmul.f32 %v3622, %v3626
    %v3629 = vlaneseq
    %v3630 = vshrl.u32 %v3629, 7
    %v3631 = vsub.s32 4, %v3630
    %v3632 = vrot.slane %v2042, %v3631
    %v3633 = vadd.f32 %v3627, %v3632
    %v3634 = vadd.f32 %v3628, %v3632
    %v3636 = vsel %vm168, %v3633, 0
    %v3639 = vsel %vm168, %v3634, 0
    %3641 = vmatprep.subr.mxu0 0.0
    %3642 = vmatpush1.msra.mxu0 0.0
    %3643 = vmatprep.subr.mxu0 0.0
    %3644 = vmatpush1.msra.mxu0 0.0
    %3645 = vmatprep.subr.mxu0 0.0
    %3646 = vmatpush1.msra.mxu0 0.0
    %3647 = vmatprep.subr.mxu0 0.0
    %3648 = vmatpush1.msra.mxu0 0.0
    %3649 = vmatprep.subr.mxu0 0.0
    %3650 = vmatpush1.msra.mxu0 0.0
    %3651 = vmatprep.subr.mxu0 0.0
    %3652 = vmatpush1.msra.mxu0 0.0
    %3653 = vmatprep.subr.mxu0 0.0
    %3654 = vmatpush1.msra.mxu0 0.0
    %3655 = vmatprep.subr.mxu0 0.0
    %3656 = vmatpush1.msra.mxu0 0.0
    %3657 = vmatprep.subr.mxu0 0.0
    %3658 = vmatpush1.msra.mxu0 0.0
    %3659 = vmatprep.subr.mxu0 0.0
    %3660 = vmatpush1.msra.mxu0 0.0
    %3661 = vmatprep.subr.mxu0 0.0
    %3662 = vmatpush1.msra.mxu0 0.0
    %3663 = vmatprep.subr.mxu0 0.0
    %3664 = vmatpush1.msra.mxu0 0.0
    %3665 = vmatprep.subr.mxu0 %v2023
    %3666 = vmatpush1.msra.mxu0 %v2022
    %3667 = vmatprep.subr.mxu0 %v2021
    %3668 = vmatpush1.msra.mxu0 %v2020
    %3669 = vmatprep.subr.mxu0 %v2019
    %3670 = vmatpush1.msra.mxu0 %v2018
    %3671 = vmatprep.subr.mxu0 %v2017
    %3672 = vmatpush1.msra.mxu0 %v2016
    %3673 = vmatprep.subr.mxu0 0.0
    %3674 = vmatpush2.msra.mxu0 0.0
    %3675 = vmatprep.subr.mxu0 0.0
    %3676 = vmatpush2.msra.mxu0 0.0
    %3677 = vmatprep.subr.mxu0 0.0
    %3678 = vmatpush2.msra.mxu0 0.0
    %3679 = vmatprep.subr.mxu0 0.0
    %3680 = vmatpush2.msra.mxu0 0.0
    %3681 = vmatprep.subr.mxu0 0.0
    %3682 = vmatpush2.msra.mxu0 0.0
    %3683 = vmatprep.subr.mxu0 0.0
    %3684 = vmatpush2.msra.mxu0 0.0
    %3685 = vmatprep.subr.mxu0 0.0
    %3686 = vmatpush2.msra.mxu0 0.0
    %3687 = vmatprep.subr.mxu0 0.0
    %3688 = vmatpush2.msra.mxu0 0.0
    %3689 = vmatprep.subr.mxu0 0.0
    %3690 = vmatpush2.msra.mxu0 0.0
    %3691 = vmatprep.subr.mxu0 0.0
    %3692 = vmatpush2.msra.mxu0 0.0
    %3693 = vmatprep.subr.mxu0 0.0
    %3694 = vmatpush2.msra.mxu0 0.0
    %3695 = vmatprep.subr.mxu0 0.0
    %3696 = vmatpush2.msra.mxu0 0.0
    %3697 = vmatprep.subr.mxu0 0.0
    %3698 = vmatpush2.msra.mxu0 0.0
    %3699 = vmatprep.subr.mxu0 0.0
    %3700 = vmatpush2.msra.mxu0 0.0
    %3701 = vmatprep.subr.mxu0 0.0
    %3702 = vmatpush2.msra.mxu0 0.0
    %3703 = vmatprep.subr.mxu0 0.0
    %3704 = vmatpush2.msra.mxu0 0.0
    %3705 = vmatprep.mubr.f32.mxu0 0.0
    %3706 = vmatmul.mubr.f32.gmra.mxu0 %v3636
    %v3707 = vpop.f32.mrf.mxu0
    %v3708 = vadd.f32 0.0, %v3707
    %v3709 = vpop.f32.mrf.mxu0
    %v3710 = vadd.f32 0.0, %v3709
    %3711 = vmatprep.mubr.f32.mxu0 0.0
    %3712 = vmatmul.mubr.f32.gmra.mxu0 %v3639
    %v3713 = vpop.f32.mrf.mxu0
    %v3714 = vadd.f32 0.0, %v3713
    %v3715 = vpop.f32.mrf.mxu0
    %v3716 = vadd.f32 0.0, %v3715
    %3717 = vdwg.mxu0
    %v3718 = vlaneseq
    %v3719 = vshrl.u32 %v3718, 7
    %v3720 = vsub.s32 6, %v3719
    %v3721 = vrot.slane %v2042, %v3720
    %v3722 = vadd.f32 %v3708, %v3721
    %v3723 = vadd.f32 %v3714, %v3721
    %v3724 = vlaneseq
    %v3725 = vshrl.u32 %v3724, 7
    %v3726 = vsub.s32 7, %v3725
    %v3727 = vrot.slane %v2042, %v3726
    %v3728 = vadd.f32 %v3710, %v3727
    %v3729 = vadd.f32 %v3716, %v3727
    %v3730 = vmul.f32 %v3728, 0.5
    %v3731 = vmul.f32 %v3729, 0.5
    %v3732 = vmul.f32 %v3728, 0.70710677
    %v3733 = vmul.f32 %v3729, 0.70710677
    %vm3734 = vcmp.ge.f32.partialorder %v3732, 0.0
    %vm3735 = vcmp.ge.f32.partialorder %v3733, 0.0
    %v3736 = vsel %vm3734, 1.0, -1.0
    %v3737 = vsel %vm3735, 1.0, -1.0
    %v3738 = vand.u32 2147483647, %v3732
    %v3739 = vand.u32 2147483647, %v3733
    %v3740 = vmul.f32 %v3738, 0.3275911
    %v3741 = vmul.f32 %v3739, 0.3275911
    %v3742 = vadd.f32 %v3740, 1.0
    %v3743 = vadd.f32 %v3741, 1.0
    %v3744 = vrcp.pop %v3742
    %v3745 = vmul.f32 1.0, %v3744
    %v3746 = vrcp.pop %v3743
    %v3747 = vmul.f32 1.0, %v3746
    %v3748 = vmul.f32 %v3745, 1.0614054
    %v3749 = vmul.f32 %v3747, 1.0614054
    %v3750 = vadd.f32 %v3748, -1.4531521
    %v3751 = vadd.f32 %v3749, -1.4531521
    %v3752 = vmul.f32 %v3750, %v3745
    %v3753 = vmul.f32 %v3751, %v3747
    %v3754 = vadd.f32 %v3752, 1.4214138
    %v3755 = vadd.f32 %v3753, 1.4214138
    %v3756 = vmul.f32 %v3754, %v3745
    %v3757 = vmul.f32 %v3755, %v3747
    %v3758 = vadd.f32 %v3756, -0.28449672
    %v3759 = vadd.f32 %v3757, -0.28449672
    %v3760 = vmul.f32 %v3758, %v3745
    %v3761 = vmul.f32 %v3759, %v3747
    %v3762 = vadd.f32 %v3760, 0.2548296
    %v3763 = vadd.f32 %v3761, 0.2548296
    %v3764 = vmul.f32 %v3762, %v3745
    %v3765 = vmul.f32 %v3763, %v3747
    %v3766 = vsub.f32 0.0, %v3738
    %v3767 = vsub.f32 0.0, %v3739
    %v3768 = vmul.f32 %v3766, %v3738
    %v3769 = vmul.f32 %v3767, %v3739
    %v3770 = vmul.f32 %v3768, 1.442695
    %v3771 = vpow.pop %v3770
    %v3772 = vmul.f32 %v3769, 1.442695
    %v3773 = vpow.pop %v3772
    %v3774 = vmul.f32 %v3764, %v3771
    %v3775 = vmul.f32 %v3765, %v3773
    %v3776 = vsub.f32 1.0, %v3774
    %v3777 = vsub.f32 1.0, %v3775
    %v3778 = vmul.f32 %v3736, %v3776
    %v3779 = vmul.f32 %v3737, %v3777
    %v3780 = vadd.f32 %v3778, 1.0
    %v3781 = vadd.f32 %v3779, 1.0
    %v3782 = vmul.f32 %v3730, %v3780
    %v3783 = vmul.f32 %v3731, %v3781
    %v3784 = vmul.f32 %v3722, %v3782
    %v3785 = vmul.f32 %v3723, %v3783
    %v3786 = vlaneseq
    %v3787 = vshrl.u32 %v3786, 7
    %v3788 = vsub.s32 5, %v3787
    %v3789 = vrot.slane %v2042, %v3788
    %3790 = vmatprep.subr.mxu0 0.0
    %3791 = vmatpush1.msra.mxu0 %v2040
    %3792 = vmatprep.subr.mxu0 0.0
    %3793 = vmatpush1.msra.mxu0 %v2039
    %3794 = vmatprep.subr.mxu0 0.0
    %3795 = vmatpush1.msra.mxu0 %v2038
    %3796 = vmatprep.subr.mxu0 0.0
    %3797 = vmatpush1.msra.mxu0 %v2037
    %3798 = vmatprep.subr.mxu0 0.0
    %3799 = vmatpush1.msra.mxu0 %v2036
    %3800 = vmatprep.subr.mxu0 0.0
    %3801 = vmatpush1.msra.mxu0 %v2035
    %3802 = vmatprep.subr.mxu0 0.0
    %3803 = vmatpush1.msra.mxu0 %v2034
    %3804 = vmatprep.subr.mxu0 0.0
    %3805 = vmatpush1.msra.mxu0 %v2033
    %3806 = vmatprep.subr.mxu0 0.0
    %3807 = vmatpush1.msra.mxu0 %v2032
    %3808 = vmatprep.subr.mxu0 0.0
    %3809 = vmatpush1.msra.mxu0 %v2031
    %3810 = vmatprep.subr.mxu0 0.0
    %3811 = vmatpush1.msra.mxu0 %v2030
    %3812 = vmatprep.subr.mxu0 0.0
    %3813 = vmatpush1.msra.mxu0 %v2029
    %3814 = vmatprep.subr.mxu0 0.0
    %3815 = vmatpush1.msra.mxu0 %v2028
    %3816 = vmatprep.subr.mxu0 0.0
    %3817 = vmatpush1.msra.mxu0 %v2027
    %3818 = vmatprep.subr.mxu0 0.0
    %3819 = vmatpush1.msra.mxu0 %v2026
    %3820 = vmatprep.subr.mxu0 0.0
    %3821 = vmatpush1.msra.mxu0 %v2025
    %3822 = vmatprep.subr.mxu0 0.0
    %3823 = vmatpush2.msra.mxu0 0.0
    %3824 = vmatprep.subr.mxu0 0.0
    %3825 = vmatpush2.msra.mxu0 0.0
    %3826 = vmatprep.subr.mxu0 0.0
    %3827 = vmatpush2.msra.mxu0 0.0
    %3828 = vmatprep.subr.mxu0 0.0
    %3829 = vmatpush2.msra.mxu0 0.0
    %3830 = vmatprep.subr.mxu0 0.0
    %3831 = vmatpush2.msra.mxu0 0.0
    %3832 = vmatprep.subr.mxu0 0.0
    %3833 = vmatpush2.msra.mxu0 0.0
    %3834 = vmatprep.subr.mxu0 0.0
    %3835 = vmatpush2.msra.mxu0 0.0
    %3836 = vmatprep.subr.mxu0 0.0
    %3837 = vmatpush2.msra.mxu0 0.0
    %3838 = vmatprep.subr.mxu0 0.0
    %3839 = vmatpush2.msra.mxu0 0.0
    %3840 = vmatprep.subr.mxu0 0.0
    %3841 = vmatpush2.msra.mxu0 0.0
    %3842 = vmatprep.subr.mxu0 0.0
    %3843 = vmatpush2.msra.mxu0 0.0
    %3844 = vmatprep.subr.mxu0 0.0
    %3845 = vmatpush2.msra.mxu0 0.0
    %3846 = vmatprep.subr.mxu0 0.0
    %3847 = vmatpush2.msra.mxu0 0.0
    %3848 = vmatprep.subr.mxu0 0.0
    %3849 = vmatpush2.msra.mxu0 0.0
    %3850 = vmatprep.subr.mxu0 0.0
    %3851 = vmatpush2.msra.mxu0 0.0
    %3852 = vmatprep.subr.mxu0 0.0
    %3853 = vmatpush2.msra.mxu0 0.0
    %3854 = vmatprep.mubr.f32.mxu0 0.0
    %3855 = vmatmul.mubr.f32.gmra.mxu0 %v3784
    %v3856 = vpop.f32.mrf.mxu0
    %v3857 = vadd.f32 %v3789, %v3856
    %v3858 = vpop.f32.mrf.mxu0
    %3859 = vmatprep.mubr.f32.mxu0 0.0
    %3860 = vmatmul.mubr.f32.gmra.mxu0 %v3785
    %v3861 = vpop.f32.mrf.mxu0
    %v3862 = vadd.f32 %v3789, %v3861
    %v3863 = vpop.f32.mrf.mxu0
    %3864 = vdwg.mxu0
    %v3865 = vadd.f32 %v3857, %v3595
    %v3866 = vadd.f32 %v3862, %v3596
    %3867 = vst.msk [vmem:[#allocation2] sm:$0xff] %vm168, %v3865
    %3868 = vst.msk [vmem:[#allocation2 + $0x8] sm:$0xff] %vm168, %v3866
    // Predicated region
    $region30: #{tpu_custom_call.1} parent=1 // pred_check
      _
    $region31: #{tpu_custom_call.1} parent=1 // pred_check_branch
      %3870 = sbr.rel (0) target = $region33
    $region32: #{tpu_custom_call.1} parent=1 // pred_region
      %s3872 = ssub.s32 256, 256
      %3873 = vsyncadd [#allocation3], %s3872
      %s3874 = sshll.u32 [#allocation2], 4
      %s3875 = int_to_ptr.vmem [resolvable:$true] %s3874
      %3880 = dma.vmem_to_hbm [thread:$0]  %s3875, 256, %s7, [#allocation3], 128, 128, 8
    $region33: #{tpu_custom_call.1} parent=1 // pred_fallthru
      _
    // Predicated region
    $region34: #{tpu_custom_call.1} parent=1 // pred_check
      _
    $region35: #{tpu_custom_call.1} parent=1 // pred_check_branch
      %3882 = sbr.rel (0) target = $region37
    $region36: #{tpu_custom_call.1} parent=1 // pred_region
      %3883 = dma.done [#allocation3], 256
    $region37: #{tpu_custom_call.1} parent=1 // pred_fallthru
      _
    %3884 = vsyncpa [#allocation3], 1

</llo_original>
